<compile_context>
chip_gen: v5e
topology: v5e:2x2
jax: 0.10.0
libtpu: 0.0.40
codegen_flags: <defaults>
</compile_context>

<pallas_src>
import functools

import jax
import jax.numpy as jnp
from jax import lax
from jax.experimental import pallas as pl
from jax.experimental.pallas import tpu as pltpu


factors = (1, 1, 1, 1, 1 / 2, 1 / 4, 1 / 8, 1 / 16, 1 / 32)
LEAKY_SLOPE = 0.2
PN_EPS = 1e-8


def _round_up(x, m):
    return (x + m - 1) // m * m


# ---------------------------------------------------------------------------
# Generation-aware VMEM sizing
# ---------------------------------------------------------------------------
@functools.lru_cache(maxsize=None)
def _vmem_capacity_bytes():
    try:
        return int(pltpu.get_tpu_info().vmem_capacity_bytes)
    except Exception:
        return 64 * 1024 * 1024            # conservative fallback (v7x-sized)


def _vmem_limit_bytes():
    # ~48 MiB on v7x (64 MiB/TC physical), ~96 MiB on v5e/v6e (128 MiB).
    return min(int(_vmem_capacity_bytes() * 0.75), 100 * 1024 * 1024)


def _pick_batch_block(n, per_sample_bytes, budget_bytes):
    # Largest batch block that fits the budget; grid stays a divisor of n.
    # No forced split: the grid is a serial loop on v5e/v6e (1 TensorCore);
    # v7x megacore sharding still gets the "parallel" axes when grid > 1.
    nb = int(max(1, min(n, budget_bytes // max(per_sample_bytes, 1))))
    while n % nb:
        nb -= 1
    return nb


def _prep_weight(weight, scale, cin_p, cout_p, compute_dtype):
    """OIHW weight -> (k*k, cin_p, cout_p), WS scale folded in, zero padded."""
    cout, cin, k, _ = weight.shape
    w = jnp.transpose(weight, (2, 3, 1, 0)).astype(jnp.float32) * jnp.float32(scale)
    w = jnp.pad(w, ((0, 0), (0, 0), (0, cin_p - cin), (0, cout_p - cout)))
    return w.reshape(k * k, cin_p, cout_p).astype(compute_dtype)


# ---------------------------------------------------------------------------
# Fused WSConv2d (+ optional LeakyReLU + PixelNorm) Pallas kernel
# ---------------------------------------------------------------------------
def _wsconv_kernel(x_ref, w_ref, b_ref, o_ref, *, k, ho, wo, cout_real,
                   leaky_slope, use_pixelnorm):
    # x_ref: (Nb, Ho+k-1, Wo+k-1, Cin_p)  compute dtype, padded lanes are zero
    # w_ref: (k*k, Cin_p, Tco)            compute dtype, WS scale pre-folded
    # b_ref: (1, Tco)                     float32
    # o_ref: (Nb, Ho, Wo, Tco)            Tco % 128 == 0 (lane-dense store)
    nb = o_ref.shape[0]
    tco = o_ref.shape[-1]
    cin_p = x_ref.shape[-1]

    x = x_ref[...]
    # Per-tap accumulation (no im2col patch): k*k matmuls with M = Nb*Ho*Wo,
    # K = Cin_p, summed into a single f32 accumulator.
    acc = None
    for kh in range(k):
        for kw in range(k):
            tap = x[:, kh:kh + ho, kw:kw + wo, :].reshape(nb * ho * wo, cin_p)
            part = jnp.dot(tap, w_ref[kh * k + kw],
                           preferred_element_type=jnp.float32)
            acc = part if acc is None else acc + part

    y = acc + b_ref[...]
    if leaky_slope is not None:
        y = jnp.where(y >= 0, y, jnp.float32(leaky_slope) * y)
    if use_pixelnorm:
        # Padded lanes are exactly zero, so the lane-sum equals the sum over
        # the real channels; divide by the real channel count.
        ss = jnp.sum(y * y, axis=-1, keepdims=True) * jnp.float32(1.0 / cout_real)
        y = y * lax.rsqrt(ss + jnp.float32(PN_EPS))

    o_ref[...] = y.reshape(nb, ho, wo, tco).astype(o_ref.dtype)


def ws_conv2d_nhwc(x, weight, bias, *, k, padding, gain=2.0,
                   leaky_slope=None, pixelnorm=False,
                   compute_dtype=jnp.bfloat16, out_dtype=None, trim_out=True):
    """Weight-scaled conv (stride 1) on NHWC input, fused bias/LeakyReLU/PixelNorm.

    x:      (N, H, W, Cx)  with Cx >= Cin; lanes beyond Cin must be zero
    weight: (Cout, Cin, k, k)   (PyTorch OIHW layout)
    bias:   (Cout,)
    Returns (N, Ho, Wo, Cout) if trim_out else (N, Ho, Wo, Cout_p) (padded
    lanes are exactly zero).
    """
    n, h, w_sp, _ = x.shape
    cout, cin = weight.shape[0], weight.shape[1]
    out_dtype = compute_dtype if out_dtype is None else out_dtype
    ho = h + 2 * padding - k + 1
    wo = w_sp + 2 * padding - k + 1
    scale = (gain / (cin * k * k)) ** 0.5

    # Lane padding: small-Cin 1x1 layers (from_rgb, Cin=3) only pad to the
    # 8-sublane granule; everything else pads to 128 so the contraction and
    # the output store are lane-dense.
    cin_p = _round_up(cin, 8) if (k == 1 and cin < 128) else _round_up(cin, 128)
    cout_p = _round_up(cout, 128)
    in_itemsize = jnp.dtype(compute_dtype).itemsize
    out_itemsize = jnp.dtype(out_dtype).itemsize

    w3d = _prep_weight(weight, scale, cin_p, cout_p, compute_dtype)
    b2d = jnp.pad(bias.astype(jnp.float32), (0, cout_p - cout)).reshape(1, cout_p)

    # Accept activations that already carry zero-padded channel lanes from the
    # previous layer (skips a slice + re-pad HBM round trip per layer).
    xc = x.astype(compute_dtype)
    cx = xc.shape[-1]
    if cx > cin_p:
        xc = xc[..., :cin_p]
        cx = cin_p
    if padding or cx != cin_p:
        xc = jnp.pad(xc, ((0, 0), (padding, padding), (padding, padding),
                          (0, cin_p - cx)))
    hp, wp = h + 2 * padding, w_sp + 2 * padding

    # Cout tiling keeps the resident weight block small for 512-channel layers;
    # fused PixelNorm needs every output channel in one block.
    if pixelnorm or cout_p <= 256:
        tco = cout_p
    else:
        tco = 256 if cout_p % 256 == 0 else 128

    vmem_limit = _vmem_limit_bytes()
    resident = 2 * (k * k * cin_p * tco * in_itemsize + tco * 4)   # weights+bias
    per_sample = (2 * hp * wp * cin_p * in_itemsize      # input block, double-buffered
                  + 2 * ho * wo * tco * out_itemsize     # output block, double-buffered
                  + ho * wo * tco * 4                    # f32 accumulator
                  + ho * wo * cin_p * in_itemsize)       # one per-tap slice temp
    budget = int(vmem_limit * 0.75) - resident
    nb = _pick_batch_block(n, per_sample, budget)

    kernel = functools.partial(
        _wsconv_kernel, k=k, ho=ho, wo=wo, cout_real=cout,
        leaky_slope=leaky_slope, use_pixelnorm=pixelnorm)

    grid = (n // nb, cout_p // tco)
    cost = pl.CostEstimate(
        flops=2 * n * ho * wo * k * k * cin_p * cout_p,
        transcendentals=(n * ho * wo) if pixelnorm else 0,
        bytes_accessed=(n * hp * wp * cin_p * in_itemsize
                        + k * k * cin_p * cout_p * in_itemsize
                        + n * ho * wo * cout_p * out_itemsize))

    out = pl.pallas_call(
        kernel,
        out_shape=jax.ShapeDtypeStruct((n, ho, wo, cout_p), out_dtype),
        grid_spec=pltpu.PrefetchScalarGridSpec(
            num_scalar_prefetch=0,
            grid=grid,
            in_specs=[
                pl.BlockSpec((nb, hp, wp, cin_p), lambda i, j: (i, 0, 0, 0)),
                pl.BlockSpec((k * k, cin_p, tco), lambda i, j: (0, 0, j)),
                pl.BlockSpec((1, tco), lambda i, j: (0, j)),
            ],
            out_specs=pl.BlockSpec((nb, ho, wo, tco), lambda i, j: (i, 0, 0, j)),
        ),
        compiler_params=pltpu.CompilerParams(
            dimension_semantics=("parallel", "parallel"),
            vmem_limit_bytes=vmem_limit),
        cost_estimate=cost,
    )(xc, w3d, b2d)

    # TODO(synk): for 128px+ resolutions add an output-row grid axis with
    # overlapping halo input blocks (element-offset index_map or manual DMA)
    # instead of loading the whole padded frame per grid step.
    return out[..., :cout] if trim_out else out


# ---------------------------------------------------------------------------
# Fused final_block kernel: 3x3 conv + LeakyReLU + 4x4 conv + LeakyReLU + 1x1
# ---------------------------------------------------------------------------
def _final_block_kernel(x_ref, w1_ref, b1_ref, w2_ref, b2_ref, w3_ref, b3_ref,
                        o_ref, *, leaky_slope):
    n, hp, wp, c1p = x_ref.shape
    hh, ww = hp - 2, wp - 2
    cp = w1_ref.shape[-1]
    ho2, wo2 = hh - 3, ww - 3
    cdt = x_ref.dtype

    def leaky(v):
        return jnp.where(v >= 0, v, jnp.float32(leaky_slope) * v)

    x = x_ref[...]
    # conv1: 3x3, pad 1 (input pre-padded), per-tap MXU accumulation.
    acc1 = None
    for kh in range(3):
        for kw in range(3):
            tap = x[:, kh:kh + hh, kw:kw + ww, :].reshape(n * hh * ww, c1p)
            part = jnp.dot(tap, w1_ref[kh * 3 + kw],
                           preferred_element_type=jnp.float32)
            acc1 = part if acc1 is None else acc1 + part
    y1 = leaky(acc1 + b1_ref[...]).reshape(n, hh, ww, cp).astype(cdt)

    # conv2: 4x4, no padding.
    acc2 = None
    for kh in range(4):
        for kw in range(4):
            tap = y1[:, kh:kh + ho2, kw:kw + wo2, :].reshape(n * ho2 * wo2, cp)
            part = jnp.dot(tap, w2_ref[kh * 4 + kw],
                           preferred_element_type=jnp.float32)
            acc2 = part if acc2 is None else acc2 + part
    y2 = leaky(acc2 + b2_ref[...]).astype(cdt)

    # conv3: 1x1 -> logits (only lane 0 is real; padded weight columns are 0).
    y3 = jnp.dot(y2, w3_ref[0], preferred_element_type=jnp.float32) + b3_ref[...]
    o_ref[...] = y3.reshape(n, ho2, wo2, o_ref.shape[-1]).astype(o_ref.dtype)


def final_block_forward(h, p, *, compute_dtype=jnp.bfloat16, gain=2.0):
    """Fused ProGAN discriminator final block on NHWC input h: (N, hh, ww, Cin+1)."""
    n, hh, ww, c1 = h.shape
    cin1 = p["c1"]["w"].shape[1]          # in_channels + 1
    cmid = p["c1"]["w"].shape[0]          # in_channels
    assert c1 == cin1, "final block expects un-padded (in_channels+1) input"
    c1p = _round_up(cin1, 128)
    cp = _round_up(cmid, 128)
    co3p = 128

    s1 = (gain / (cin1 * 9)) ** 0.5
    s2 = (gain / (cmid * 16)) ** 0.5
    s3 = (gain / (cmid * 1)) ** 0.5
    w1 = _prep_weight(p["c1"]["w"], s1, c1p, cp, compute_dtype)    # (9, c1p, cp)
    w2 = _prep_weight(p["c2"]["w"], s2, cp, cp, compute_dtype)     # (16, cp, cp)
    w3 = _prep_weight(p["c3"]["w"], s3, cp, co3p, compute_dtype)   # (1, cp, co3p)
    b1 = jnp.pad(p["c1"]["b"].astype(jnp.float32), (0, cp - cmid)).reshape(1, cp)
    b2 = jnp.pad(p["c2"]["b"].astype(jnp.float32), (0, cp - cmid)).reshape(1, cp)
    b3 = jnp.pad(p["c3"]["b"].astype(jnp.float32), (0, co3p - 1)).reshape(1, co3p)

    xp = jnp.pad(h.astype(compute_dtype),
                 ((0, 0), (1, 1), (1, 1), (0, c1p - cin1)))
    ho2, wo2 = hh - 3, ww - 3

    out = pl.pallas_call(
        functools.partial(_final_block_kernel, leaky_slope=LEAKY_SLOPE),
        out_shape=jax.ShapeDtypeStruct((n, ho2, wo2, co3p), jnp.float32),
        grid_spec=pltpu.PrefetchScalarGridSpec(
            num_scalar_prefetch=0,
            grid=(1,),
            in_specs=[
                pl.BlockSpec(xp.shape, lambda i: (0, 0, 0, 0)),
                pl.BlockSpec(w1.shape, lambda i: (0, 0, 0)),
                pl.BlockSpec(b1.shape, lambda i: (0, 0)),
                pl.BlockSpec(w2.shape, lambda i: (0, 0, 0)),
                pl.BlockSpec(b2.shape, lambda i: (0, 0)),
                pl.BlockSpec(w3.shape, lambda i: (0, 0, 0)),
                pl.BlockSpec(b3.shape, lambda i: (0, 0)),
            ],
            out_specs=pl.BlockSpec((n, ho2, wo2, co3p), lambda i: (0, 0, 0, 0)),
        ),
        compiler_params=pltpu.CompilerParams(
            dimension_semantics=("arbitrary",),
            vmem_limit_bytes=_vmem_limit_bytes()),
    )(xp, w1, b1, w2, b2, w3, b3)

    return out[:, :, :, 0].reshape(n, -1)


# ---------------------------------------------------------------------------
# Small glue ops (left to XLA) and the full Discriminator forward
# ---------------------------------------------------------------------------
# TODO(synk): avg-pool / minibatch-std / fade-in are tiny elementwise/reduce
# glue ops left to XLA; all conv layers (all the FLOPs) run inside Pallas.
def _avg_pool_nhwc(x):
    n, h, w, c = x.shape
    return x.reshape(n, h // 2, 2, w // 2, 2, c).mean(axis=(2, 4))


def _minibatch_std_nhwc(x):
    stat = jnp.mean(jnp.std(x, axis=0, ddof=1))   # torch.std default: unbiased
    n, h, w, _ = x.shape
    return jnp.concatenate([x, jnp.full((n, h, w, 1), stat, x.dtype)], axis=-1)


def init_discriminator_params(key, z_dim, in_channels, img_channels=3):
    del z_dim  # unused by the discriminator (kept for signature parity)

    def wsconv(kk, cin, cout, k):
        return {"w": jax.random.normal(kk, (cout, cin, k, k), jnp.float32),
                "b": jnp.zeros((cout,), jnp.float32)}

    prog_blocks, rgb_layers = [], []
    for i in range(len(factors) - 1, 0, -1):
        cin = int(in_channels * factors[i])
        cout = int(in_channels * factors[i - 1])
        key, k1, k2, k3 = jax.random.split(key, 4)
        prog_blocks.append({"c1": wsconv(k1, cin, cout, 3),
                            "c2": wsconv(k2, cout, cout, 3)})
        rgb_layers.append(wsconv(k3, img_channels, cin, 1))
    key, k0, k1, k2, k3 = jax.random.split(key, 5)
    rgb_layers.append(wsconv(k0, img_channels, in_channels, 1))   # initial_rgb
    final_block = {"c1": wsconv(k1, in_channels + 1, in_channels, 3),
                   "c2": wsconv(k2, in_channels, in_channels, 4),
                   "c3": wsconv(k3, in_channels, 1, 1)}
    return {"prog_blocks": prog_blocks, "rgb_layers": rgb_layers,
            "final_block": final_block}


def discriminator_forward(params, x_nchw, alpha, steps,
                          compute_dtype=jnp.bfloat16):
    """Pallas forward matching Discriminator.forward(x, alpha, steps)."""
    n_blocks = len(params["prog_blocks"])
    cur_step = n_blocks - steps
    in_ch = params["final_block"]["c2"]["w"].shape[0]    # in_channels
    x = jnp.transpose(x_nchw, (0, 2, 3, 1))              # NHWC

    def rgb(i, h):  # WSConv2d(k=1) + LeakyReLU (fused); channel-padded output
        p = params["rgb_layers"][i]
        return ws_conv2d_nhwc(h, p["w"], p["b"], k=1, padding=0,
                              leaky_slope=LEAKY_SLOPE,
                              compute_dtype=compute_dtype, trim_out=False)

    def conv_block(i, h):  # ConvBlock: 2x (WSConv2d + LeakyReLU + PixelNorm)
        p = params["prog_blocks"][i]
        for c in ("c1", "c2"):
            h = ws_conv2d_nhwc(h, p[c]["w"], p[c]["b"], k=3, padding=1,
                               leaky_slope=LEAKY_SLOPE, pixelnorm=True,
                               compute_dtype=compute_dtype, trim_out=False)
        return h

    out = rgb(cur_step, x)
    if steps == 0:
        out = _minibatch_std_nhwc(out[..., :in_ch].astype(jnp.float32))
        return final_block_forward(out, params["final_block"],
                                   compute_dtype=compute_dtype)

    downscale = rgb(cur_step + 1, _avg_pool_nhwc(x))
    out = _avg_pool_nhwc(conv_block(cur_step, out))
    # fade_in (matches the module: tanh of the lerp); padded lanes stay zero.
    out = jnp.tanh(alpha * out.astype(jnp.float32)
                   + (1.0 - alpha) * downscale.astype(jnp.float32))
    out = out.astype(compute_dtype)

    for step in range(cur_step + 1, n_blocks):
        out = _avg_pool_nhwc(conv_block(step, out))

    out = _minibatch_std_nhwc(out[..., :in_ch].astype(jnp.float32))
    return final_block_forward(out, params["final_block"],
                               compute_dtype=compute_dtype)


# ---------------------------------------------------------------------------
# Pure-JAX reference (NCHW, float32) for correctness checking
# ---------------------------------------------------------------------------
def _ref_wsconv(x, w, b, padding, gain=2.0):
    _, cin, k, _ = w.shape
    scale = (gain / (cin * k * k)) ** 0.5
    y = lax.conv_general_dilated(
        x * scale, w, window_strides=(1, 1),
        padding=((padding, padding), (padding, padding)),
        dimension_numbers=("NCHW", "OIHW", "NCHW"))
    return y + b.reshape(1, -1, 1, 1)


def _ref_leaky(x):
    return jnp.where(x >= 0, x, LEAKY_SLOPE * x)


def _ref_pixelnorm(x):
    return x / jnp.sqrt(jnp.mean(x * x, axis=1, keepdims=True) + PN_EPS)


def _ref_avg_pool(x):
    n, c, h, w = x.shape
    return x.reshape(n, c, h // 2, 2, w // 2, 2).mean(axis=(3, 5))


def _ref_minibatch_std(x):
    stat = jnp.mean(jnp.std(x, axis=0, ddof=1))
    n, _, h, w = x.shape
    return jnp.concatenate([x, jnp.full((n, 1, h, w), stat, x.dtype)], axis=1)


def _ref_conv_block(p, x):
    x = _ref_pixelnorm(_ref_leaky(_ref_wsconv(x, p["c1"]["w"], p["c1"]["b"], 1)))
    x = _ref_pixelnorm(_ref_leaky(_ref_wsconv(x, p["c2"]["w"], p["c2"]["b"], 1)))
    return x


def _ref_discriminator(params, x, alpha, steps):
    n_blocks = len(params["prog_blocks"])
    cur_step = n_blocks - steps

    def final_block(h):
        p = params["final_block"]
        h = _ref_leaky(_ref_wsconv(h, p["c1"]["w"], p["c1"]["b"], 1))
        h = _ref_leaky(_ref_wsconv(h, p["c2"]["w"], p["c2"]["b"], 0))
        return _ref_wsconv(h, p["c3"]["w"], p["c3"]["b"], 0)

    out = _ref_leaky(_ref_wsconv(x, params["rgb_layers"][cur_step]["w"],
                                 params["rgb_layers"][cur_step]["b"], 0))
    if steps == 0:
        out = _ref_minibatch_std(out)
        return final_block(out).reshape(out.shape[0], -1)

    downscale = _ref_leaky(_ref_wsconv(_ref_avg_pool(x),
                                       params["rgb_layers"][cur_step + 1]["w"],
                                       params["rgb_layers"][cur_step + 1]["b"], 0))
    out = _ref_avg_pool(_ref_conv_block(params["prog_blocks"][cur_step], out))
    out = jnp.tanh(alpha * out + (1.0 - alpha) * downscale)
    for step in range(cur_step + 1, n_blocks):
        out = _ref_avg_pool(_ref_conv_block(params["prog_blocks"][step], out))
    out = _ref_minibatch_std(out)
    return final_block(out).reshape(out.shape[0], -1)


# ---------------------------------------------------------------------------
if __name__ == "__main__":
    key = jax.random.PRNGKey(0)
    kp, kx, kcx, kcw = jax.random.split(key, 4)

    # Small ProGAN discriminator: in_channels=32, 16x16 input (steps=2).
    in_channels, img_channels = 32, 3
    steps, alpha = 2, 0.7
    batch = 4
    res = 4 * 2 ** steps   # 16

    params = init_discriminator_params(kp, z_dim=64, in_channels=in_channels,
                                       img_channels=img_channels)
    x = jax.random.normal(kx, (batch, img_channels, res, res), jnp.float32)

    # ---- standalone fused WSConv2d kernel vs lax.conv reference ----
    cw = jax.random.normal(kcw, (8, 4, 3, 3), jnp.float32)
    cb = jnp.zeros((8,), jnp.float32)
    xc = jax.random.normal(kcx, (batch, 4, 16, 16), jnp.float32)
    xc_nhwc = jnp.transpose(xc, (0, 2, 3, 1))
    y_ref_c = _ref_wsconv(xc, cw, cb, 1)

    y_c_f32 = ws_conv2d_nhwc(xc_nhwc, cw, cb, k=3, padding=1,
                             compute_dtype=jnp.float32)
    y_c_f32 = jax.block_until_ready(jnp.transpose(y_c_f32, (0, 3, 1, 2)))
    assert y_c_f32.shape == (batch, 8, 16, 16)
    assert jnp.allclose(y_c_f32, y_ref_c, atol=2e-3, rtol=2e-3), "f32 conv mismatch"

    y_c_bf16 = ws_conv2d_nhwc(xc_nhwc, cw, cb, k=3, padding=1)   # bf16 MXU path
    y_c_bf16 = jax.block_until_ready(
        jnp.transpose(y_c_bf16.astype(jnp.float32), (0, 3, 1, 2)))
    assert jnp.allclose(y_c_bf16, y_ref_c, atol=1e-1, rtol=5e-2), "bf16 conv mismatch"

    # ---- full Discriminator forward ----
    y_ref = _ref_discriminator(params, x, alpha, steps)

    y_f32 = jax.block_until_ready(
        discriminator_forward(params, x, alpha, steps, compute_dtype=jnp.float32))
    assert y_f32.shape == (batch, 1)
    assert jnp.allclose(y_f32, y_ref, atol=1e-2, rtol=1e-2), "f32 disc mismatch"

    y_bf16 = jax.block_until_ready(
        discriminator_forward(params, x, alpha, steps))          # bf16 fast path
    assert y_bf16.shape == (batch, 1)
    assert bool(jnp.all(jnp.isfinite(y_bf16)))
    assert jnp.allclose(y_bf16, y_ref, atol=3e-1, rtol=3e-1), "bf16 disc mismatch"

    print("KERNEL_OK")
</pallas_src>

<mosaic_0001>
module attributes {stable_mosaic.version = 11 : i64} {
  func.func @_wsconv_kernel(%arg0: i32, %arg1: i32, %arg2: memref<4x18x18x128xf32, #tpu.memory_space<vmem>>, %arg3: memref<9x128x128xf32, #tpu.memory_space<vmem>>, %arg4: memref<1x128xf32, #tpu.memory_space<vmem>>, %arg5: memref<4x16x16x128xf32, #tpu.memory_space<vmem>>) attributes {dimension_semantics = [#tpu.dimension_semantics<parallel>, #tpu.dimension_semantics<parallel>], iteration_bounds = array<i64: 1, 1>, scalar_prefetch = 0 : i64, scratch_operands = 0 : i64, tpu.core_type = #tpu.core_type<tc>, window_params = [{transform_indices = @transform_0, window_bounds = array<i64: 4, 18, 18, 128>}, {transform_indices = @transform_1, window_bounds = array<i64: 9, 128, 128>}, {transform_indices = @transform_2, window_bounds = array<i64: 1, 128>}, {transform_indices = @transform_3, window_bounds = array<i64: 4, 16, 16, 128>}]} {
    %c0 = arith.constant 0 : index
    %c0_0 = arith.constant 0 : index
    %c0_1 = arith.constant 0 : index
    %c0_2 = arith.constant 0 : index
    %0 = vector.load %arg2[%c0, %c0_0, %c0_1, %c0_2] : memref<4x18x18x128xf32, #tpu.memory_space<vmem>>, vector<4x18x18x128xf32>
    %1 = vector.extract_strided_slice %0 {offsets = [0, 0, 0, 0], sizes = [4, 16, 16, 128], strides = [1, 1, 1, 1]} : vector<4x18x18x128xf32> to vector<4x16x16x128xf32>
    %2 = vector.shape_cast %1 : vector<4x16x16x128xf32> to vector<1024x128xf32>
    %c0_3 = arith.constant 0 : index
    %c0_4 = arith.constant 0 : index
    %c0_5 = arith.constant 0 : index
    %3 = vector.load %arg3[%c0_3, %c0_4, %c0_5] : memref<9x128x128xf32, #tpu.memory_space<vmem>>, vector<1x128x128xf32>
    %4 = vector.shape_cast %3 : vector<1x128x128xf32> to vector<128x128xf32>
    %cst = arith.constant dense<0.000000e+00> : vector<1024x128xf32>
    %5 = tpu.matmul %2, %4, %cst {dimension_numbers = #tpu.dot_dimension_numbers<[1], [0], [0], [1], [0, 0, 1, 1], [], []>} : vector<1024x128xf32>, vector<128x128xf32>, vector<1024x128xf32> -> vector<1024x128xf32>
    %6 = vector.extract_strided_slice %0 {offsets = [0, 0, 1, 0], sizes = [4, 16, 16, 128], strides = [1, 1, 1, 1]} : vector<4x18x18x128xf32> to vector<4x16x16x128xf32>
    %7 = vector.shape_cast %6 : vector<4x16x16x128xf32> to vector<1024x128xf32>
    %c1 = arith.constant 1 : index
    %c0_6 = arith.constant 0 : index
    %c0_7 = arith.constant 0 : index
    %8 = vector.load %arg3[%c1, %c0_6, %c0_7] : memref<9x128x128xf32, #tpu.memory_space<vmem>>, vector<1x128x128xf32>
    %9 = vector.shape_cast %8 : vector<1x128x128xf32> to vector<128x128xf32>
    %cst_8 = arith.constant dense<0.000000e+00> : vector<1024x128xf32>
    %10 = tpu.matmul %7, %9, %cst_8 {dimension_numbers = #tpu.dot_dimension_numbers<[1], [0], [0], [1], [0, 0, 1, 1], [], []>} : vector<1024x128xf32>, vector<128x128xf32>, vector<1024x128xf32> -> vector<1024x128xf32>
    %11 = arith.addf %5, %10 : vector<1024x128xf32>
    %12 = vector.extract_strided_slice %0 {offsets = [0, 0, 2, 0], sizes = [4, 16, 16, 128], strides = [1, 1, 1, 1]} : vector<4x18x18x128xf32> to vector<4x16x16x128xf32>
    %13 = vector.shape_cast %12 : vector<4x16x16x128xf32> to vector<1024x128xf32>
    %c2 = arith.constant 2 : index
    %c0_9 = arith.constant 0 : index
    %c0_10 = arith.constant 0 : index
    %14 = vector.load %arg3[%c2, %c0_9, %c0_10] : memref<9x128x128xf32, #tpu.memory_space<vmem>>, vector<1x128x128xf32>
    %15 = vector.shape_cast %14 : vector<1x128x128xf32> to vector<128x128xf32>
    %cst_11 = arith.constant dense<0.000000e+00> : vector<1024x128xf32>
    %16 = tpu.matmul %13, %15, %cst_11 {dimension_numbers = #tpu.dot_dimension_numbers<[1], [0], [0], [1], [0, 0, 1, 1], [], []>} : vector<1024x128xf32>, vector<128x128xf32>, vector<1024x128xf32> -> vector<1024x128xf32>
    %17 = arith.addf %11, %16 : vector<1024x128xf32>
    %18 = vector.extract_strided_slice %0 {offsets = [0, 1, 0, 0], sizes = [4, 16, 16, 128], strides = [1, 1, 1, 1]} : vector<4x18x18x128xf32> to vector<4x16x16x128xf32>
    %19 = vector.shape_cast %18 : vector<4x16x16x128xf32> to vector<1024x128xf32>
    %c3 = arith.constant 3 : index
    %c0_12 = arith.constant 0 : index
    %c0_13 = arith.constant 0 : index
    %20 = vector.load %arg3[%c3, %c0_12, %c0_13] : memref<9x128x128xf32, #tpu.memory_space<vmem>>, vector<1x128x128xf32>
    %21 = vector.shape_cast %20 : vector<1x128x128xf32> to vector<128x128xf32>
    %cst_14 = arith.constant dense<0.000000e+00> : vector<1024x128xf32>
    %22 = tpu.matmul %19, %21, %cst_14 {dimension_numbers = #tpu.dot_dimension_numbers<[1], [0], [0], [1], [0, 0, 1, 1], [], []>} : vector<1024x128xf32>, vector<128x128xf32>, vector<1024x128xf32> -> vector<1024x128xf32>
    %23 = arith.addf %17, %22 : vector<1024x128xf32>
    %24 = vector.extract_strided_slice %0 {offsets = [0, 1, 1, 0], sizes = [4, 16, 16, 128], strides = [1, 1, 1, 1]} : vector<4x18x18x128xf32> to vector<4x16x16x128xf32>
    %25 = vector.shape_cast %24 : vector<4x16x16x128xf32> to vector<1024x128xf32>
    %c4 = arith.constant 4 : index
    %c0_15 = arith.constant 0 : index
    %c0_16 = arith.constant 0 : index
    %26 = vector.load %arg3[%c4, %c0_15, %c0_16] : memref<9x128x128xf32, #tpu.memory_space<vmem>>, vector<1x128x128xf32>
    %27 = vector.shape_cast %26 : vector<1x128x128xf32> to vector<128x128xf32>
    %cst_17 = arith.constant dense<0.000000e+00> : vector<1024x128xf32>
    %28 = tpu.matmul %25, %27, %cst_17 {dimension_numbers = #tpu.dot_dimension_numbers<[1], [0], [0], [1], [0, 0, 1, 1], [], []>} : vector<1024x128xf32>, vector<128x128xf32>, vector<1024x128xf32> -> vector<1024x128xf32>
    %29 = arith.addf %23, %28 : vector<1024x128xf32>
    %30 = vector.extract_strided_slice %0 {offsets = [0, 1, 2, 0], sizes = [4, 16, 16, 128], strides = [1, 1, 1, 1]} : vector<4x18x18x128xf32> to vector<4x16x16x128xf32>
    %31 = vector.shape_cast %30 : vector<4x16x16x128xf32> to vector<1024x128xf32>
    %c5 = arith.constant 5 : index
    %c0_18 = arith.constant 0 : index
    %c0_19 = arith.constant 0 : index
    %32 = vector.load %arg3[%c5, %c0_18, %c0_19] : memref<9x128x128xf32, #tpu.memory_space<vmem>>, vector<1x128x128xf32>
    %33 = vector.shape_cast %32 : vector<1x128x128xf32> to vector<128x128xf32>
    %cst_20 = arith.constant dense<0.000000e+00> : vector<1024x128xf32>
    %34 = tpu.matmul %31, %33, %cst_20 {dimension_numbers = #tpu.dot_dimension_numbers<[1], [0], [0], [1], [0, 0, 1, 1], [], []>} : vector<1024x128xf32>, vector<128x128xf32>, vector<1024x128xf32> -> vector<1024x128xf32>
    %35 = arith.addf %29, %34 : vector<1024x128xf32>
    %36 = vector.extract_strided_slice %0 {offsets = [0, 2, 0, 0], sizes = [4, 16, 16, 128], strides = [1, 1, 1, 1]} : vector<4x18x18x128xf32> to vector<4x16x16x128xf32>
    %37 = vector.shape_cast %36 : vector<4x16x16x128xf32> to vector<1024x128xf32>
    %c6 = arith.constant 6 : index
    %c0_21 = arith.constant 0 : index
    %c0_22 = arith.constant 0 : index
    %38 = vector.load %arg3[%c6, %c0_21, %c0_22] : memref<9x128x128xf32, #tpu.memory_space<vmem>>, vector<1x128x128xf32>
    %39 = vector.shape_cast %38 : vector<1x128x128xf32> to vector<128x128xf32>
    %cst_23 = arith.constant dense<0.000000e+00> : vector<1024x128xf32>
    %40 = tpu.matmul %37, %39, %cst_23 {dimension_numbers = #tpu.dot_dimension_numbers<[1], [0], [0], [1], [0, 0, 1, 1], [], []>} : vector<1024x128xf32>, vector<128x128xf32>, vector<1024x128xf32> -> vector<1024x128xf32>
    %41 = arith.addf %35, %40 : vector<1024x128xf32>
    %42 = vector.extract_strided_slice %0 {offsets = [0, 2, 1, 0], sizes = [4, 16, 16, 128], strides = [1, 1, 1, 1]} : vector<4x18x18x128xf32> to vector<4x16x16x128xf32>
    %43 = vector.shape_cast %42 : vector<4x16x16x128xf32> to vector<1024x128xf32>
    %c7 = arith.constant 7 : index
    %c0_24 = arith.constant 0 : index
    %c0_25 = arith.constant 0 : index
    %44 = vector.load %arg3[%c7, %c0_24, %c0_25] : memref<9x128x128xf32, #tpu.memory_space<vmem>>, vector<1x128x128xf32>
    %45 = vector.shape_cast %44 : vector<1x128x128xf32> to vector<128x128xf32>
    %cst_26 = arith.constant dense<0.000000e+00> : vector<1024x128xf32>
    %46 = tpu.matmul %43, %45, %cst_26 {dimension_numbers = #tpu.dot_dimension_numbers<[1], [0], [0], [1], [0, 0, 1, 1], [], []>} : vector<1024x128xf32>, vector<128x128xf32>, vector<1024x128xf32> -> vector<1024x128xf32>
    %47 = arith.addf %41, %46 : vector<1024x128xf32>
    %48 = vector.extract_strided_slice %0 {offsets = [0, 2, 2, 0], sizes = [4, 16, 16, 128], strides = [1, 1, 1, 1]} : vector<4x18x18x128xf32> to vector<4x16x16x128xf32>
    %49 = vector.shape_cast %48 : vector<4x16x16x128xf32> to vector<1024x128xf32>
    %c8 = arith.constant 8 : index
    %c0_27 = arith.constant 0 : index
    %c0_28 = arith.constant 0 : index
    %50 = vector.load %arg3[%c8, %c0_27, %c0_28] : memref<9x128x128xf32, #tpu.memory_space<vmem>>, vector<1x128x128xf32>
    %51 = vector.shape_cast %50 : vector<1x128x128xf32> to vector<128x128xf32>
    %cst_29 = arith.constant dense<0.000000e+00> : vector<1024x128xf32>
    %52 = tpu.matmul %49, %51, %cst_29 {dimension_numbers = #tpu.dot_dimension_numbers<[1], [0], [0], [1], [0, 0, 1, 1], [], []>} : vector<1024x128xf32>, vector<128x128xf32>, vector<1024x128xf32> -> vector<1024x128xf32>
    %53 = arith.addf %47, %52 : vector<1024x128xf32>
    %c0_30 = arith.constant 0 : index
    %c0_31 = arith.constant 0 : index
    %54 = vector.load %arg4[%c0_30, %c0_31] : memref<1x128xf32, #tpu.memory_space<vmem>>, vector<1x128xf32>
    %55 = vector.broadcast %54 : vector<1x128xf32> to vector<1024x128xf32>
    %56 = arith.addf %53, %55 : vector<1024x128xf32>
    %57 = vector.shape_cast %56 : vector<1024x128xf32> to vector<4x16x16x128xf32>
    %c0_32 = arith.constant 0 : index
    %c0_33 = arith.constant 0 : index
    %c0_34 = arith.constant 0 : index
    %c0_35 = arith.constant 0 : index
    %58 = vector.load %arg5[%c0_32, %c0_33, %c0_34, %c0_35] : memref<4x16x16x128xf32, #tpu.memory_space<vmem>>, vector<4x16x16x128xf32>
    tpu.vector_store %arg5[%c0_32, %c0_33, %c0_34, %c0_35], %57 {strides = array<i32>} : memref<4x16x16x128xf32, #tpu.memory_space<vmem>>, vector<4x16x16x128xf32>,
    return
  }
  func.func @transform_0(%arg0: i32, %arg1: i32) -> (i32, i32, i32, i32) {
    %c0_i32 = arith.constant 0 : i32
    %c0_i32_0 = arith.constant 0 : i32
    %c0_i32_1 = arith.constant 0 : i32
    %c0_i32_2 = arith.constant 0 : i32
    return %arg0, %c0_i32, %c0_i32_0, %c0_i32_1 : i32, i32, i32, i32
  }
  func.func @transform_1(%arg0: i32, %arg1: i32) -> (i32, i32, i32) {
    %c0_i32 = arith.constant 0 : i32
    %c0_i32_0 = arith.constant 0 : i32
    %c0_i32_1 = arith.constant 0 : i32
    return %c0_i32, %c0_i32_0, %arg1 : i32, i32, i32
  }
  func.func @transform_2(%arg0: i32, %arg1: i32) -> (i32, i32) {
    %c0_i32 = arith.constant 0 : i32
    %c0_i32_0 = arith.constant 0 : i32
    return %c0_i32, %arg1 : i32, i32
  }
  func.func @transform_3(%arg0: i32, %arg1: i32) -> (i32, i32, i32, i32) {
    %c0_i32 = arith.constant 0 : i32
    %c0_i32_0 = arith.constant 0 : i32
    %c0_i32_1 = arith.constant 0 : i32
    return %arg0, %c0_i32, %c0_i32_0, %arg1 : i32, i32, i32, i32
  }
}

</mosaic_0001>

<llo_original>
// kernel: tpu_custom_call.1
$region0: #{tpu_custom_call.1}
  #allocation0 [shape = 'u32[]', space=smem, size = 0x4, offset = 0x4, fixed_abs, tag = 'smem constant byte address 0x4 - core index']
  #allocation1 [shape = 'u32[72,128]{1,0:T(1,128)}', space=vmem, size = 0x9000, scoped, tag = 'internal scratch']
  %s0 = inlined_call_operand.vmem [shape: f32[4,18,18,128], index: 0, kind: input, shape index: {}]
  %s1 = inlined_call_operand.vmem [shape: f32[9,128,128], index: 1, kind: input, shape index: {}]
  %s2 = inlined_call_operand.vmem [shape: f32[1,128], index: 2, kind: input, shape index: {}]
  %s3 = inlined_call_operand.hbm [shape: f32[4,16,16,128], index: 3, kind: output, shape index: {}]
  %s4 = sld [smem:[#allocation0]]
  $region22: #{tpu_custom_call.1} parent=0
    _
  %s6 = ssub.s32 1, %s4
  %s7 = scalar_select 0, %s6, %s4
  $region1: #{tpu_custom_call.1} parent=0
    #allocation2 [shape = 'u8[524288]{0}', space=vmem, size = 0x80000, scoped, tag = 'output window, operand 0, single buffered']
    #allocation3 [shape = 's32[1]{0}', space=sflag, size = 0x4, scoped, tag = 'scoped memory for tpu_custom_call.1']
    %8 = vsyncpa [#allocation3], 0
    // Predicated region
    $region2: #{tpu_custom_call.1} parent=1 // pred_check
      _
    $region3: #{tpu_custom_call.1} parent=1 // pred_check_branch
      %10 = sbr.rel (0) target = $region5
    $region4: #{tpu_custom_call.1} parent=1 // pred_region
      _
    $region5: #{tpu_custom_call.1} parent=1 // pred_fallthru
      _
    // Predicated region
    $region6: #{tpu_custom_call.1} parent=1 // pred_check
      _
    $region7: #{tpu_custom_call.1} parent=1 // pred_check_branch
      %12 = sbr.rel (0) target = $region9
    $region8: #{tpu_custom_call.1} parent=1 // pred_region
      _
    $region9: #{tpu_custom_call.1} parent=1 // pred_fallthru
      _
    // Predicated region
    $region10: #{tpu_custom_call.1} parent=1 // pred_check
      _
    $region11: #{tpu_custom_call.1} parent=1 // pred_check_branch
      %14 = sbr.rel (0) target = $region13
    $region12: #{tpu_custom_call.1} parent=1 // pred_region
      _
    $region13: #{tpu_custom_call.1} parent=1 // pred_fallthru
      _
    %v15 = vld [vmem:[%s0] sm:$0xff]
    %v16 = vld [vmem:[%s0 + $0x8] sm:$0xff]
    %v17 = vld [vmem:[%s0 + $0x10] sm:$0x3]
    %v18 = vld [vmem:[%s0 + $0x18] sm:$0xff]
    %v19 = vld [vmem:[%s0 + $0x20] sm:$0xff]
    %v20 = vld [vmem:[%s0 + $0x28] sm:$0x3]
    %v21 = vld [vmem:[%s0 + $0x30] sm:$0xff]
    %v22 = vld [vmem:[%s0 + $0x38] sm:$0xff]
    %v23 = vld [vmem:[%s0 + $0x40] sm:$0x3]
    %v24 = vld [vmem:[%s0 + $0x48] sm:$0xff]
    %v25 = vld [vmem:[%s0 + $0x50] sm:$0xff]
    %v26 = vld [vmem:[%s0 + $0x58] sm:$0x3]
    %v27 = vld [vmem:[%s0 + $0x60] sm:$0xff]
    %v28 = vld [vmem:[%s0 + $0x68] sm:$0xff]
    %v29 = vld [vmem:[%s0 + $0x70] sm:$0x3]
    %v30 = vld [vmem:[%s0 + $0x78] sm:$0xff]
    %v31 = vld [vmem:[%s0 + $0x80] sm:$0xff]
    %v32 = vld [vmem:[%s0 + $0x88] sm:$0x3]
    %v33 = vld [vmem:[%s0 + $0x90] sm:$0xff]
    %v34 = vld [vmem:[%s0 + $0x98] sm:$0xff]
    %v35 = vld [vmem:[%s0 + $0xa0] sm:$0x3]
    %v36 = vld [vmem:[%s0 + $0xa8] sm:$0xff]
    %v37 = vld [vmem:[%s0 + $0xb0] sm:$0xff]
    %v38 = vld [vmem:[%s0 + $0xb8] sm:$0x3]
    %v39 = vld [vmem:[%s0 + $0xc0] sm:$0xff]
    %v40 = vld [vmem:[%s0 + $0xc8] sm:$0xff]
    %v41 = vld [vmem:[%s0 + $0xd0] sm:$0x3]
    %v42 = vld [vmem:[%s0 + $0xd8] sm:$0xff]
    %v43 = vld [vmem:[%s0 + $0xe0] sm:$0xff]
    %v44 = vld [vmem:[%s0 + $0xe8] sm:$0x3]
    %v45 = vld [vmem:[%s0 + $0xf0] sm:$0xff]
    %v46 = vld [vmem:[%s0 + $0xf8] sm:$0xff]
    %v47 = vld [vmem:[%s0 + $0x100] sm:$0x3]
    %v48 = vld [vmem:[%s0 + $0x108] sm:$0xff]
    %v49 = vld [vmem:[%s0 + $0x110] sm:$0xff]
    %v50 = vld [vmem:[%s0 + $0x118] sm:$0x3]
    %v51 = vld [vmem:[%s0 + $0x120] sm:$0xff]
    %v52 = vld [vmem:[%s0 + $0x128] sm:$0xff]
    %v53 = vld [vmem:[%s0 + $0x130] sm:$0x3]
    %v54 = vld [vmem:[%s0 + $0x138] sm:$0xff]
    %v55 = vld [vmem:[%s0 + $0x140] sm:$0xff]
    %v56 = vld [vmem:[%s0 + $0x148] sm:$0x3]
    %v57 = vld [vmem:[%s0 + $0x150] sm:$0xff]
    %v58 = vld [vmem:[%s0 + $0x158] sm:$0xff]
    %v59 = vld [vmem:[%s0 + $0x160] sm:$0x3]
    %v60 = vld [vmem:[%s0 + $0x168] sm:$0xff]
    %v61 = vld [vmem:[%s0 + $0x170] sm:$0xff]
    %v62 = vld [vmem:[%s0 + $0x178] sm:$0x3]
    %v63 = vld [vmem:[%s0 + $0x180] sm:$0xff]
    %v64 = vld [vmem:[%s0 + $0x188] sm:$0xff]
    %v65 = vld [vmem:[%s0 + $0x190] sm:$0x3]
    %v66 = vld [vmem:[%s0 + $0x198] sm:$0xff]
    %v67 = vld [vmem:[%s0 + $0x1a0] sm:$0xff]
    %v68 = vld [vmem:[%s0 + $0x1a8] sm:$0x3]
    %v69 = vld [vmem:[%s0 + $0x1b0] sm:$0xff]
    %v70 = vld [vmem:[%s0 + $0x1b8] sm:$0xff]
    %v71 = vld [vmem:[%s0 + $0x1c0] sm:$0x3]
    %v72 = vld [vmem:[%s0 + $0x1c8] sm:$0xff]
    %v73 = vld [vmem:[%s0 + $0x1d0] sm:$0xff]
    %v74 = vld [vmem:[%s0 + $0x1d8] sm:$0x3]
    %v75 = vld [vmem:[%s0 + $0x1e0] sm:$0xff]
    %v76 = vld [vmem:[%s0 + $0x1e8] sm:$0xff]
    %v77 = vld [vmem:[%s0 + $0x1f0] sm:$0x3]
    %v78 = vld [vmem:[%s0 + $0x1f8] sm:$0xff]
    %v79 = vld [vmem:[%s0 + $0x200] sm:$0xff]
    %v80 = vld [vmem:[%s0 + $0x208] sm:$0x3]
    %v81 = vld [vmem:[%s0 + $0x210] sm:$0xff]
    %v82 = vld [vmem:[%s0 + $0x218] sm:$0xff]
    %v83 = vld [vmem:[%s0 + $0x220] sm:$0x3]
    %v84 = vld [vmem:[%s0 + $0x228] sm:$0xff]
    %v85 = vld [vmem:[%s0 + $0x230] sm:$0xff]
    %v86 = vld [vmem:[%s0 + $0x238] sm:$0x3]
    %v87 = vld [vmem:[%s0 + $0x240] sm:$0xff]
    %v88 = vld [vmem:[%s0 + $0x248] sm:$0xff]
    %v89 = vld [vmem:[%s0 + $0x250] sm:$0x3]
    %v90 = vld [vmem:[%s0 + $0x258] sm:$0xff]
    %v91 = vld [vmem:[%s0 + $0x260] sm:$0xff]
    %v92 = vld [vmem:[%s0 + $0x268] sm:$0x3]
    %v93 = vld [vmem:[%s0 + $0x270] sm:$0xff]
    %v94 = vld [vmem:[%s0 + $0x278] sm:$0xff]
    %v95 = vld [vmem:[%s0 + $0x280] sm:$0x3]
    %v96 = vld [vmem:[%s0 + $0x288] sm:$0xff]
    %v97 = vld [vmem:[%s0 + $0x290] sm:$0xff]
    %v98 = vld [vmem:[%s0 + $0x298] sm:$0x3]
    %v99 = vld [vmem:[%s0 + $0x2a0] sm:$0xff]
    %v100 = vld [vmem:[%s0 + $0x2a8] sm:$0xff]
    %v101 = vld [vmem:[%s0 + $0x2b0] sm:$0x3]
    %v102 = vld [vmem:[%s0 + $0x2b8] sm:$0xff]
    %v103 = vld [vmem:[%s0 + $0x2c0] sm:$0xff]
    %v104 = vld [vmem:[%s0 + $0x2c8] sm:$0x3]
    %v105 = vld [vmem:[%s0 + $0x2d0] sm:$0xff]
    %v106 = vld [vmem:[%s0 + $0x2d8] sm:$0xff]
    %v107 = vld [vmem:[%s0 + $0x2e0] sm:$0x3]
    %v108 = vld [vmem:[%s0 + $0x2e8] sm:$0xff]
    %v109 = vld [vmem:[%s0 + $0x2f0] sm:$0xff]
    %v110 = vld [vmem:[%s0 + $0x2f8] sm:$0x3]
    %v111 = vld [vmem:[%s0 + $0x300] sm:$0xff]
    %v112 = vld [vmem:[%s0 + $0x308] sm:$0xff]
    %v113 = vld [vmem:[%s0 + $0x310] sm:$0x3]
    %v114 = vld [vmem:[%s0 + $0x318] sm:$0xff]
    %v115 = vld [vmem:[%s0 + $0x320] sm:$0xff]
    %v116 = vld [vmem:[%s0 + $0x328] sm:$0x3]
    %v117 = vld [vmem:[%s0 + $0x330] sm:$0xff]
    %v118 = vld [vmem:[%s0 + $0x338] sm:$0xff]
    %v119 = vld [vmem:[%s0 + $0x340] sm:$0x3]
    %v120 = vld [vmem:[%s0 + $0x348] sm:$0xff]
    %v121 = vld [vmem:[%s0 + $0x350] sm:$0xff]
    %v122 = vld [vmem:[%s0 + $0x358] sm:$0x3]
    %v123 = vld [vmem:[%s0 + $0x360] sm:$0xff]
    %v124 = vld [vmem:[%s0 + $0x368] sm:$0xff]
    %v125 = vld [vmem:[%s0 + $0x370] sm:$0x3]
    %v126 = vld [vmem:[%s0 + $0x378] sm:$0xff]
    %v127 = vld [vmem:[%s0 + $0x380] sm:$0xff]
    %v128 = vld [vmem:[%s0 + $0x388] sm:$0x3]
    %v129 = vld [vmem:[%s0 + $0x390] sm:$0xff]
    %v130 = vld [vmem:[%s0 + $0x398] sm:$0xff]
    %v131 = vld [vmem:[%s0 + $0x3a0] sm:$0x3]
    %v132 = vld [vmem:[%s0 + $0x3a8] sm:$0xff]
    %v133 = vld [vmem:[%s0 + $0x3b0] sm:$0xff]
    %v134 = vld [vmem:[%s0 + $0x3b8] sm:$0x3]
    %v135 = vld [vmem:[%s0 + $0x3c0] sm:$0xff]
    %v136 = vld [vmem:[%s0 + $0x3c8] sm:$0xff]
    %v137 = vld [vmem:[%s0 + $0x3d0] sm:$0x3]
    %v138 = vld [vmem:[%s0 + $0x3d8] sm:$0xff]
    %v139 = vld [vmem:[%s0 + $0x3e0] sm:$0xff]
    %v140 = vld [vmem:[%s0 + $0x3e8] sm:$0x3]
    %v141 = vld [vmem:[%s0 + $0x3f0] sm:$0xff]
    %v142 = vld [vmem:[%s0 + $0x3f8] sm:$0xff]
    %v143 = vld [vmem:[%s0 + $0x400] sm:$0x3]
    %v144 = vld [vmem:[%s0 + $0x408] sm:$0xff]
    %v145 = vld [vmem:[%s0 + $0x410] sm:$0xff]
    %v146 = vld [vmem:[%s0 + $0x418] sm:$0x3]
    %v147 = vld [vmem:[%s0 + $0x420] sm:$0xff]
    %v148 = vld [vmem:[%s0 + $0x428] sm:$0xff]
    %v149 = vld [vmem:[%s0 + $0x430] sm:$0x3]
    %v150 = vld [vmem:[%s0 + $0x438] sm:$0xff]
    %v151 = vld [vmem:[%s0 + $0x440] sm:$0xff]
    %v152 = vld [vmem:[%s0 + $0x448] sm:$0x3]
    %v153 = vld [vmem:[%s0 + $0x450] sm:$0xff]
    %v154 = vld [vmem:[%s0 + $0x458] sm:$0xff]
    %v155 = vld [vmem:[%s0 + $0x460] sm:$0x3]
    %v156 = vld [vmem:[%s0 + $0x468] sm:$0xff]
    %v157 = vld [vmem:[%s0 + $0x470] sm:$0xff]
    %v158 = vld [vmem:[%s0 + $0x478] sm:$0x3]
    %v159 = vld [vmem:[%s0 + $0x480] sm:$0xff]
    %v160 = vld [vmem:[%s0 + $0x488] sm:$0xff]
    %v161 = vld [vmem:[%s0 + $0x490] sm:$0x3]
    %v162 = vld [vmem:[%s0 + $0x498] sm:$0xff]
    %v163 = vld [vmem:[%s0 + $0x4a0] sm:$0xff]
    %v164 = vld [vmem:[%s0 + $0x4a8] sm:$0x3]
    %v165 = vld [vmem:[%s0 + $0x4b0] sm:$0xff]
    %v166 = vld [vmem:[%s0 + $0x4b8] sm:$0xff]
    %v167 = vld [vmem:[%s0 + $0x4c0] sm:$0x3]
    %v168 = vld [vmem:[%s0 + $0x4c8] sm:$0xff]
    %v169 = vld [vmem:[%s0 + $0x4d0] sm:$0xff]
    %v170 = vld [vmem:[%s0 + $0x4d8] sm:$0x3]
    %v171 = vld [vmem:[%s0 + $0x4e0] sm:$0xff]
    %v172 = vld [vmem:[%s0 + $0x4e8] sm:$0xff]
    %v173 = vld [vmem:[%s0 + $0x4f0] sm:$0x3]
    %v174 = vld [vmem:[%s0 + $0x4f8] sm:$0xff]
    %v175 = vld [vmem:[%s0 + $0x500] sm:$0xff]
    %v176 = vld [vmem:[%s0 + $0x508] sm:$0x3]
    %v177 = vld [vmem:[%s0 + $0x510] sm:$0xff]
    %v178 = vld [vmem:[%s0 + $0x518] sm:$0xff]
    %v179 = vld [vmem:[%s0 + $0x520] sm:$0x3]
    %v180 = vld [vmem:[%s0 + $0x528] sm:$0xff]
    %v181 = vld [vmem:[%s0 + $0x530] sm:$0xff]
    %v182 = vld [vmem:[%s0 + $0x538] sm:$0x3]
    %v183 = vld [vmem:[%s0 + $0x540] sm:$0xff]
    %v184 = vld [vmem:[%s0 + $0x548] sm:$0xff]
    %v185 = vld [vmem:[%s0 + $0x550] sm:$0x3]
    %v186 = vld [vmem:[%s0 + $0x558] sm:$0xff]
    %v187 = vld [vmem:[%s0 + $0x560] sm:$0xff]
    %v188 = vld [vmem:[%s0 + $0x568] sm:$0x3]
    %v189 = vld [vmem:[%s0 + $0x570] sm:$0xff]
    %v190 = vld [vmem:[%s0 + $0x578] sm:$0xff]
    %v191 = vld [vmem:[%s0 + $0x580] sm:$0x3]
    %v192 = vld [vmem:[%s0 + $0x588] sm:$0xff]
    %v193 = vld [vmem:[%s0 + $0x590] sm:$0xff]
    %v194 = vld [vmem:[%s0 + $0x598] sm:$0x3]
    %v195 = vld [vmem:[%s0 + $0x5a0] sm:$0xff]
    %v196 = vld [vmem:[%s0 + $0x5a8] sm:$0xff]
    %v197 = vld [vmem:[%s0 + $0x5b0] sm:$0x3]
    %v198 = vld [vmem:[%s0 + $0x5b8] sm:$0xff]
    %v199 = vld [vmem:[%s0 + $0x5c0] sm:$0xff]
    %v200 = vld [vmem:[%s0 + $0x5c8] sm:$0x3]
    %v201 = vld [vmem:[%s0 + $0x5d0] sm:$0xff]
    %v202 = vld [vmem:[%s0 + $0x5d8] sm:$0xff]
    %v203 = vld [vmem:[%s0 + $0x5e0] sm:$0x3]
    %v204 = vld [vmem:[%s0 + $0x5e8] sm:$0xff]
    %v205 = vld [vmem:[%s0 + $0x5f0] sm:$0xff]
    %v206 = vld [vmem:[%s0 + $0x5f8] sm:$0x3]
    %v207 = vld [vmem:[%s0 + $0x600] sm:$0xff]
    %v208 = vld [vmem:[%s0 + $0x608] sm:$0xff]
    %v209 = vld [vmem:[%s0 + $0x610] sm:$0x3]
    %v210 = vld [vmem:[%s0 + $0x618] sm:$0xff]
    %v211 = vld [vmem:[%s0 + $0x620] sm:$0xff]
    %v212 = vld [vmem:[%s0 + $0x628] sm:$0x3]
    %v213 = vld [vmem:[%s0 + $0x630] sm:$0xff]
    %v214 = vld [vmem:[%s0 + $0x638] sm:$0xff]
    %v215 = vld [vmem:[%s0 + $0x640] sm:$0x3]
    %v216 = vld [vmem:[%s0 + $0x648] sm:$0xff]
    %v217 = vld [vmem:[%s0 + $0x650] sm:$0xff]
    %v218 = vld [vmem:[%s0 + $0x658] sm:$0x3]
    %v219 = vld [vmem:[%s0 + $0x660] sm:$0xff]
    %v220 = vld [vmem:[%s0 + $0x668] sm:$0xff]
    %v221 = vld [vmem:[%s0 + $0x670] sm:$0x3]
    %v222 = vld [vmem:[%s0 + $0x678] sm:$0xff]
    %v223 = vld [vmem:[%s0 + $0x680] sm:$0xff]
    %v224 = vld [vmem:[%s0 + $0x688] sm:$0x3]
    %v225 = vld [vmem:[%s0 + $0x690] sm:$0xff]
    %v226 = vld [vmem:[%s0 + $0x698] sm:$0xff]
    %v227 = vld [vmem:[%s0 + $0x6a0] sm:$0x3]
    %v228 = vld [vmem:[%s0 + $0x6a8] sm:$0xff]
    %v229 = vld [vmem:[%s0 + $0x6b0] sm:$0xff]
    %v230 = vld [vmem:[%s0 + $0x6b8] sm:$0x3]
    %v231 = vld [vmem:[%s1] sm:$0xff]
    %v232 = vld [vmem:[%s1 + $0x8] sm:$0xff]
    %v233 = vld [vmem:[%s1 + $0x10] sm:$0xff]
    %v234 = vld [vmem:[%s1 + $0x18] sm:$0xff]
    %v235 = vld [vmem:[%s1 + $0x20] sm:$0xff]
    %v236 = vld [vmem:[%s1 + $0x28] sm:$0xff]
    %v237 = vld [vmem:[%s1 + $0x30] sm:$0xff]
    %v238 = vld [vmem:[%s1 + $0x38] sm:$0xff]
    %v239 = vld [vmem:[%s1 + $0x40] sm:$0xff]
    %v240 = vld [vmem:[%s1 + $0x48] sm:$0xff]
    %v241 = vld [vmem:[%s1 + $0x50] sm:$0xff]
    %v242 = vld [vmem:[%s1 + $0x58] sm:$0xff]
    %v243 = vld [vmem:[%s1 + $0x60] sm:$0xff]
    %v244 = vld [vmem:[%s1 + $0x68] sm:$0xff]
    %v245 = vld [vmem:[%s1 + $0x70] sm:$0xff]
    %v246 = vld [vmem:[%s1 + $0x78] sm:$0xff]
    %vm439 = vcmask 1046528
    %v440 = vrot.slane %v15, 1
    %v441 = vrot.slane %v16, 1
    %v442 = vsel %vm439, %v440, %v441
    %v443 = vrot.slane %v17, 1
    %v444 = vsel %vm439, %v441, %v443
    %v445 = vrot.slane %v18, 1
    %v446 = vrot.slane %v19, 1
    %v447 = vsel %vm439, %v445, %v446
    %v448 = vrot.slane %v20, 1
    %v449 = vsel %vm439, %v446, %v448
    %v450 = vrot.slane %v21, 1
    %v451 = vrot.slane %v22, 1
    %v452 = vsel %vm439, %v450, %v451
    %v453 = vrot.slane %v23, 1
    %v454 = vsel %vm439, %v451, %v453
    %v455 = vrot.slane %v24, 1
    %v456 = vrot.slane %v25, 1
    %v457 = vsel %vm439, %v455, %v456
    %v458 = vrot.slane %v26, 1
    %v459 = vsel %vm439, %v456, %v458
    %v460 = vrot.slane %v27, 1
    %v461 = vrot.slane %v28, 1
    %v462 = vsel %vm439, %v460, %v461
    %v463 = vrot.slane %v29, 1
    %v464 = vsel %vm439, %v461, %v463
    %v465 = vrot.slane %v30, 1
    %v466 = vrot.slane %v31, 1
    %v467 = vsel %vm439, %v465, %v466
    %v468 = vrot.slane %v32, 1
    %v469 = vsel %vm439, %v466, %v468
    %v470 = vrot.slane %v33, 1
    %v471 = vrot.slane %v34, 1
    %v472 = vsel %vm439, %v470, %v471
    %v473 = vrot.slane %v35, 1
    %v474 = vsel %vm439, %v471, %v473
    %v475 = vrot.slane %v36, 1
    %v476 = vrot.slane %v37, 1
    %v477 = vsel %vm439, %v475, %v476
    %v478 = vrot.slane %v38, 1
    %v479 = vsel %vm439, %v476, %v478
    %v480 = vrot.slane %v39, 1
    %v481 = vrot.slane %v40, 1
    %v482 = vsel %vm439, %v480, %v481
    %v483 = vrot.slane %v41, 1
    %v484 = vsel %vm439, %v481, %v483
    %v485 = vrot.slane %v42, 1
    %v486 = vrot.slane %v43, 1
    %v487 = vsel %vm439, %v485, %v486
    %v488 = vrot.slane %v44, 1
    %v489 = vsel %vm439, %v486, %v488
    %v490 = vrot.slane %v45, 1
    %v491 = vrot.slane %v46, 1
    %v492 = vsel %vm439, %v490, %v491
    %v493 = vrot.slane %v47, 1
    %v494 = vsel %vm439, %v491, %v493
    %v495 = vrot.slane %v48, 1
    %v496 = vrot.slane %v49, 1
    %v497 = vsel %vm439, %v495, %v496
    %v498 = vrot.slane %v50, 1
    %v499 = vsel %vm439, %v496, %v498
    %v500 = vrot.slane %v51, 1
    %v501 = vrot.slane %v52, 1
    %v502 = vsel %vm439, %v500, %v501
    %v503 = vrot.slane %v53, 1
    %v504 = vsel %vm439, %v501, %v503
    %v505 = vrot.slane %v54, 1
    %v506 = vrot.slane %v55, 1
    %v507 = vsel %vm439, %v505, %v506
    %v508 = vrot.slane %v56, 1
    %v509 = vsel %vm439, %v506, %v508
    %v510 = vrot.slane %v57, 1
    %v511 = vrot.slane %v58, 1
    %v512 = vsel %vm439, %v510, %v511
    %v513 = vrot.slane %v59, 1
    %v514 = vsel %vm439, %v511, %v513
    %v515 = vrot.slane %v60, 1
    %v516 = vrot.slane %v61, 1
    %v517 = vsel %vm439, %v515, %v516
    %v518 = vrot.slane %v62, 1
    %v519 = vsel %vm439, %v516, %v518
    %v520 = vrot.slane %v69, 1
    %v521 = vrot.slane %v70, 1
    %v522 = vsel %vm439, %v520, %v521
    %v523 = vrot.slane %v71, 1
    %v524 = vsel %vm439, %v521, %v523
    %v525 = vrot.slane %v72, 1
    %v526 = vrot.slane %v73, 1
    %v527 = vsel %vm439, %v525, %v526
    %v528 = vrot.slane %v74, 1
    %v529 = vsel %vm439, %v526, %v528
    %v530 = vrot.slane %v75, 1
    %v531 = vrot.slane %v76, 1
    %v532 = vsel %vm439, %v530, %v531
    %v533 = vrot.slane %v77, 1
    %v534 = vsel %vm439, %v531, %v533
    %v535 = vrot.slane %v78, 1
    %v536 = vrot.slane %v79, 1
    %v537 = vsel %vm439, %v535, %v536
    %v538 = vrot.slane %v80, 1
    %v539 = vsel %vm439, %v536, %v538
    %v540 = vrot.slane %v81, 1
    %v541 = vrot.slane %v82, 1
    %v542 = vsel %vm439, %v540, %v541
    %v543 = vrot.slane %v83, 1
    %v544 = vsel %vm439, %v541, %v543
    %v545 = vrot.slane %v84, 1
    %v546 = vrot.slane %v85, 1
    %v547 = vsel %vm439, %v545, %v546
    %v548 = vrot.slane %v86, 1
    %v549 = vsel %vm439, %v546, %v548
    %v550 = vrot.slane %v87, 1
    %v551 = vrot.slane %v88, 1
    %v552 = vsel %vm439, %v550, %v551
    %v553 = vrot.slane %v89, 1
    %v554 = vsel %vm439, %v551, %v553
    %v555 = vrot.slane %v90, 1
    %v556 = vrot.slane %v91, 1
    %v557 = vsel %vm439, %v555, %v556
    %v558 = vrot.slane %v92, 1
    %v559 = vsel %vm439, %v556, %v558
    %v560 = vrot.slane %v93, 1
    %v561 = vrot.slane %v94, 1
    %v562 = vsel %vm439, %v560, %v561
    %v563 = vrot.slane %v95, 1
    %v564 = vsel %vm439, %v561, %v563
    %v565 = vrot.slane %v96, 1
    %v566 = vrot.slane %v97, 1
    %v567 = vsel %vm439, %v565, %v566
    %v568 = vrot.slane %v98, 1
    %v569 = vsel %vm439, %v566, %v568
    %v570 = vrot.slane %v99, 1
    %v571 = vrot.slane %v100, 1
    %v572 = vsel %vm439, %v570, %v571
    %v573 = vrot.slane %v101, 1
    %v574 = vsel %vm439, %v571, %v573
    %v575 = vrot.slane %v102, 1
    %v576 = vrot.slane %v103, 1
    %v577 = vsel %vm439, %v575, %v576
    %v578 = vrot.slane %v104, 1
    %v579 = vsel %vm439, %v576, %v578
    %v580 = vrot.slane %v105, 1
    %v581 = vrot.slane %v106, 1
    %v582 = vsel %vm439, %v580, %v581
    %v583 = vrot.slane %v107, 1
    %v584 = vsel %vm439, %v581, %v583
    %v585 = vrot.slane %v108, 1
    %v586 = vrot.slane %v109, 1
    %v587 = vsel %vm439, %v585, %v586
    %v588 = vrot.slane %v110, 1
    %v589 = vsel %vm439, %v586, %v588
    %v590 = vrot.slane %v111, 1
    %v591 = vrot.slane %v112, 1
    %v592 = vsel %vm439, %v590, %v591
    %v593 = vrot.slane %v113, 1
    %v594 = vsel %vm439, %v591, %v593
    %v595 = vrot.slane %v114, 1
    %v596 = vrot.slane %v115, 1
    %v597 = vsel %vm439, %v595, %v596
    %v598 = vrot.slane %v116, 1
    %v599 = vsel %vm439, %v596, %v598
    %v600 = vrot.slane %v123, 1
    %v601 = vrot.slane %v124, 1
    %v602 = vsel %vm439, %v600, %v601
    %v603 = vrot.slane %v125, 1
    %v604 = vsel %vm439, %v601, %v603
    %v605 = vrot.slane %v126, 1
    %v606 = vrot.slane %v127, 1
    %v607 = vsel %vm439, %v605, %v606
    %v608 = vrot.slane %v128, 1
    %v609 = vsel %vm439, %v606, %v608
    %v610 = vrot.slane %v129, 1
    %v611 = vrot.slane %v130, 1
    %v612 = vsel %vm439, %v610, %v611
    %v613 = vrot.slane %v131, 1
    %v614 = vsel %vm439, %v611, %v613
    %v615 = vrot.slane %v132, 1
    %v616 = vrot.slane %v133, 1
    %v617 = vsel %vm439, %v615, %v616
    %v618 = vrot.slane %v134, 1
    %v619 = vsel %vm439, %v616, %v618
    %v620 = vrot.slane %v135, 1
    %v621 = vrot.slane %v136, 1
    %v622 = vsel %vm439, %v620, %v621
    %v623 = vrot.slane %v137, 1
    %v624 = vsel %vm439, %v621, %v623
    %v625 = vrot.slane %v138, 1
    %v626 = vrot.slane %v139, 1
    %v627 = vsel %vm439, %v625, %v626
    %v628 = vrot.slane %v140, 1
    %v629 = vsel %vm439, %v626, %v628
    %v630 = vrot.slane %v141, 1
    %v631 = vrot.slane %v142, 1
    %v632 = vsel %vm439, %v630, %v631
    %v633 = vrot.slane %v143, 1
    %v634 = vsel %vm439, %v631, %v633
    %v635 = vrot.slane %v144, 1
    %v636 = vrot.slane %v145, 1
    %v637 = vsel %vm439, %v635, %v636
    %v638 = vrot.slane %v146, 1
    %v639 = vsel %vm439, %v636, %v638
    %v640 = vrot.slane %v147, 1
    %v641 = vrot.slane %v148, 1
    %v642 = vsel %vm439, %v640, %v641
    %v643 = vrot.slane %v149, 1
    %v644 = vsel %vm439, %v641, %v643
    %v645 = vrot.slane %v150, 1
    %v646 = vrot.slane %v151, 1
    %v647 = vsel %vm439, %v645, %v646
    %v648 = vrot.slane %v152, 1
    %v649 = vsel %vm439, %v646, %v648
    %v650 = vrot.slane %v153, 1
    %v651 = vrot.slane %v154, 1
    %v652 = vsel %vm439, %v650, %v651
    %v653 = vrot.slane %v155, 1
    %v654 = vsel %vm439, %v651, %v653
    %v655 = vrot.slane %v156, 1
    %v656 = vrot.slane %v157, 1
    %v657 = vsel %vm439, %v655, %v656
    %v658 = vrot.slane %v158, 1
    %v659 = vsel %vm439, %v656, %v658
    %v660 = vrot.slane %v159, 1
    %v661 = vrot.slane %v160, 1
    %v662 = vsel %vm439, %v660, %v661
    %v663 = vrot.slane %v161, 1
    %v664 = vsel %vm439, %v661, %v663
    %v665 = vrot.slane %v162, 1
    %v666 = vrot.slane %v163, 1
    %v667 = vsel %vm439, %v665, %v666
    %v668 = vrot.slane %v164, 1
    %v669 = vsel %vm439, %v666, %v668
    %v670 = vrot.slane %v165, 1
    %v671 = vrot.slane %v166, 1
    %v672 = vsel %vm439, %v670, %v671
    %v673 = vrot.slane %v167, 1
    %v674 = vsel %vm439, %v671, %v673
    %v675 = vrot.slane %v168, 1
    %v676 = vrot.slane %v169, 1
    %v677 = vsel %vm439, %v675, %v676
    %v678 = vrot.slane %v170, 1
    %v679 = vsel %vm439, %v676, %v678
    %v680 = vrot.slane %v177, 1
    %v681 = vrot.slane %v178, 1
    %v682 = vsel %vm439, %v680, %v681
    %v683 = vrot.slane %v179, 1
    %v684 = vsel %vm439, %v681, %v683
    %v685 = vrot.slane %v180, 1
    %v686 = vrot.slane %v181, 1
    %v687 = vsel %vm439, %v685, %v686
    %v688 = vrot.slane %v182, 1
    %v689 = vsel %vm439, %v686, %v688
    %v690 = vrot.slane %v183, 1
    %v691 = vrot.slane %v184, 1
    %v692 = vsel %vm439, %v690, %v691
    %v693 = vrot.slane %v185, 1
    %v694 = vsel %vm439, %v691, %v693
    %v695 = vrot.slane %v186, 1
    %v696 = vrot.slane %v187, 1
    %v697 = vsel %vm439, %v695, %v696
    %v698 = vrot.slane %v188, 1
    %v699 = vsel %vm439, %v696, %v698
    %v700 = vrot.slane %v189, 1
    %v701 = vrot.slane %v190, 1
    %v702 = vsel %vm439, %v700, %v701
    %v703 = vrot.slane %v191, 1
    %v704 = vsel %vm439, %v701, %v703
    %v705 = vrot.slane %v192, 1
    %v706 = vrot.slane %v193, 1
    %v707 = vsel %vm439, %v705, %v706
    %v708 = vrot.slane %v194, 1
    %v709 = vsel %vm439, %v706, %v708
    %v710 = vrot.slane %v195, 1
    %v711 = vrot.slane %v196, 1
    %v712 = vsel %vm439, %v710, %v711
    %v713 = vrot.slane %v197, 1
    %v714 = vsel %vm439, %v711, %v713
    %v715 = vrot.slane %v198, 1
    %v716 = vrot.slane %v199, 1
    %v717 = vsel %vm439, %v715, %v716
    %v718 = vrot.slane %v200, 1
    %v719 = vsel %vm439, %v716, %v718
    %v720 = vrot.slane %v201, 1
    %v721 = vrot.slane %v202, 1
    %v722 = vsel %vm439, %v720, %v721
    %v723 = vrot.slane %v203, 1
    %v724 = vsel %vm439, %v721, %v723
    %v725 = vrot.slane %v204, 1
    %v726 = vrot.slane %v205, 1
    %v727 = vsel %vm439, %v725, %v726
    %v728 = vrot.slane %v206, 1
    %v729 = vsel %vm439, %v726, %v728
    %v730 = vrot.slane %v207, 1
    %v731 = vrot.slane %v208, 1
    %v732 = vsel %vm439, %v730, %v731
    %v733 = vrot.slane %v209, 1
    %v734 = vsel %vm439, %v731, %v733
    %v735 = vrot.slane %v210, 1
    %v736 = vrot.slane %v211, 1
    %v737 = vsel %vm439, %v735, %v736
    %v738 = vrot.slane %v212, 1
    %v739 = vsel %vm439, %v736, %v738
    %v740 = vrot.slane %v213, 1
    %v741 = vrot.slane %v214, 1
    %v742 = vsel %vm439, %v740, %v741
    %v743 = vrot.slane %v215, 1
    %v744 = vsel %vm439, %v741, %v743
    %v745 = vrot.slane %v216, 1
    %v746 = vrot.slane %v217, 1
    %v747 = vsel %vm439, %v745, %v746
    %v748 = vrot.slane %v218, 1
    %v749 = vsel %vm439, %v746, %v748
    %v750 = vrot.slane %v219, 1
    %v751 = vrot.slane %v220, 1
    %v752 = vsel %vm439, %v750, %v751
    %v753 = vrot.slane %v221, 1
    %v754 = vsel %vm439, %v751, %v753
    %v755 = vrot.slane %v222, 1
    %v756 = vrot.slane %v223, 1
    %v757 = vsel %vm439, %v755, %v756
    %v758 = vrot.slane %v224, 1
    %v759 = vsel %vm439, %v756, %v758
    %s888 = scalar_lea.vmem %s1, 128
    %v889 = vld [vmem:[%s888] sm:$0xff]
    %v890 = vld [vmem:[%s888 + $0x8] sm:$0xff]
    %v891 = vld [vmem:[%s888 + $0x10] sm:$0xff]
    %v892 = vld [vmem:[%s888 + $0x18] sm:$0xff]
    %v893 = vld [vmem:[%s888 + $0x20] sm:$0xff]
    %v894 = vld [vmem:[%s888 + $0x28] sm:$0xff]
    %v895 = vld [vmem:[%s888 + $0x30] sm:$0xff]
    %v896 = vld [vmem:[%s888 + $0x38] sm:$0xff]
    %v897 = vld [vmem:[%s888 + $0x40] sm:$0xff]
    %v898 = vld [vmem:[%s888 + $0x48] sm:$0xff]
    %v899 = vld [vmem:[%s888 + $0x50] sm:$0xff]
    %v900 = vld [vmem:[%s888 + $0x58] sm:$0xff]
    %v901 = vld [vmem:[%s888 + $0x60] sm:$0xff]
    %v902 = vld [vmem:[%s888 + $0x68] sm:$0xff]
    %v903 = vld [vmem:[%s888 + $0x70] sm:$0xff]
    %v904 = vld [vmem:[%s888 + $0x78] sm:$0xff]
    %905 = vmatpush.msra.mxu0 %v904
    %906 = vmatpush.msra.mxu0 %v903
    %907 = vmatpush.msra.mxu0 %v902
    %908 = vmatpush.msra.mxu0 %v901
    %909 = vmatpush.msra.mxu0 %v900
    %910 = vmatpush.msra.mxu0 %v899
    %911 = vmatpush.msra.mxu0 %v898
    %912 = vmatpush.msra.mxu0 %v897
    %913 = vmatpush.msra.mxu0 %v896
    %914 = vmatpush.msra.mxu0 %v895
    %915 = vmatpush.msra.mxu0 %v894
    %916 = vmatpush.msra.mxu0 %v893
    %917 = vmatpush.msra.mxu0 %v892
    %918 = vmatpush.msra.mxu0 %v891
    %919 = vmatpush.msra.mxu0 %v890
    %920 = vmatpush.msra.mxu0 %v889
    %921 = vmatmul.f32.gmra.mxu0 %v442
    %v922 = vpop.f32.mrf.mxu0
    %v923 = vadd.f32 0.0, %v922
    %924 = vmatmul.f32.gmra.mxu0 %v444
    %v925 = vpop.f32.mrf.mxu0
    %v926 = vadd.f32 0.0, %v925
    %927 = vmatmul.f32.gmra.mxu0 %v447
    %v928 = vpop.f32.mrf.mxu0
    %v929 = vadd.f32 0.0, %v928
    %930 = vmatmul.f32.gmra.mxu0 %v449
    %v931 = vpop.f32.mrf.mxu0
    %v932 = vadd.f32 0.0, %v931
    %933 = vmatmul.f32.gmra.mxu0 %v452
    %v934 = vpop.f32.mrf.mxu0
    %v935 = vadd.f32 0.0, %v934
    %936 = vmatmul.f32.gmra.mxu0 %v454
    %v937 = vpop.f32.mrf.mxu0
    %v938 = vadd.f32 0.0, %v937
    %939 = vmatmul.f32.gmra.mxu0 %v457
    %v940 = vpop.f32.mrf.mxu0
    %v941 = vadd.f32 0.0, %v940
    %942 = vmatmul.f32.gmra.mxu0 %v459
    %v943 = vpop.f32.mrf.mxu0
    %v944 = vadd.f32 0.0, %v943
    %945 = vmatmul.f32.gmra.mxu0 %v462
    %v946 = vpop.f32.mrf.mxu0
    %v947 = vadd.f32 0.0, %v946
    %948 = vmatmul.f32.gmra.mxu0 %v464
    %v949 = vpop.f32.mrf.mxu0
    %v950 = vadd.f32 0.0, %v949
    %951 = vmatmul.f32.gmra.mxu0 %v467
    %v952 = vpop.f32.mrf.mxu0
    %v953 = vadd.f32 0.0, %v952
    %954 = vmatmul.f32.gmra.mxu0 %v469
    %v955 = vpop.f32.mrf.mxu0
    %v956 = vadd.f32 0.0, %v955
    %957 = vmatmul.f32.gmra.mxu0 %v472
    %v958 = vpop.f32.mrf.mxu0
    %v959 = vadd.f32 0.0, %v958
    %960 = vmatmul.f32.gmra.mxu0 %v474
    %v961 = vpop.f32.mrf.mxu0
    %v962 = vadd.f32 0.0, %v961
    %963 = vmatmul.f32.gmra.mxu0 %v477
    %v964 = vpop.f32.mrf.mxu0
    %v965 = vadd.f32 0.0, %v964
    %966 = vmatmul.f32.gmra.mxu0 %v479
    %v967 = vpop.f32.mrf.mxu0
    %v968 = vadd.f32 0.0, %v967
    %969 = vmatmul.f32.gmra.mxu0 %v482
    %v970 = vpop.f32.mrf.mxu0
    %v971 = vadd.f32 0.0, %v970
    %972 = vmatmul.f32.gmra.mxu0 %v484
    %v973 = vpop.f32.mrf.mxu0
    %v974 = vadd.f32 0.0, %v973
    %975 = vmatmul.f32.gmra.mxu0 %v487
    %v976 = vpop.f32.mrf.mxu0
    %v977 = vadd.f32 0.0, %v976
    %978 = vmatmul.f32.gmra.mxu0 %v489
    %v979 = vpop.f32.mrf.mxu0
    %v980 = vadd.f32 0.0, %v979
    %981 = vmatmul.f32.gmra.mxu0 %v492
    %v982 = vpop.f32.mrf.mxu0
    %v983 = vadd.f32 0.0, %v982
    %984 = vmatmul.f32.gmra.mxu0 %v494
    %v985 = vpop.f32.mrf.mxu0
    %v986 = vadd.f32 0.0, %v985
    %987 = vmatmul.f32.gmra.mxu0 %v497
    %v988 = vpop.f32.mrf.mxu0
    %v989 = vadd.f32 0.0, %v988
    %990 = vmatmul.f32.gmra.mxu0 %v499
    %v991 = vpop.f32.mrf.mxu0
    %v992 = vadd.f32 0.0, %v991
    %993 = vmatmul.f32.gmra.mxu0 %v502
    %v994 = vpop.f32.mrf.mxu0
    %v995 = vadd.f32 0.0, %v994
    %996 = vmatmul.f32.gmra.mxu0 %v504
    %v997 = vpop.f32.mrf.mxu0
    %v998 = vadd.f32 0.0, %v997
    %999 = vmatmul.f32.gmra.mxu0 %v507
    %v1000 = vpop.f32.mrf.mxu0
    %v1001 = vadd.f32 0.0, %v1000
    %1002 = vmatmul.f32.gmra.mxu0 %v509
    %v1003 = vpop.f32.mrf.mxu0
    %v1004 = vadd.f32 0.0, %v1003
    %1005 = vmatmul.f32.gmra.mxu0 %v512
    %v1006 = vpop.f32.mrf.mxu0
    %v1007 = vadd.f32 0.0, %v1006
    %1008 = vmatmul.f32.gmra.mxu0 %v514
    %v1009 = vpop.f32.mrf.mxu0
    %v1010 = vadd.f32 0.0, %v1009
    %1011 = vmatmul.f32.gmra.mxu0 %v517
    %v1012 = vpop.f32.mrf.mxu0
    %v1013 = vadd.f32 0.0, %v1012
    %1014 = vmatmul.f32.gmra.mxu0 %v519
    %v1015 = vpop.f32.mrf.mxu0
    %v1016 = vadd.f32 0.0, %v1015
    %1017 = vmatmul.f32.gmra.mxu0 %v522
    %v1018 = vpop.f32.mrf.mxu0
    %v1019 = vadd.f32 0.0, %v1018
    %1020 = vmatmul.f32.gmra.mxu0 %v524
    %v1021 = vpop.f32.mrf.mxu0
    %v1022 = vadd.f32 0.0, %v1021
    %1023 = vmatmul.f32.gmra.mxu0 %v527
    %v1024 = vpop.f32.mrf.mxu0
    %v1025 = vadd.f32 0.0, %v1024
    %1026 = vmatmul.f32.gmra.mxu0 %v529
    %v1027 = vpop.f32.mrf.mxu0
    %v1028 = vadd.f32 0.0, %v1027
    %1029 = vmatmul.f32.gmra.mxu0 %v532
    %v1030 = vpop.f32.mrf.mxu0
    %v1031 = vadd.f32 0.0, %v1030
    %1032 = vmatmul.f32.gmra.mxu0 %v534
    %v1033 = vpop.f32.mrf.mxu0
    %v1034 = vadd.f32 0.0, %v1033
    %1035 = vmatmul.f32.gmra.mxu0 %v537
    %v1036 = vpop.f32.mrf.mxu0
    %v1037 = vadd.f32 0.0, %v1036
    %1038 = vmatmul.f32.gmra.mxu0 %v539
    %v1039 = vpop.f32.mrf.mxu0
    %v1040 = vadd.f32 0.0, %v1039
    %1041 = vmatmul.f32.gmra.mxu0 %v542
    %v1042 = vpop.f32.mrf.mxu0
    %v1043 = vadd.f32 0.0, %v1042
    %1044 = vmatmul.f32.gmra.mxu0 %v544
    %v1045 = vpop.f32.mrf.mxu0
    %v1046 = vadd.f32 0.0, %v1045
    %1047 = vmatmul.f32.gmra.mxu0 %v547
    %v1048 = vpop.f32.mrf.mxu0
    %v1049 = vadd.f32 0.0, %v1048
    %1050 = vmatmul.f32.gmra.mxu0 %v549
    %v1051 = vpop.f32.mrf.mxu0
    %v1052 = vadd.f32 0.0, %v1051
    %1053 = vmatmul.f32.gmra.mxu0 %v552
    %v1054 = vpop.f32.mrf.mxu0
    %v1055 = vadd.f32 0.0, %v1054
    %1056 = vmatmul.f32.gmra.mxu0 %v554
    %v1057 = vpop.f32.mrf.mxu0
    %v1058 = vadd.f32 0.0, %v1057
    %1059 = vmatmul.f32.gmra.mxu0 %v557
    %v1060 = vpop.f32.mrf.mxu0
    %v1061 = vadd.f32 0.0, %v1060
    %1062 = vmatmul.f32.gmra.mxu0 %v559
    %v1063 = vpop.f32.mrf.mxu0
    %v1064 = vadd.f32 0.0, %v1063
    %1065 = vmatmul.f32.gmra.mxu0 %v562
    %v1066 = vpop.f32.mrf.mxu0
    %v1067 = vadd.f32 0.0, %v1066
    %1068 = vmatmul.f32.gmra.mxu0 %v564
    %v1069 = vpop.f32.mrf.mxu0
    %v1070 = vadd.f32 0.0, %v1069
    %1071 = vmatmul.f32.gmra.mxu0 %v567
    %v1072 = vpop.f32.mrf.mxu0
    %v1073 = vadd.f32 0.0, %v1072
    %1074 = vmatmul.f32.gmra.mxu0 %v569
    %v1075 = vpop.f32.mrf.mxu0
    %v1076 = vadd.f32 0.0, %v1075
    %1077 = vmatmul.f32.gmra.mxu0 %v572
    %v1078 = vpop.f32.mrf.mxu0
    %v1079 = vadd.f32 0.0, %v1078
    %1080 = vmatmul.f32.gmra.mxu0 %v574
    %v1081 = vpop.f32.mrf.mxu0
    %v1082 = vadd.f32 0.0, %v1081
    %1083 = vmatmul.f32.gmra.mxu0 %v577
    %v1084 = vpop.f32.mrf.mxu0
    %v1085 = vadd.f32 0.0, %v1084
    %1086 = vmatmul.f32.gmra.mxu0 %v579
    %v1087 = vpop.f32.mrf.mxu0
    %v1088 = vadd.f32 0.0, %v1087
    %1089 = vmatmul.f32.gmra.mxu0 %v582
    %v1090 = vpop.f32.mrf.mxu0
    %v1091 = vadd.f32 0.0, %v1090
    %1092 = vmatmul.f32.gmra.mxu0 %v584
    %v1093 = vpop.f32.mrf.mxu0
    %v1094 = vadd.f32 0.0, %v1093
    %1095 = vmatmul.f32.gmra.mxu0 %v587
    %v1096 = vpop.f32.mrf.mxu0
    %v1097 = vadd.f32 0.0, %v1096
    %1098 = vmatmul.f32.gmra.mxu0 %v589
    %v1099 = vpop.f32.mrf.mxu0
    %v1100 = vadd.f32 0.0, %v1099
    %1101 = vmatmul.f32.gmra.mxu0 %v592
    %v1102 = vpop.f32.mrf.mxu0
    %v1103 = vadd.f32 0.0, %v1102
    %1104 = vmatmul.f32.gmra.mxu0 %v594
    %v1105 = vpop.f32.mrf.mxu0
    %v1106 = vadd.f32 0.0, %v1105
    %1107 = vmatmul.f32.gmra.mxu0 %v597
    %v1108 = vpop.f32.mrf.mxu0
    %v1109 = vadd.f32 0.0, %v1108
    %1110 = vmatmul.f32.gmra.mxu0 %v599
    %v1111 = vpop.f32.mrf.mxu0
    %v1112 = vadd.f32 0.0, %v1111
    %1113 = vmatmul.f32.gmra.mxu0 %v602
    %v1114 = vpop.f32.mrf.mxu0
    %v1115 = vadd.f32 0.0, %v1114
    %1116 = vmatmul.f32.gmra.mxu0 %v604
    %v1117 = vpop.f32.mrf.mxu0
    %v1118 = vadd.f32 0.0, %v1117
    %1119 = vmatmul.f32.gmra.mxu0 %v607
    %v1120 = vpop.f32.mrf.mxu0
    %v1121 = vadd.f32 0.0, %v1120
    %1122 = vmatmul.f32.gmra.mxu0 %v609
    %v1123 = vpop.f32.mrf.mxu0
    %v1124 = vadd.f32 0.0, %v1123
    %1125 = vmatmul.f32.gmra.mxu0 %v612
    %v1126 = vpop.f32.mrf.mxu0
    %v1127 = vadd.f32 0.0, %v1126
    %1128 = vmatmul.f32.gmra.mxu0 %v614
    %v1129 = vpop.f32.mrf.mxu0
    %v1130 = vadd.f32 0.0, %v1129
    %1131 = vmatmul.f32.gmra.mxu0 %v617
    %v1132 = vpop.f32.mrf.mxu0
    %v1133 = vadd.f32 0.0, %v1132
    %1134 = vmatmul.f32.gmra.mxu0 %v619
    %v1135 = vpop.f32.mrf.mxu0
    %v1136 = vadd.f32 0.0, %v1135
    %1137 = vmatmul.f32.gmra.mxu0 %v622
    %v1138 = vpop.f32.mrf.mxu0
    %v1139 = vadd.f32 0.0, %v1138
    %1140 = vmatmul.f32.gmra.mxu0 %v624
    %v1141 = vpop.f32.mrf.mxu0
    %v1142 = vadd.f32 0.0, %v1141
    %1143 = vmatmul.f32.gmra.mxu0 %v627
    %v1144 = vpop.f32.mrf.mxu0
    %v1145 = vadd.f32 0.0, %v1144
    %1146 = vmatmul.f32.gmra.mxu0 %v629
    %v1147 = vpop.f32.mrf.mxu0
    %v1148 = vadd.f32 0.0, %v1147
    %1149 = vmatmul.f32.gmra.mxu0 %v632
    %v1150 = vpop.f32.mrf.mxu0
    %v1151 = vadd.f32 0.0, %v1150
    %1152 = vmatmul.f32.gmra.mxu0 %v634
    %v1153 = vpop.f32.mrf.mxu0
    %v1154 = vadd.f32 0.0, %v1153
    %1155 = vmatmul.f32.gmra.mxu0 %v637
    %v1156 = vpop.f32.mrf.mxu0
    %v1157 = vadd.f32 0.0, %v1156
    %1158 = vmatmul.f32.gmra.mxu0 %v639
    %v1159 = vpop.f32.mrf.mxu0
    %v1160 = vadd.f32 0.0, %v1159
    %1161 = vmatmul.f32.gmra.mxu0 %v642
    %v1162 = vpop.f32.mrf.mxu0
    %v1163 = vadd.f32 0.0, %v1162
    %1164 = vmatmul.f32.gmra.mxu0 %v644
    %v1165 = vpop.f32.mrf.mxu0
    %v1166 = vadd.f32 0.0, %v1165
    %1167 = vmatmul.f32.gmra.mxu0 %v647
    %v1168 = vpop.f32.mrf.mxu0
    %v1169 = vadd.f32 0.0, %v1168
    %1170 = vmatmul.f32.gmra.mxu0 %v649
    %v1171 = vpop.f32.mrf.mxu0
    %v1172 = vadd.f32 0.0, %v1171
    %1173 = vmatmul.f32.gmra.mxu0 %v652
    %v1174 = vpop.f32.mrf.mxu0
    %v1175 = vadd.f32 0.0, %v1174
    %1176 = vmatmul.f32.gmra.mxu0 %v654
    %v1177 = vpop.f32.mrf.mxu0
    %v1178 = vadd.f32 0.0, %v1177
    %1179 = vmatmul.f32.gmra.mxu0 %v657
    %v1180 = vpop.f32.mrf.mxu0
    %v1181 = vadd.f32 0.0, %v1180
    %1182 = vmatmul.f32.gmra.mxu0 %v659
    %v1183 = vpop.f32.mrf.mxu0
    %v1184 = vadd.f32 0.0, %v1183
    %1185 = vmatmul.f32.gmra.mxu0 %v662
    %v1186 = vpop.f32.mrf.mxu0
    %v1187 = vadd.f32 0.0, %v1186
    %1188 = vmatmul.f32.gmra.mxu0 %v664
    %v1189 = vpop.f32.mrf.mxu0
    %v1190 = vadd.f32 0.0, %v1189
    %1191 = vmatmul.f32.gmra.mxu0 %v667
    %v1192 = vpop.f32.mrf.mxu0
    %v1193 = vadd.f32 0.0, %v1192
    %1194 = vmatmul.f32.gmra.mxu0 %v669
    %v1195 = vpop.f32.mrf.mxu0
    %v1196 = vadd.f32 0.0, %v1195
    %1197 = vmatmul.f32.gmra.mxu0 %v672
    %v1198 = vpop.f32.mrf.mxu0
    %v1199 = vadd.f32 0.0, %v1198
    %1200 = vmatmul.f32.gmra.mxu0 %v674
    %v1201 = vpop.f32.mrf.mxu0
    %v1202 = vadd.f32 0.0, %v1201
    %1203 = vmatmul.f32.gmra.mxu0 %v677
    %v1204 = vpop.f32.mrf.mxu0
    %v1205 = vadd.f32 0.0, %v1204
    %1206 = vmatmul.f32.gmra.mxu0 %v679
    %v1207 = vpop.f32.mrf.mxu0
    %v1208 = vadd.f32 0.0, %v1207
    %1209 = vmatmul.f32.gmra.mxu0 %v682
    %v1210 = vpop.f32.mrf.mxu0
    %v1211 = vadd.f32 0.0, %v1210
    %1212 = vmatmul.f32.gmra.mxu0 %v684
    %v1213 = vpop.f32.mrf.mxu0
    %v1214 = vadd.f32 0.0, %v1213
    %1215 = vmatmul.f32.gmra.mxu0 %v687
    %v1216 = vpop.f32.mrf.mxu0
    %v1217 = vadd.f32 0.0, %v1216
    %1218 = vmatmul.f32.gmra.mxu0 %v689
    %v1219 = vpop.f32.mrf.mxu0
    %v1220 = vadd.f32 0.0, %v1219
    %1221 = vmatmul.f32.gmra.mxu0 %v692
    %v1222 = vpop.f32.mrf.mxu0
    %v1223 = vadd.f32 0.0, %v1222
    %1224 = vmatmul.f32.gmra.mxu0 %v694
    %v1225 = vpop.f32.mrf.mxu0
    %v1226 = vadd.f32 0.0, %v1225
    %1227 = vmatmul.f32.gmra.mxu0 %v697
    %v1228 = vpop.f32.mrf.mxu0
    %v1229 = vadd.f32 0.0, %v1228
    %1230 = vmatmul.f32.gmra.mxu0 %v699
    %v1231 = vpop.f32.mrf.mxu0
    %v1232 = vadd.f32 0.0, %v1231
    %1233 = vmatmul.f32.gmra.mxu0 %v702
    %v1234 = vpop.f32.mrf.mxu0
    %v1235 = vadd.f32 0.0, %v1234
    %1236 = vmatmul.f32.gmra.mxu0 %v704
    %v1237 = vpop.f32.mrf.mxu0
    %v1238 = vadd.f32 0.0, %v1237
    %1239 = vmatmul.f32.gmra.mxu0 %v707
    %v1240 = vpop.f32.mrf.mxu0
    %v1241 = vadd.f32 0.0, %v1240
    %1242 = vmatmul.f32.gmra.mxu0 %v709
    %v1243 = vpop.f32.mrf.mxu0
    %v1244 = vadd.f32 0.0, %v1243
    %1245 = vmatmul.f32.gmra.mxu0 %v712
    %v1246 = vpop.f32.mrf.mxu0
    %v1247 = vadd.f32 0.0, %v1246
    %1248 = vmatmul.f32.gmra.mxu0 %v714
    %v1249 = vpop.f32.mrf.mxu0
    %v1250 = vadd.f32 0.0, %v1249
    %1251 = vmatmul.f32.gmra.mxu0 %v717
    %v1252 = vpop.f32.mrf.mxu0
    %v1253 = vadd.f32 0.0, %v1252
    %1254 = vmatmul.f32.gmra.mxu0 %v719
    %v1255 = vpop.f32.mrf.mxu0
    %v1256 = vadd.f32 0.0, %v1255
    %1257 = vmatmul.f32.gmra.mxu0 %v722
    %v1258 = vpop.f32.mrf.mxu0
    %v1259 = vadd.f32 0.0, %v1258
    %1260 = vmatmul.f32.gmra.mxu0 %v724
    %v1261 = vpop.f32.mrf.mxu0
    %v1262 = vadd.f32 0.0, %v1261
    %1263 = vmatmul.f32.gmra.mxu0 %v727
    %v1264 = vpop.f32.mrf.mxu0
    %v1265 = vadd.f32 0.0, %v1264
    %1266 = vmatmul.f32.gmra.mxu0 %v729
    %v1267 = vpop.f32.mrf.mxu0
    %v1268 = vadd.f32 0.0, %v1267
    %1269 = vmatmul.f32.gmra.mxu0 %v732
    %v1270 = vpop.f32.mrf.mxu0
    %v1271 = vadd.f32 0.0, %v1270
    %1272 = vmatmul.f32.gmra.mxu0 %v734
    %v1273 = vpop.f32.mrf.mxu0
    %v1274 = vadd.f32 0.0, %v1273
    %1275 = vmatmul.f32.gmra.mxu0 %v737
    %v1276 = vpop.f32.mrf.mxu0
    %v1277 = vadd.f32 0.0, %v1276
    %1278 = vmatmul.f32.gmra.mxu0 %v739
    %v1279 = vpop.f32.mrf.mxu0
    %v1280 = vadd.f32 0.0, %v1279
    %1281 = vmatmul.f32.gmra.mxu0 %v742
    %v1282 = vpop.f32.mrf.mxu0
    %v1283 = vadd.f32 0.0, %v1282
    %1284 = vmatmul.f32.gmra.mxu0 %v744
    %v1285 = vpop.f32.mrf.mxu0
    %v1286 = vadd.f32 0.0, %v1285
    %1287 = vmatmul.f32.gmra.mxu0 %v747
    %v1288 = vpop.f32.mrf.mxu0
    %v1289 = vadd.f32 0.0, %v1288
    %1290 = vmatmul.f32.gmra.mxu0 %v749
    %v1291 = vpop.f32.mrf.mxu0
    %v1292 = vadd.f32 0.0, %v1291
    %1293 = vmatmul.f32.gmra.mxu0 %v752
    %v1294 = vpop.f32.mrf.mxu0
    %v1295 = vadd.f32 0.0, %v1294
    %1296 = vmatmul.f32.gmra.mxu0 %v754
    %v1297 = vpop.f32.mrf.mxu0
    %v1298 = vadd.f32 0.0, %v1297
    %1299 = vmatmul.f32.gmra.mxu0 %v757
    %v1300 = vpop.f32.mrf.mxu0
    %v1301 = vadd.f32 0.0, %v1300
    %1302 = vmatmul.f32.gmra.mxu0 %v759
    %v1303 = vpop.f32.mrf.mxu0
    %v1304 = vadd.f32 0.0, %v1303
    %1305 = vdwg.mxu0
    %1306 = vmatpush.msra.mxu0 %v246
    %1307 = vmatpush.msra.mxu0 %v245
    %1308 = vmatpush.msra.mxu0 %v244
    %1309 = vmatpush.msra.mxu0 %v243
    %1310 = vmatpush.msra.mxu0 %v242
    %1311 = vmatpush.msra.mxu0 %v241
    %1312 = vmatpush.msra.mxu0 %v240
    %1313 = vmatpush.msra.mxu0 %v239
    %1314 = vmatpush.msra.mxu0 %v238
    %1315 = vmatpush.msra.mxu0 %v237
    %1316 = vmatpush.msra.mxu0 %v236
    %1317 = vmatpush.msra.mxu0 %v235
    %1318 = vmatpush.msra.mxu0 %v234
    %1319 = vmatpush.msra.mxu0 %v233
    %1320 = vmatpush.msra.mxu0 %v232
    %1321 = vmatpush.msra.mxu0 %v231
    %1322 = vmatmul.f32.gmra.mxu0 %v15
    %v1323 = vpop.f32.mrf.mxu0
    %v1324 = vadd.f32 %v923, %v1323
    %1325 = vmatmul.f32.gmra.mxu0 %v16
    %v1326 = vpop.f32.mrf.mxu0
    %v1327 = vadd.f32 %v926, %v1326
    %1328 = vmatmul.f32.gmra.mxu0 %v18
    %v1329 = vpop.f32.mrf.mxu0
    %v1330 = vadd.f32 %v929, %v1329
    %1331 = vmatmul.f32.gmra.mxu0 %v19
    %v1332 = vpop.f32.mrf.mxu0
    %v1333 = vadd.f32 %v932, %v1332
    %1334 = vmatmul.f32.gmra.mxu0 %v21
    %v1335 = vpop.f32.mrf.mxu0
    %v1336 = vadd.f32 %v935, %v1335
    %1337 = vmatmul.f32.gmra.mxu0 %v22
    %v1338 = vpop.f32.mrf.mxu0
    %v1339 = vadd.f32 %v938, %v1338
    %1340 = vmatmul.f32.gmra.mxu0 %v24
    %v1341 = vpop.f32.mrf.mxu0
    %v1342 = vadd.f32 %v941, %v1341
    %1343 = vmatmul.f32.gmra.mxu0 %v25
    %v1344 = vpop.f32.mrf.mxu0
    %v1345 = vadd.f32 %v944, %v1344
    %1346 = vmatmul.f32.gmra.mxu0 %v27
    %v1347 = vpop.f32.mrf.mxu0
    %v1348 = vadd.f32 %v947, %v1347
    %1349 = vmatmul.f32.gmra.mxu0 %v28
    %v1350 = vpop.f32.mrf.mxu0
    %v1351 = vadd.f32 %v950, %v1350
    %1352 = vmatmul.f32.gmra.mxu0 %v30
    %v1353 = vpop.f32.mrf.mxu0
    %v1354 = vadd.f32 %v953, %v1353
    %1355 = vmatmul.f32.gmra.mxu0 %v31
    %v1356 = vpop.f32.mrf.mxu0
    %v1357 = vadd.f32 %v956, %v1356
    %1358 = vmatmul.f32.gmra.mxu0 %v33
    %v1359 = vpop.f32.mrf.mxu0
    %v1360 = vadd.f32 %v959, %v1359
    %1361 = vmatmul.f32.gmra.mxu0 %v34
    %v1362 = vpop.f32.mrf.mxu0
    %v1363 = vadd.f32 %v962, %v1362
    %1364 = vmatmul.f32.gmra.mxu0 %v36
    %v1365 = vpop.f32.mrf.mxu0
    %v1366 = vadd.f32 %v965, %v1365
    %1367 = vmatmul.f32.gmra.mxu0 %v37
    %v1368 = vpop.f32.mrf.mxu0
    %v1369 = vadd.f32 %v968, %v1368
    %1370 = vmatmul.f32.gmra.mxu0 %v39
    %v1371 = vpop.f32.mrf.mxu0
    %v1372 = vadd.f32 %v971, %v1371
    %1373 = vmatmul.f32.gmra.mxu0 %v40
    %v1374 = vpop.f32.mrf.mxu0
    %v1375 = vadd.f32 %v974, %v1374
    %1376 = vmatmul.f32.gmra.mxu0 %v42
    %v1377 = vpop.f32.mrf.mxu0
    %v1378 = vadd.f32 %v977, %v1377
    %1379 = vmatmul.f32.gmra.mxu0 %v43
    %v1380 = vpop.f32.mrf.mxu0
    %v1381 = vadd.f32 %v980, %v1380
    %1382 = vmatmul.f32.gmra.mxu0 %v45
    %v1383 = vpop.f32.mrf.mxu0
    %v1384 = vadd.f32 %v983, %v1383
    %1385 = vmatmul.f32.gmra.mxu0 %v46
    %v1386 = vpop.f32.mrf.mxu0
    %v1387 = vadd.f32 %v986, %v1386
    %1388 = vmatmul.f32.gmra.mxu0 %v48
    %v1389 = vpop.f32.mrf.mxu0
    %v1390 = vadd.f32 %v989, %v1389
    %1391 = vmatmul.f32.gmra.mxu0 %v49
    %v1392 = vpop.f32.mrf.mxu0
    %v1393 = vadd.f32 %v992, %v1392
    %1394 = vmatmul.f32.gmra.mxu0 %v51
    %v1395 = vpop.f32.mrf.mxu0
    %v1396 = vadd.f32 %v995, %v1395
    %1397 = vmatmul.f32.gmra.mxu0 %v52
    %v1398 = vpop.f32.mrf.mxu0
    %v1399 = vadd.f32 %v998, %v1398
    %1400 = vmatmul.f32.gmra.mxu0 %v54
    %v1401 = vpop.f32.mrf.mxu0
    %v1402 = vadd.f32 %v1001, %v1401
    %1403 = vmatmul.f32.gmra.mxu0 %v55
    %v1404 = vpop.f32.mrf.mxu0
    %v1405 = vadd.f32 %v1004, %v1404
    %1406 = vmatmul.f32.gmra.mxu0 %v57
    %v1407 = vpop.f32.mrf.mxu0
    %v1408 = vadd.f32 %v1007, %v1407
    %1409 = vmatmul.f32.gmra.mxu0 %v58
    %v1410 = vpop.f32.mrf.mxu0
    %v1411 = vadd.f32 %v1010, %v1410
    %1412 = vmatmul.f32.gmra.mxu0 %v60
    %v1413 = vpop.f32.mrf.mxu0
    %v1414 = vadd.f32 %v1013, %v1413
    %1415 = vmatmul.f32.gmra.mxu0 %v61
    %v1416 = vpop.f32.mrf.mxu0
    %v1417 = vadd.f32 %v1016, %v1416
    %1418 = vmatmul.f32.gmra.mxu0 %v69
    %v1419 = vpop.f32.mrf.mxu0
    %v1420 = vadd.f32 %v1019, %v1419
    %1421 = vmatmul.f32.gmra.mxu0 %v70
    %v1422 = vpop.f32.mrf.mxu0
    %v1423 = vadd.f32 %v1022, %v1422
    %1424 = vmatmul.f32.gmra.mxu0 %v72
    %v1425 = vpop.f32.mrf.mxu0
    %v1426 = vadd.f32 %v1025, %v1425
    %1427 = vmatmul.f32.gmra.mxu0 %v73
    %v1428 = vpop.f32.mrf.mxu0
    %v1429 = vadd.f32 %v1028, %v1428
    %1430 = vmatmul.f32.gmra.mxu0 %v75
    %v1431 = vpop.f32.mrf.mxu0
    %v1432 = vadd.f32 %v1031, %v1431
    %1433 = vmatmul.f32.gmra.mxu0 %v76
    %v1434 = vpop.f32.mrf.mxu0
    %v1435 = vadd.f32 %v1034, %v1434
    %1436 = vmatmul.f32.gmra.mxu0 %v78
    %v1437 = vpop.f32.mrf.mxu0
    %v1438 = vadd.f32 %v1037, %v1437
    %1439 = vmatmul.f32.gmra.mxu0 %v79
    %v1440 = vpop.f32.mrf.mxu0
    %v1441 = vadd.f32 %v1040, %v1440
    %1442 = vmatmul.f32.gmra.mxu0 %v81
    %v1443 = vpop.f32.mrf.mxu0
    %v1444 = vadd.f32 %v1043, %v1443
    %1445 = vmatmul.f32.gmra.mxu0 %v82
    %v1446 = vpop.f32.mrf.mxu0
    %v1447 = vadd.f32 %v1046, %v1446
    %1448 = vmatmul.f32.gmra.mxu0 %v84
    %v1449 = vpop.f32.mrf.mxu0
    %v1450 = vadd.f32 %v1049, %v1449
    %1451 = vmatmul.f32.gmra.mxu0 %v85
    %v1452 = vpop.f32.mrf.mxu0
    %v1453 = vadd.f32 %v1052, %v1452
    %1454 = vmatmul.f32.gmra.mxu0 %v87
    %v1455 = vpop.f32.mrf.mxu0
    %v1456 = vadd.f32 %v1055, %v1455
    %1457 = vmatmul.f32.gmra.mxu0 %v88
    %v1458 = vpop.f32.mrf.mxu0
    %v1459 = vadd.f32 %v1058, %v1458
    %1460 = vmatmul.f32.gmra.mxu0 %v90
    %v1461 = vpop.f32.mrf.mxu0
    %v1462 = vadd.f32 %v1061, %v1461
    %1463 = vmatmul.f32.gmra.mxu0 %v91
    %v1464 = vpop.f32.mrf.mxu0
    %v1465 = vadd.f32 %v1064, %v1464
    %1466 = vmatmul.f32.gmra.mxu0 %v93
    %v1467 = vpop.f32.mrf.mxu0
    %v1468 = vadd.f32 %v1067, %v1467
    %1469 = vmatmul.f32.gmra.mxu0 %v94
    %v1470 = vpop.f32.mrf.mxu0
    %v1471 = vadd.f32 %v1070, %v1470
    %1472 = vmatmul.f32.gmra.mxu0 %v96
    %v1473 = vpop.f32.mrf.mxu0
    %v1474 = vadd.f32 %v1073, %v1473
    %1475 = vmatmul.f32.gmra.mxu0 %v97
    %v1476 = vpop.f32.mrf.mxu0
    %v1477 = vadd.f32 %v1076, %v1476
    %1478 = vmatmul.f32.gmra.mxu0 %v99
    %v1479 = vpop.f32.mrf.mxu0
    %v1480 = vadd.f32 %v1079, %v1479
    %1481 = vmatmul.f32.gmra.mxu0 %v100
    %v1482 = vpop.f32.mrf.mxu0
    %v1483 = vadd.f32 %v1082, %v1482
    %1484 = vmatmul.f32.gmra.mxu0 %v102
    %v1485 = vpop.f32.mrf.mxu0
    %v1486 = vadd.f32 %v1085, %v1485
    %1487 = vmatmul.f32.gmra.mxu0 %v103
    %v1488 = vpop.f32.mrf.mxu0
    %v1489 = vadd.f32 %v1088, %v1488
    %1490 = vmatmul.f32.gmra.mxu0 %v105
    %v1491 = vpop.f32.mrf.mxu0
    %v1492 = vadd.f32 %v1091, %v1491
    %1493 = vmatmul.f32.gmra.mxu0 %v106
    %v1494 = vpop.f32.mrf.mxu0
    %v1495 = vadd.f32 %v1094, %v1494
    %1496 = vmatmul.f32.gmra.mxu0 %v108
    %v1497 = vpop.f32.mrf.mxu0
    %v1498 = vadd.f32 %v1097, %v1497
    %1499 = vmatmul.f32.gmra.mxu0 %v109
    %v1500 = vpop.f32.mrf.mxu0
    %v1501 = vadd.f32 %v1100, %v1500
    %1502 = vmatmul.f32.gmra.mxu0 %v111
    %v1503 = vpop.f32.mrf.mxu0
    %v1504 = vadd.f32 %v1103, %v1503
    %1505 = vmatmul.f32.gmra.mxu0 %v112
    %v1506 = vpop.f32.mrf.mxu0
    %v1507 = vadd.f32 %v1106, %v1506
    %1508 = vmatmul.f32.gmra.mxu0 %v114
    %v1509 = vpop.f32.mrf.mxu0
    %v1510 = vadd.f32 %v1109, %v1509
    %1511 = vmatmul.f32.gmra.mxu0 %v115
    %v1512 = vpop.f32.mrf.mxu0
    %v1513 = vadd.f32 %v1112, %v1512
    %1514 = vmatmul.f32.gmra.mxu0 %v123
    %v1515 = vpop.f32.mrf.mxu0
    %v1516 = vadd.f32 %v1115, %v1515
    %1517 = vmatmul.f32.gmra.mxu0 %v124
    %v1518 = vpop.f32.mrf.mxu0
    %v1519 = vadd.f32 %v1118, %v1518
    %1520 = vmatmul.f32.gmra.mxu0 %v126
    %v1521 = vpop.f32.mrf.mxu0
    %v1522 = vadd.f32 %v1121, %v1521
    %1523 = vmatmul.f32.gmra.mxu0 %v127
    %v1524 = vpop.f32.mrf.mxu0
    %v1525 = vadd.f32 %v1124, %v1524
    %1526 = vmatmul.f32.gmra.mxu0 %v129
    %v1527 = vpop.f32.mrf.mxu0
    %v1528 = vadd.f32 %v1127, %v1527
    %1529 = vmatmul.f32.gmra.mxu0 %v130
    %v1530 = vpop.f32.mrf.mxu0
    %v1531 = vadd.f32 %v1130, %v1530
    %1532 = vmatmul.f32.gmra.mxu0 %v132
    %v1533 = vpop.f32.mrf.mxu0
    %v1534 = vadd.f32 %v1133, %v1533
    %1535 = vmatmul.f32.gmra.mxu0 %v133
    %v1536 = vpop.f32.mrf.mxu0
    %v1537 = vadd.f32 %v1136, %v1536
    %1538 = vmatmul.f32.gmra.mxu0 %v135
    %v1539 = vpop.f32.mrf.mxu0
    %v1540 = vadd.f32 %v1139, %v1539
    %1541 = vmatmul.f32.gmra.mxu0 %v136
    %v1542 = vpop.f32.mrf.mxu0
    %v1543 = vadd.f32 %v1142, %v1542
    %1544 = vmatmul.f32.gmra.mxu0 %v138
    %v1545 = vpop.f32.mrf.mxu0
    %v1546 = vadd.f32 %v1145, %v1545
    %1547 = vmatmul.f32.gmra.mxu0 %v139
    %v1548 = vpop.f32.mrf.mxu0
    %v1549 = vadd.f32 %v1148, %v1548
    %1550 = vmatmul.f32.gmra.mxu0 %v141
    %v1551 = vpop.f32.mrf.mxu0
    %v1552 = vadd.f32 %v1151, %v1551
    %1553 = vmatmul.f32.gmra.mxu0 %v142
    %v1554 = vpop.f32.mrf.mxu0
    %v1555 = vadd.f32 %v1154, %v1554
    %1556 = vmatmul.f32.gmra.mxu0 %v144
    %v1557 = vpop.f32.mrf.mxu0
    %v1558 = vadd.f32 %v1157, %v1557
    %1559 = vmatmul.f32.gmra.mxu0 %v145
    %v1560 = vpop.f32.mrf.mxu0
    %v1561 = vadd.f32 %v1160, %v1560
    %1562 = vmatmul.f32.gmra.mxu0 %v147
    %v1563 = vpop.f32.mrf.mxu0
    %v1564 = vadd.f32 %v1163, %v1563
    %1565 = vmatmul.f32.gmra.mxu0 %v148
    %v1566 = vpop.f32.mrf.mxu0
    %v1567 = vadd.f32 %v1166, %v1566
    %1568 = vmatmul.f32.gmra.mxu0 %v150
    %v1569 = vpop.f32.mrf.mxu0
    %v1570 = vadd.f32 %v1169, %v1569
    %1571 = vmatmul.f32.gmra.mxu0 %v151
    %v1572 = vpop.f32.mrf.mxu0
    %v1573 = vadd.f32 %v1172, %v1572
    %1574 = vmatmul.f32.gmra.mxu0 %v153
    %v1575 = vpop.f32.mrf.mxu0
    %v1576 = vadd.f32 %v1175, %v1575
    %1577 = vmatmul.f32.gmra.mxu0 %v154
    %v1578 = vpop.f32.mrf.mxu0
    %v1579 = vadd.f32 %v1178, %v1578
    %1580 = vmatmul.f32.gmra.mxu0 %v156
    %v1581 = vpop.f32.mrf.mxu0
    %v1582 = vadd.f32 %v1181, %v1581
    %1583 = vmatmul.f32.gmra.mxu0 %v157
    %v1584 = vpop.f32.mrf.mxu0
    %v1585 = vadd.f32 %v1184, %v1584
    %1586 = vmatmul.f32.gmra.mxu0 %v159
    %v1587 = vpop.f32.mrf.mxu0
    %v1588 = vadd.f32 %v1187, %v1587
    %1589 = vmatmul.f32.gmra.mxu0 %v160
    %v1590 = vpop.f32.mrf.mxu0
    %v1591 = vadd.f32 %v1190, %v1590
    %1592 = vmatmul.f32.gmra.mxu0 %v162
    %v1593 = vpop.f32.mrf.mxu0
    %v1594 = vadd.f32 %v1193, %v1593
    %1595 = vmatmul.f32.gmra.mxu0 %v163
    %v1596 = vpop.f32.mrf.mxu0
    %v1597 = vadd.f32 %v1196, %v1596
    %1598 = vmatmul.f32.gmra.mxu0 %v165
    %v1599 = vpop.f32.mrf.mxu0
    %v1600 = vadd.f32 %v1199, %v1599
    %1601 = vmatmul.f32.gmra.mxu0 %v166
    %v1602 = vpop.f32.mrf.mxu0
    %v1603 = vadd.f32 %v1202, %v1602
    %1604 = vmatmul.f32.gmra.mxu0 %v168
    %v1605 = vpop.f32.mrf.mxu0
    %v1606 = vadd.f32 %v1205, %v1605
    %1607 = vmatmul.f32.gmra.mxu0 %v169
    %v1608 = vpop.f32.mrf.mxu0
    %v1609 = vadd.f32 %v1208, %v1608
    %1610 = vmatmul.f32.gmra.mxu0 %v177
    %v1611 = vpop.f32.mrf.mxu0
    %v1612 = vadd.f32 %v1211, %v1611
    %1613 = vmatmul.f32.gmra.mxu0 %v178
    %v1614 = vpop.f32.mrf.mxu0
    %v1615 = vadd.f32 %v1214, %v1614
    %1616 = vmatmul.f32.gmra.mxu0 %v180
    %v1617 = vpop.f32.mrf.mxu0
    %v1618 = vadd.f32 %v1217, %v1617
    %1619 = vmatmul.f32.gmra.mxu0 %v181
    %v1620 = vpop.f32.mrf.mxu0
    %v1621 = vadd.f32 %v1220, %v1620
    %1622 = vmatmul.f32.gmra.mxu0 %v183
    %v1623 = vpop.f32.mrf.mxu0
    %v1624 = vadd.f32 %v1223, %v1623
    %1625 = vmatmul.f32.gmra.mxu0 %v184
    %v1626 = vpop.f32.mrf.mxu0
    %v1627 = vadd.f32 %v1226, %v1626
    %1628 = vmatmul.f32.gmra.mxu0 %v186
    %v1629 = vpop.f32.mrf.mxu0
    %v1630 = vadd.f32 %v1229, %v1629
    %1631 = vmatmul.f32.gmra.mxu0 %v187
    %v1632 = vpop.f32.mrf.mxu0
    %v1633 = vadd.f32 %v1232, %v1632
    %1634 = vmatmul.f32.gmra.mxu0 %v189
    %v1635 = vpop.f32.mrf.mxu0
    %v1636 = vadd.f32 %v1235, %v1635
    %1637 = vmatmul.f32.gmra.mxu0 %v190
    %v1638 = vpop.f32.mrf.mxu0
    %v1639 = vadd.f32 %v1238, %v1638
    %1640 = vmatmul.f32.gmra.mxu0 %v192
    %v1641 = vpop.f32.mrf.mxu0
    %v1642 = vadd.f32 %v1241, %v1641
    %1643 = vmatmul.f32.gmra.mxu0 %v193
    %v1644 = vpop.f32.mrf.mxu0
    %v1645 = vadd.f32 %v1244, %v1644
    %1646 = vmatmul.f32.gmra.mxu0 %v195
    %v1647 = vpop.f32.mrf.mxu0
    %v1648 = vadd.f32 %v1247, %v1647
    %1649 = vmatmul.f32.gmra.mxu0 %v196
    %v1650 = vpop.f32.mrf.mxu0
    %v1651 = vadd.f32 %v1250, %v1650
    %1652 = vmatmul.f32.gmra.mxu0 %v198
    %v1653 = vpop.f32.mrf.mxu0
    %v1654 = vadd.f32 %v1253, %v1653
    %1655 = vmatmul.f32.gmra.mxu0 %v199
    %v1656 = vpop.f32.mrf.mxu0
    %v1657 = vadd.f32 %v1256, %v1656
    %1658 = vmatmul.f32.gmra.mxu0 %v201
    %v1659 = vpop.f32.mrf.mxu0
    %v1660 = vadd.f32 %v1259, %v1659
    %1661 = vmatmul.f32.gmra.mxu0 %v202
    %v1662 = vpop.f32.mrf.mxu0
    %v1663 = vadd.f32 %v1262, %v1662
    %1664 = vmatmul.f32.gmra.mxu0 %v204
    %v1665 = vpop.f32.mrf.mxu0
    %v1666 = vadd.f32 %v1265, %v1665
    %1667 = vmatmul.f32.gmra.mxu0 %v205
    %v1668 = vpop.f32.mrf.mxu0
    %v1669 = vadd.f32 %v1268, %v1668
    %1670 = vmatmul.f32.gmra.mxu0 %v207
    %v1671 = vpop.f32.mrf.mxu0
    %v1672 = vadd.f32 %v1271, %v1671
    %1673 = vmatmul.f32.gmra.mxu0 %v208
    %v1674 = vpop.f32.mrf.mxu0
    %v1675 = vadd.f32 %v1274, %v1674
    %1676 = vmatmul.f32.gmra.mxu0 %v210
    %v1677 = vpop.f32.mrf.mxu0
    %v1678 = vadd.f32 %v1277, %v1677
    %1679 = vmatmul.f32.gmra.mxu0 %v211
    %v1680 = vpop.f32.mrf.mxu0
    %v1681 = vadd.f32 %v1280, %v1680
    %1682 = vmatmul.f32.gmra.mxu0 %v213
    %v1683 = vpop.f32.mrf.mxu0
    %v1684 = vadd.f32 %v1283, %v1683
    %1685 = vmatmul.f32.gmra.mxu0 %v214
    %v1686 = vpop.f32.mrf.mxu0
    %v1687 = vadd.f32 %v1286, %v1686
    %1688 = vmatmul.f32.gmra.mxu0 %v216
    %v1689 = vpop.f32.mrf.mxu0
    %v1690 = vadd.f32 %v1289, %v1689
    %1691 = vmatmul.f32.gmra.mxu0 %v217
    %v1692 = vpop.f32.mrf.mxu0
    %v1693 = vadd.f32 %v1292, %v1692
    %1694 = vmatmul.f32.gmra.mxu0 %v219
    %v1695 = vpop.f32.mrf.mxu0
    %v1696 = vadd.f32 %v1295, %v1695
    %1697 = vmatmul.f32.gmra.mxu0 %v220
    %v1698 = vpop.f32.mrf.mxu0
    %v1699 = vadd.f32 %v1298, %v1698
    %1700 = vmatmul.f32.gmra.mxu0 %v222
    %v1701 = vpop.f32.mrf.mxu0
    %v1702 = vadd.f32 %v1301, %v1701
    %1703 = vmatmul.f32.gmra.mxu0 %v223
    %v1704 = vpop.f32.mrf.mxu0
    %v1705 = vadd.f32 %v1304, %v1704
    %1706 = vdwg.mxu0
    %vm1707 = vcmask 1045504
    %v1708 = vrot.slane %v15, 2
    %v1709 = vrot.slane %v16, 2
    %v1710 = vsel %vm1707, %v1708, %v1709
    %v1711 = vrot.slane %v17, 2
    %v1712 = vsel %vm1707, %v1709, %v1711
    %v1713 = vrot.slane %v18, 2
    %v1714 = vrot.slane %v19, 2
    %v1715 = vsel %vm1707, %v1713, %v1714
    %v1716 = vrot.slane %v20, 2
    %v1717 = vsel %vm1707, %v1714, %v1716
    %v1718 = vrot.slane %v21, 2
    %v1719 = vrot.slane %v22, 2
    %v1720 = vsel %vm1707, %v1718, %v1719
    %v1721 = vrot.slane %v23, 2
    %v1722 = vsel %vm1707, %v1719, %v1721
    %v1723 = vrot.slane %v24, 2
    %v1724 = vrot.slane %v25, 2
    %v1725 = vsel %vm1707, %v1723, %v1724
    %v1726 = vrot.slane %v26, 2
    %v1727 = vsel %vm1707, %v1724, %v1726
    %v1728 = vrot.slane %v27, 2
    %v1729 = vrot.slane %v28, 2
    %v1730 = vsel %vm1707, %v1728, %v1729
    %v1731 = vrot.slane %v29, 2
    %v1732 = vsel %vm1707, %v1729, %v1731
    %v1733 = vrot.slane %v30, 2
    %v1734 = vrot.slane %v31, 2
    %v1735 = vsel %vm1707, %v1733, %v1734
    %v1736 = vrot.slane %v32, 2
    %v1737 = vsel %vm1707, %v1734, %v1736
    %v1738 = vrot.slane %v33, 2
    %v1739 = vrot.slane %v34, 2
    %v1740 = vsel %vm1707, %v1738, %v1739
    %v1741 = vrot.slane %v35, 2
    %v1742 = vsel %vm1707, %v1739, %v1741
    %v1743 = vrot.slane %v36, 2
    %v1744 = vrot.slane %v37, 2
    %v1745 = vsel %vm1707, %v1743, %v1744
    %v1746 = vrot.slane %v38, 2
    %v1747 = vsel %vm1707, %v1744, %v1746
    %v1748 = vrot.slane %v39, 2
    %v1749 = vrot.slane %v40, 2
    %v1750 = vsel %vm1707, %v1748, %v1749
    %v1751 = vrot.slane %v41, 2
    %v1752 = vsel %vm1707, %v1749, %v1751
    %v1753 = vrot.slane %v42, 2
    %v1754 = vrot.slane %v43, 2
    %v1755 = vsel %vm1707, %v1753, %v1754
    %v1756 = vrot.slane %v44, 2
    %v1757 = vsel %vm1707, %v1754, %v1756
    %v1758 = vrot.slane %v45, 2
    %v1759 = vrot.slane %v46, 2
    %v1760 = vsel %vm1707, %v1758, %v1759
    %v1761 = vrot.slane %v47, 2
    %v1762 = vsel %vm1707, %v1759, %v1761
    %v1763 = vrot.slane %v48, 2
    %v1764 = vrot.slane %v49, 2
    %v1765 = vsel %vm1707, %v1763, %v1764
    %v1766 = vrot.slane %v50, 2
    %v1767 = vsel %vm1707, %v1764, %v1766
    %v1768 = vrot.slane %v51, 2
    %v1769 = vrot.slane %v52, 2
    %v1770 = vsel %vm1707, %v1768, %v1769
    %v1771 = vrot.slane %v53, 2
    %v1772 = vsel %vm1707, %v1769, %v1771
    %v1773 = vrot.slane %v54, 2
    %v1774 = vrot.slane %v55, 2
    %v1775 = vsel %vm1707, %v1773, %v1774
    %v1776 = vrot.slane %v56, 2
    %v1777 = vsel %vm1707, %v1774, %v1776
    %v1778 = vrot.slane %v57, 2
    %v1779 = vrot.slane %v58, 2
    %v1780 = vsel %vm1707, %v1778, %v1779
    %v1781 = vrot.slane %v59, 2
    %v1782 = vsel %vm1707, %v1779, %v1781
    %v1783 = vrot.slane %v60, 2
    %v1784 = vrot.slane %v61, 2
    %v1785 = vsel %vm1707, %v1783, %v1784
    %v1786 = vrot.slane %v62, 2
    %v1787 = vsel %vm1707, %v1784, %v1786
    %v1788 = vrot.slane %v69, 2
    %v1789 = vrot.slane %v70, 2
    %v1790 = vsel %vm1707, %v1788, %v1789
    %v1791 = vrot.slane %v71, 2
    %v1792 = vsel %vm1707, %v1789, %v1791
    %v1793 = vrot.slane %v72, 2
    %v1794 = vrot.slane %v73, 2
    %v1795 = vsel %vm1707, %v1793, %v1794
    %v1796 = vrot.slane %v74, 2
    %v1797 = vsel %vm1707, %v1794, %v1796
    %v1798 = vrot.slane %v75, 2
    %v1799 = vrot.slane %v76, 2
    %v1800 = vsel %vm1707, %v1798, %v1799
    %v1801 = vrot.slane %v77, 2
    %v1802 = vsel %vm1707, %v1799, %v1801
    %v1803 = vrot.slane %v78, 2
    %v1804 = vrot.slane %v79, 2
    %v1805 = vsel %vm1707, %v1803, %v1804
    %v1806 = vrot.slane %v80, 2
    %v1807 = vsel %vm1707, %v1804, %v1806
    %v1808 = vrot.slane %v81, 2
    %v1809 = vrot.slane %v82, 2
    %v1810 = vsel %vm1707, %v1808, %v1809
    %v1811 = vrot.slane %v83, 2
    %v1812 = vsel %vm1707, %v1809, %v1811
    %v1813 = vrot.slane %v84, 2
    %v1814 = vrot.slane %v85, 2
    %v1815 = vsel %vm1707, %v1813, %v1814
    %v1816 = vrot.slane %v86, 2
    %v1817 = vsel %vm1707, %v1814, %v1816
    %v1818 = vrot.slane %v87, 2
    %v1819 = vrot.slane %v88, 2
    %v1820 = vsel %vm1707, %v1818, %v1819
    %v1821 = vrot.slane %v89, 2
    %v1822 = vsel %vm1707, %v1819, %v1821
    %v1823 = vrot.slane %v90, 2
    %v1824 = vrot.slane %v91, 2
    %v1825 = vsel %vm1707, %v1823, %v1824
    %v1826 = vrot.slane %v92, 2
    %v1827 = vsel %vm1707, %v1824, %v1826
    %v1828 = vrot.slane %v93, 2
    %v1829 = vrot.slane %v94, 2
    %v1830 = vsel %vm1707, %v1828, %v1829
    %v1831 = vrot.slane %v95, 2
    %v1832 = vsel %vm1707, %v1829, %v1831
    %v1833 = vrot.slane %v96, 2
    %v1834 = vrot.slane %v97, 2
    %v1835 = vsel %vm1707, %v1833, %v1834
    %v1836 = vrot.slane %v98, 2
    %v1837 = vsel %vm1707, %v1834, %v1836
    %v1838 = vrot.slane %v99, 2
    %v1839 = vrot.slane %v100, 2
    %v1840 = vsel %vm1707, %v1838, %v1839
    %v1841 = vrot.slane %v101, 2
    %v1842 = vsel %vm1707, %v1839, %v1841
    %v1843 = vrot.slane %v102, 2
    %v1844 = vrot.slane %v103, 2
    %v1845 = vsel %vm1707, %v1843, %v1844
    %v1846 = vrot.slane %v104, 2
    %v1847 = vsel %vm1707, %v1844, %v1846
    %v1848 = vrot.slane %v105, 2
    %v1849 = vrot.slane %v106, 2
    %v1850 = vsel %vm1707, %v1848, %v1849
    %v1851 = vrot.slane %v107, 2
    %v1852 = vsel %vm1707, %v1849, %v1851
    %v1853 = vrot.slane %v108, 2
    %v1854 = vrot.slane %v109, 2
    %v1855 = vsel %vm1707, %v1853, %v1854
    %v1856 = vrot.slane %v110, 2
    %v1857 = vsel %vm1707, %v1854, %v1856
    %v1858 = vrot.slane %v111, 2
    %v1859 = vrot.slane %v112, 2
    %v1860 = vsel %vm1707, %v1858, %v1859
    %v1861 = vrot.slane %v113, 2
    %v1862 = vsel %vm1707, %v1859, %v1861
    %v1863 = vrot.slane %v114, 2
    %v1864 = vrot.slane %v115, 2
    %v1865 = vsel %vm1707, %v1863, %v1864
    %v1866 = vrot.slane %v116, 2
    %v1867 = vsel %vm1707, %v1864, %v1866
    %v1868 = vrot.slane %v123, 2
    %v1869 = vrot.slane %v124, 2
    %v1870 = vsel %vm1707, %v1868, %v1869
    %v1871 = vrot.slane %v125, 2
    %v1872 = vsel %vm1707, %v1869, %v1871
    %v1873 = vrot.slane %v126, 2
    %v1874 = vrot.slane %v127, 2
    %v1875 = vsel %vm1707, %v1873, %v1874
    %v1876 = vrot.slane %v128, 2
    %v1877 = vsel %vm1707, %v1874, %v1876
    %v1878 = vrot.slane %v129, 2
    %v1879 = vrot.slane %v130, 2
    %v1880 = vsel %vm1707, %v1878, %v1879
    %v1881 = vrot.slane %v131, 2
    %v1882 = vsel %vm1707, %v1879, %v1881
    %v1883 = vrot.slane %v132, 2
    %v1884 = vrot.slane %v133, 2
    %v1885 = vsel %vm1707, %v1883, %v1884
    %v1886 = vrot.slane %v134, 2
    %v1887 = vsel %vm1707, %v1884, %v1886
    %v1888 = vrot.slane %v135, 2
    %v1889 = vrot.slane %v136, 2
    %v1890 = vsel %vm1707, %v1888, %v1889
    %v1891 = vrot.slane %v137, 2
    %v1892 = vsel %vm1707, %v1889, %v1891
    %v1893 = vrot.slane %v138, 2
    %v1894 = vrot.slane %v139, 2
    %v1895 = vsel %vm1707, %v1893, %v1894
    %v1896 = vrot.slane %v140, 2
    %v1897 = vsel %vm1707, %v1894, %v1896
    %v1898 = vrot.slane %v141, 2
    %v1899 = vrot.slane %v142, 2
    %v1900 = vsel %vm1707, %v1898, %v1899
    %v1901 = vrot.slane %v143, 2
    %v1902 = vsel %vm1707, %v1899, %v1901
    %v1903 = vrot.slane %v144, 2
    %v1904 = vrot.slane %v145, 2
    %v1905 = vsel %vm1707, %v1903, %v1904
    %v1906 = vrot.slane %v146, 2
    %v1907 = vsel %vm1707, %v1904, %v1906
    %v1908 = vrot.slane %v147, 2
    %v1909 = vrot.slane %v148, 2
    %v1910 = vsel %vm1707, %v1908, %v1909
    %v1911 = vrot.slane %v149, 2
    %v1912 = vsel %vm1707, %v1909, %v1911
    %v1913 = vrot.slane %v150, 2
    %v1914 = vrot.slane %v151, 2
    %v1915 = vsel %vm1707, %v1913, %v1914
    %v1916 = vrot.slane %v152, 2
    %v1917 = vsel %vm1707, %v1914, %v1916
    %v1918 = vrot.slane %v153, 2
    %v1919 = vrot.slane %v154, 2
    %v1920 = vsel %vm1707, %v1918, %v1919
    %v1921 = vrot.slane %v155, 2
    %v1922 = vsel %vm1707, %v1919, %v1921
    %v1923 = vrot.slane %v156, 2
    %v1924 = vrot.slane %v157, 2
    %v1925 = vsel %vm1707, %v1923, %v1924
    %v1926 = vrot.slane %v158, 2
    %v1927 = vsel %vm1707, %v1924, %v1926
    %v1928 = vrot.slane %v159, 2
    %v1929 = vrot.slane %v160, 2
    %v1930 = vsel %vm1707, %v1928, %v1929
    %v1931 = vrot.slane %v161, 2
    %v1932 = vsel %vm1707, %v1929, %v1931
    %v1933 = vrot.slane %v162, 2
    %v1934 = vrot.slane %v163, 2
    %v1935 = vsel %vm1707, %v1933, %v1934
    %v1936 = vrot.slane %v164, 2
    %v1937 = vsel %vm1707, %v1934, %v1936
    %v1938 = vrot.slane %v165, 2
    %v1939 = vrot.slane %v166, 2
    %v1940 = vsel %vm1707, %v1938, %v1939
    %v1941 = vrot.slane %v167, 2
    %v1942 = vsel %vm1707, %v1939, %v1941
    %v1943 = vrot.slane %v168, 2
    %v1944 = vrot.slane %v169, 2
    %v1945 = vsel %vm1707, %v1943, %v1944
    %v1946 = vrot.slane %v170, 2
    %v1947 = vsel %vm1707, %v1944, %v1946
    %v1948 = vrot.slane %v177, 2
    %v1949 = vrot.slane %v178, 2
    %v1950 = vsel %vm1707, %v1948, %v1949
    %v1951 = vrot.slane %v179, 2
    %v1952 = vsel %vm1707, %v1949, %v1951
    %v1953 = vrot.slane %v180, 2
    %v1954 = vrot.slane %v181, 2
    %v1955 = vsel %vm1707, %v1953, %v1954
    %v1956 = vrot.slane %v182, 2
    %v1957 = vsel %vm1707, %v1954, %v1956
    %v1958 = vrot.slane %v183, 2
    %v1959 = vrot.slane %v184, 2
    %v1960 = vsel %vm1707, %v1958, %v1959
    %v1961 = vrot.slane %v185, 2
    %v1962 = vsel %vm1707, %v1959, %v1961
    %v1963 = vrot.slane %v186, 2
    %v1964 = vrot.slane %v187, 2
    %v1965 = vsel %vm1707, %v1963, %v1964
    %v1966 = vrot.slane %v188, 2
    %v1967 = vsel %vm1707, %v1964, %v1966
    %v1968 = vrot.slane %v189, 2
    %v1969 = vrot.slane %v190, 2
    %v1970 = vsel %vm1707, %v1968, %v1969
    %v1971 = vrot.slane %v191, 2
    %v1972 = vsel %vm1707, %v1969, %v1971
    %v1973 = vrot.slane %v192, 2
    %v1974 = vrot.slane %v193, 2
    %v1975 = vsel %vm1707, %v1973, %v1974
    %v1976 = vrot.slane %v194, 2
    %v1977 = vsel %vm1707, %v1974, %v1976
    %v1978 = vrot.slane %v195, 2
    %v1979 = vrot.slane %v196, 2
    %v1980 = vsel %vm1707, %v1978, %v1979
    %v1981 = vrot.slane %v197, 2
    %v1982 = vsel %vm1707, %v1979, %v1981
    %v1983 = vrot.slane %v198, 2
    %v1984 = vrot.slane %v199, 2
    %v1985 = vsel %vm1707, %v1983, %v1984
    %v1986 = vrot.slane %v200, 2
    %v1987 = vsel %vm1707, %v1984, %v1986
    %v1988 = vrot.slane %v201, 2
    %v1989 = vrot.slane %v202, 2
    %v1990 = vsel %vm1707, %v1988, %v1989
    %v1991 = vrot.slane %v203, 2
    %v1992 = vsel %vm1707, %v1989, %v1991
    %v1993 = vrot.slane %v204, 2
    %v1994 = vrot.slane %v205, 2
    %v1995 = vsel %vm1707, %v1993, %v1994
    %v1996 = vrot.slane %v206, 2
    %v1997 = vsel %vm1707, %v1994, %v1996
    %v1998 = vrot.slane %v207, 2
    %v1999 = vrot.slane %v208, 2
    %v2000 = vsel %vm1707, %v1998, %v1999
    %v2001 = vrot.slane %v209, 2
    %v2002 = vsel %vm1707, %v1999, %v2001
    %v2003 = vrot.slane %v210, 2
    %v2004 = vrot.slane %v211, 2
    %v2005 = vsel %vm1707, %v2003, %v2004
    %v2006 = vrot.slane %v212, 2
    %v2007 = vsel %vm1707, %v2004, %v2006
    %v2008 = vrot.slane %v213, 2
    %v2009 = vrot.slane %v214, 2
    %v2010 = vsel %vm1707, %v2008, %v2009
    %v2011 = vrot.slane %v215, 2
    %v2012 = vsel %vm1707, %v2009, %v2011
    %v2013 = vrot.slane %v216, 2
    %v2014 = vrot.slane %v217, 2
    %v2015 = vsel %vm1707, %v2013, %v2014
    %v2016 = vrot.slane %v218, 2
    %v2017 = vsel %vm1707, %v2014, %v2016
    %v2018 = vrot.slane %v219, 2
    %v2019 = vrot.slane %v220, 2
    %v2020 = vsel %vm1707, %v2018, %v2019
    %v2021 = vrot.slane %v221, 2
    %v2022 = vsel %vm1707, %v2019, %v2021
    %v2023 = vrot.slane %v222, 2
    %v2024 = vrot.slane %v223, 2
    %v2025 = vsel %vm1707, %v2023, %v2024
    %v2026 = vrot.slane %v224, 2
    %v2027 = vsel %vm1707, %v2024, %v2026
    %s2156 = scalar_lea.vmem %s1, 256
    %v2157 = vld [vmem:[%s2156] sm:$0xff]
    %v2158 = vld [vmem:[%s2156 + $0x8] sm:$0xff]
    %v2159 = vld [vmem:[%s2156 + $0x10] sm:$0xff]
    %v2160 = vld [vmem:[%s2156 + $0x18] sm:$0xff]
    %v2161 = vld [vmem:[%s2156 + $0x20] sm:$0xff]
    %v2162 = vld [vmem:[%s2156 + $0x28] sm:$0xff]
    %v2163 = vld [vmem:[%s2156 + $0x30] sm:$0xff]
    %v2164 = vld [vmem:[%s2156 + $0x38] sm:$0xff]
    %v2165 = vld [vmem:[%s2156 + $0x40] sm:$0xff]
    %v2166 = vld [vmem:[%s2156 + $0x48] sm:$0xff]
    %v2167 = vld [vmem:[%s2156 + $0x50] sm:$0xff]
    %v2168 = vld [vmem:[%s2156 + $0x58] sm:$0xff]
    %v2169 = vld [vmem:[%s2156 + $0x60] sm:$0xff]
    %v2170 = vld [vmem:[%s2156 + $0x68] sm:$0xff]
    %v2171 = vld [vmem:[%s2156 + $0x70] sm:$0xff]
    %v2172 = vld [vmem:[%s2156 + $0x78] sm:$0xff]
    %2173 = vmatpush.msra.mxu0 %v2172
    %2174 = vmatpush.msra.mxu0 %v2171
    %2175 = vmatpush.msra.mxu0 %v2170
    %2176 = vmatpush.msra.mxu0 %v2169
    %2177 = vmatpush.msra.mxu0 %v2168
    %2178 = vmatpush.msra.mxu0 %v2167
    %2179 = vmatpush.msra.mxu0 %v2166
    %2180 = vmatpush.msra.mxu0 %v2165
    %2181 = vmatpush.msra.mxu0 %v2164
    %2182 = vmatpush.msra.mxu0 %v2163
    %2183 = vmatpush.msra.mxu0 %v2162
    %2184 = vmatpush.msra.mxu0 %v2161
    %2185 = vmatpush.msra.mxu0 %v2160
    %2186 = vmatpush.msra.mxu0 %v2159
    %2187 = vmatpush.msra.mxu0 %v2158
    %2188 = vmatpush.msra.mxu0 %v2157
    %2189 = vmatmul.f32.gmra.mxu0 %v1710
    %v2190 = vpop.f32.mrf.mxu0
    %v2191 = vadd.f32 0.0, %v2190
    %2192 = vmatmul.f32.gmra.mxu0 %v1712
    %v2193 = vpop.f32.mrf.mxu0
    %v2194 = vadd.f32 0.0, %v2193
    %2195 = vmatmul.f32.gmra.mxu0 %v1715
    %v2196 = vpop.f32.mrf.mxu0
    %v2197 = vadd.f32 0.0, %v2196
    %2198 = vmatmul.f32.gmra.mxu0 %v1717
    %v2199 = vpop.f32.mrf.mxu0
    %v2200 = vadd.f32 0.0, %v2199
    %2201 = vmatmul.f32.gmra.mxu0 %v1720
    %v2202 = vpop.f32.mrf.mxu0
    %v2203 = vadd.f32 0.0, %v2202
    %2204 = vmatmul.f32.gmra.mxu0 %v1722
    %v2205 = vpop.f32.mrf.mxu0
    %v2206 = vadd.f32 0.0, %v2205
    %2207 = vmatmul.f32.gmra.mxu0 %v1725
    %v2208 = vpop.f32.mrf.mxu0
    %v2209 = vadd.f32 0.0, %v2208
    %2210 = vmatmul.f32.gmra.mxu0 %v1727
    %v2211 = vpop.f32.mrf.mxu0
    %v2212 = vadd.f32 0.0, %v2211
    %2213 = vmatmul.f32.gmra.mxu0 %v1730
    %v2214 = vpop.f32.mrf.mxu0
    %v2215 = vadd.f32 0.0, %v2214
    %2216 = vmatmul.f32.gmra.mxu0 %v1732
    %v2217 = vpop.f32.mrf.mxu0
    %v2218 = vadd.f32 0.0, %v2217
    %2219 = vmatmul.f32.gmra.mxu0 %v1735
    %v2220 = vpop.f32.mrf.mxu0
    %v2221 = vadd.f32 0.0, %v2220
    %2222 = vmatmul.f32.gmra.mxu0 %v1737
    %v2223 = vpop.f32.mrf.mxu0
    %v2224 = vadd.f32 0.0, %v2223
    %2225 = vmatmul.f32.gmra.mxu0 %v1740
    %v2226 = vpop.f32.mrf.mxu0
    %v2227 = vadd.f32 0.0, %v2226
    %2228 = vmatmul.f32.gmra.mxu0 %v1742
    %v2229 = vpop.f32.mrf.mxu0
    %v2230 = vadd.f32 0.0, %v2229
    %2231 = vmatmul.f32.gmra.mxu0 %v1745
    %v2232 = vpop.f32.mrf.mxu0
    %v2233 = vadd.f32 0.0, %v2232
    %2234 = vmatmul.f32.gmra.mxu0 %v1747
    %v2235 = vpop.f32.mrf.mxu0
    %v2236 = vadd.f32 0.0, %v2235
    %2237 = vmatmul.f32.gmra.mxu0 %v1750
    %v2238 = vpop.f32.mrf.mxu0
    %v2239 = vadd.f32 0.0, %v2238
    %2240 = vmatmul.f32.gmra.mxu0 %v1752
    %v2241 = vpop.f32.mrf.mxu0
    %v2242 = vadd.f32 0.0, %v2241
    %2243 = vmatmul.f32.gmra.mxu0 %v1755
    %v2244 = vpop.f32.mrf.mxu0
    %v2245 = vadd.f32 0.0, %v2244
    %2246 = vmatmul.f32.gmra.mxu0 %v1757
    %v2247 = vpop.f32.mrf.mxu0
    %v2248 = vadd.f32 0.0, %v2247
    %2249 = vmatmul.f32.gmra.mxu0 %v1760
    %v2250 = vpop.f32.mrf.mxu0
    %v2251 = vadd.f32 0.0, %v2250
    %2252 = vmatmul.f32.gmra.mxu0 %v1762
    %v2253 = vpop.f32.mrf.mxu0
    %v2254 = vadd.f32 0.0, %v2253
    %2255 = vmatmul.f32.gmra.mxu0 %v1765
    %v2256 = vpop.f32.mrf.mxu0
    %v2257 = vadd.f32 0.0, %v2256
    %2258 = vmatmul.f32.gmra.mxu0 %v1767
    %v2259 = vpop.f32.mrf.mxu0
    %v2260 = vadd.f32 0.0, %v2259
    %2261 = vmatmul.f32.gmra.mxu0 %v1770
    %v2262 = vpop.f32.mrf.mxu0
    %v2263 = vadd.f32 0.0, %v2262
    %2264 = vmatmul.f32.gmra.mxu0 %v1772
    %v2265 = vpop.f32.mrf.mxu0
    %v2266 = vadd.f32 0.0, %v2265
    %2267 = vmatmul.f32.gmra.mxu0 %v1775
    %v2268 = vpop.f32.mrf.mxu0
    %v2269 = vadd.f32 0.0, %v2268
    %2270 = vmatmul.f32.gmra.mxu0 %v1777
    %v2271 = vpop.f32.mrf.mxu0
    %v2272 = vadd.f32 0.0, %v2271
    %2273 = vmatmul.f32.gmra.mxu0 %v1780
    %v2274 = vpop.f32.mrf.mxu0
    %v2275 = vadd.f32 0.0, %v2274
    %2276 = vmatmul.f32.gmra.mxu0 %v1782
    %v2277 = vpop.f32.mrf.mxu0
    %v2278 = vadd.f32 0.0, %v2277
    %2279 = vmatmul.f32.gmra.mxu0 %v1785
    %v2280 = vpop.f32.mrf.mxu0
    %v2281 = vadd.f32 0.0, %v2280
    %2282 = vmatmul.f32.gmra.mxu0 %v1787
    %v2283 = vpop.f32.mrf.mxu0
    %v2284 = vadd.f32 0.0, %v2283
    %2285 = vmatmul.f32.gmra.mxu0 %v1790
    %v2286 = vpop.f32.mrf.mxu0
    %v2287 = vadd.f32 0.0, %v2286
    %2288 = vmatmul.f32.gmra.mxu0 %v1792
    %v2289 = vpop.f32.mrf.mxu0
    %v2290 = vadd.f32 0.0, %v2289
    %2291 = vmatmul.f32.gmra.mxu0 %v1795
    %v2292 = vpop.f32.mrf.mxu0
    %v2293 = vadd.f32 0.0, %v2292
    %2294 = vmatmul.f32.gmra.mxu0 %v1797
    %v2295 = vpop.f32.mrf.mxu0
    %v2296 = vadd.f32 0.0, %v2295
    %2297 = vmatmul.f32.gmra.mxu0 %v1800
    %v2298 = vpop.f32.mrf.mxu0
    %v2299 = vadd.f32 0.0, %v2298
    %2300 = vmatmul.f32.gmra.mxu0 %v1802
    %v2301 = vpop.f32.mrf.mxu0
    %v2302 = vadd.f32 0.0, %v2301
    %2303 = vmatmul.f32.gmra.mxu0 %v1805
    %v2304 = vpop.f32.mrf.mxu0
    %v2305 = vadd.f32 0.0, %v2304
    %2306 = vmatmul.f32.gmra.mxu0 %v1807
    %v2307 = vpop.f32.mrf.mxu0
    %v2308 = vadd.f32 0.0, %v2307
    %2309 = vmatmul.f32.gmra.mxu0 %v1810
    %v2310 = vpop.f32.mrf.mxu0
    %v2311 = vadd.f32 0.0, %v2310
    %2312 = vmatmul.f32.gmra.mxu0 %v1812
    %v2313 = vpop.f32.mrf.mxu0
    %v2314 = vadd.f32 0.0, %v2313
    %2315 = vmatmul.f32.gmra.mxu0 %v1815
    %v2316 = vpop.f32.mrf.mxu0
    %v2317 = vadd.f32 0.0, %v2316
    %2318 = vmatmul.f32.gmra.mxu0 %v1817
    %v2319 = vpop.f32.mrf.mxu0
    %v2320 = vadd.f32 0.0, %v2319
    %2321 = vmatmul.f32.gmra.mxu0 %v1820
    %v2322 = vpop.f32.mrf.mxu0
    %v2323 = vadd.f32 0.0, %v2322
    %2324 = vmatmul.f32.gmra.mxu0 %v1822
    %v2325 = vpop.f32.mrf.mxu0
    %v2326 = vadd.f32 0.0, %v2325
    %2327 = vmatmul.f32.gmra.mxu0 %v1825
    %v2328 = vpop.f32.mrf.mxu0
    %v2329 = vadd.f32 0.0, %v2328
    %2330 = vmatmul.f32.gmra.mxu0 %v1827
    %v2331 = vpop.f32.mrf.mxu0
    %v2332 = vadd.f32 0.0, %v2331
    %2333 = vmatmul.f32.gmra.mxu0 %v1830
    %v2334 = vpop.f32.mrf.mxu0
    %v2335 = vadd.f32 0.0, %v2334
    %2336 = vmatmul.f32.gmra.mxu0 %v1832
    %v2337 = vpop.f32.mrf.mxu0
    %v2338 = vadd.f32 0.0, %v2337
    %2339 = vmatmul.f32.gmra.mxu0 %v1835
    %v2340 = vpop.f32.mrf.mxu0
    %v2341 = vadd.f32 0.0, %v2340
    %2342 = vmatmul.f32.gmra.mxu0 %v1837
    %v2343 = vpop.f32.mrf.mxu0
    %v2344 = vadd.f32 0.0, %v2343
    %2345 = vmatmul.f32.gmra.mxu0 %v1840
    %v2346 = vpop.f32.mrf.mxu0
    %v2347 = vadd.f32 0.0, %v2346
    %2348 = vmatmul.f32.gmra.mxu0 %v1842
    %v2349 = vpop.f32.mrf.mxu0
    %v2350 = vadd.f32 0.0, %v2349
    %2351 = vmatmul.f32.gmra.mxu0 %v1845
    %v2352 = vpop.f32.mrf.mxu0
    %v2353 = vadd.f32 0.0, %v2352
    %2354 = vmatmul.f32.gmra.mxu0 %v1847
    %v2355 = vpop.f32.mrf.mxu0
    %v2356 = vadd.f32 0.0, %v2355
    %2357 = vmatmul.f32.gmra.mxu0 %v1850
    %v2358 = vpop.f32.mrf.mxu0
    %v2359 = vadd.f32 0.0, %v2358
    %2360 = vmatmul.f32.gmra.mxu0 %v1852
    %v2361 = vpop.f32.mrf.mxu0
    %v2362 = vadd.f32 0.0, %v2361
    %2363 = vmatmul.f32.gmra.mxu0 %v1855
    %v2364 = vpop.f32.mrf.mxu0
    %v2365 = vadd.f32 0.0, %v2364
    %2366 = vmatmul.f32.gmra.mxu0 %v1857
    %v2367 = vpop.f32.mrf.mxu0
    %v2368 = vadd.f32 0.0, %v2367
    %2369 = vmatmul.f32.gmra.mxu0 %v1860
    %v2370 = vpop.f32.mrf.mxu0
    %v2371 = vadd.f32 0.0, %v2370
    %2372 = vmatmul.f32.gmra.mxu0 %v1862
    %v2373 = vpop.f32.mrf.mxu0
    %v2374 = vadd.f32 0.0, %v2373
    %2375 = vmatmul.f32.gmra.mxu0 %v1865
    %v2376 = vpop.f32.mrf.mxu0
    %v2377 = vadd.f32 0.0, %v2376
    %2378 = vmatmul.f32.gmra.mxu0 %v1867
    %v2379 = vpop.f32.mrf.mxu0
    %v2380 = vadd.f32 0.0, %v2379
    %2381 = vmatmul.f32.gmra.mxu0 %v1870
    %v2382 = vpop.f32.mrf.mxu0
    %v2383 = vadd.f32 0.0, %v2382
    %2384 = vmatmul.f32.gmra.mxu0 %v1872
    %v2385 = vpop.f32.mrf.mxu0
    %v2386 = vadd.f32 0.0, %v2385
    %2387 = vmatmul.f32.gmra.mxu0 %v1875
    %v2388 = vpop.f32.mrf.mxu0
    %v2389 = vadd.f32 0.0, %v2388
    %2390 = vmatmul.f32.gmra.mxu0 %v1877
    %v2391 = vpop.f32.mrf.mxu0
    %v2392 = vadd.f32 0.0, %v2391
    %2393 = vmatmul.f32.gmra.mxu0 %v1880
    %v2394 = vpop.f32.mrf.mxu0
    %v2395 = vadd.f32 0.0, %v2394
    %2396 = vmatmul.f32.gmra.mxu0 %v1882
    %v2397 = vpop.f32.mrf.mxu0
    %v2398 = vadd.f32 0.0, %v2397
    %2399 = vmatmul.f32.gmra.mxu0 %v1885
    %v2400 = vpop.f32.mrf.mxu0
    %v2401 = vadd.f32 0.0, %v2400
    %2402 = vmatmul.f32.gmra.mxu0 %v1887
    %v2403 = vpop.f32.mrf.mxu0
    %v2404 = vadd.f32 0.0, %v2403
    %2405 = vmatmul.f32.gmra.mxu0 %v1890
    %v2406 = vpop.f32.mrf.mxu0
    %v2407 = vadd.f32 0.0, %v2406
    %2408 = vmatmul.f32.gmra.mxu0 %v1892
    %v2409 = vpop.f32.mrf.mxu0
    %v2410 = vadd.f32 0.0, %v2409
    %2411 = vmatmul.f32.gmra.mxu0 %v1895
    %v2412 = vpop.f32.mrf.mxu0
    %v2413 = vadd.f32 0.0, %v2412
    %2414 = vmatmul.f32.gmra.mxu0 %v1897
    %v2415 = vpop.f32.mrf.mxu0
    %v2416 = vadd.f32 0.0, %v2415
    %2417 = vmatmul.f32.gmra.mxu0 %v1900
    %v2418 = vpop.f32.mrf.mxu0
    %v2419 = vadd.f32 0.0, %v2418
    %2420 = vmatmul.f32.gmra.mxu0 %v1902
    %v2421 = vpop.f32.mrf.mxu0
    %v2422 = vadd.f32 0.0, %v2421
    %2423 = vmatmul.f32.gmra.mxu0 %v1905
    %v2424 = vpop.f32.mrf.mxu0
    %v2425 = vadd.f32 0.0, %v2424
    %2426 = vmatmul.f32.gmra.mxu0 %v1907
    %v2427 = vpop.f32.mrf.mxu0
    %v2428 = vadd.f32 0.0, %v2427
    %2429 = vmatmul.f32.gmra.mxu0 %v1910
    %v2430 = vpop.f32.mrf.mxu0
    %v2431 = vadd.f32 0.0, %v2430
    %2432 = vmatmul.f32.gmra.mxu0 %v1912
    %v2433 = vpop.f32.mrf.mxu0
    %v2434 = vadd.f32 0.0, %v2433
    %2435 = vmatmul.f32.gmra.mxu0 %v1915
    %v2436 = vpop.f32.mrf.mxu0
    %v2437 = vadd.f32 0.0, %v2436
    %2438 = vmatmul.f32.gmra.mxu0 %v1917
    %v2439 = vpop.f32.mrf.mxu0
    %v2440 = vadd.f32 0.0, %v2439
    %2441 = vmatmul.f32.gmra.mxu0 %v1920
    %v2442 = vpop.f32.mrf.mxu0
    %v2443 = vadd.f32 0.0, %v2442
    %2444 = vmatmul.f32.gmra.mxu0 %v1922
    %v2445 = vpop.f32.mrf.mxu0
    %v2446 = vadd.f32 0.0, %v2445
    %2447 = vmatmul.f32.gmra.mxu0 %v1925
    %v2448 = vpop.f32.mrf.mxu0
    %v2449 = vadd.f32 0.0, %v2448
    %2450 = vmatmul.f32.gmra.mxu0 %v1927
    %v2451 = vpop.f32.mrf.mxu0
    %v2452 = vadd.f32 0.0, %v2451
    %2453 = vmatmul.f32.gmra.mxu0 %v1930
    %v2454 = vpop.f32.mrf.mxu0
    %v2455 = vadd.f32 0.0, %v2454
    %2456 = vmatmul.f32.gmra.mxu0 %v1932
    %v2457 = vpop.f32.mrf.mxu0
    %v2458 = vadd.f32 0.0, %v2457
    %2459 = vmatmul.f32.gmra.mxu0 %v1935
    %v2460 = vpop.f32.mrf.mxu0
    %v2461 = vadd.f32 0.0, %v2460
    %2462 = vmatmul.f32.gmra.mxu0 %v1937
    %v2463 = vpop.f32.mrf.mxu0
    %v2464 = vadd.f32 0.0, %v2463
    %2465 = vmatmul.f32.gmra.mxu0 %v1940
    %v2466 = vpop.f32.mrf.mxu0
    %v2467 = vadd.f32 0.0, %v2466
    %2468 = vmatmul.f32.gmra.mxu0 %v1942
    %v2469 = vpop.f32.mrf.mxu0
    %v2470 = vadd.f32 0.0, %v2469
    %2471 = vmatmul.f32.gmra.mxu0 %v1945
    %v2472 = vpop.f32.mrf.mxu0
    %v2473 = vadd.f32 0.0, %v2472
    %2474 = vmatmul.f32.gmra.mxu0 %v1947
    %v2475 = vpop.f32.mrf.mxu0
    %v2476 = vadd.f32 0.0, %v2475
    %2477 = vmatmul.f32.gmra.mxu0 %v1950
    %v2478 = vpop.f32.mrf.mxu0
    %v2479 = vadd.f32 0.0, %v2478
    %2480 = vmatmul.f32.gmra.mxu0 %v1952
    %v2481 = vpop.f32.mrf.mxu0
    %v2482 = vadd.f32 0.0, %v2481
    %2483 = vmatmul.f32.gmra.mxu0 %v1955
    %v2484 = vpop.f32.mrf.mxu0
    %v2485 = vadd.f32 0.0, %v2484
    %2486 = vmatmul.f32.gmra.mxu0 %v1957
    %v2487 = vpop.f32.mrf.mxu0
    %v2488 = vadd.f32 0.0, %v2487
    %2489 = vmatmul.f32.gmra.mxu0 %v1960
    %v2490 = vpop.f32.mrf.mxu0
    %v2491 = vadd.f32 0.0, %v2490
    %2492 = vmatmul.f32.gmra.mxu0 %v1962
    %v2493 = vpop.f32.mrf.mxu0
    %v2494 = vadd.f32 0.0, %v2493
    %2495 = vmatmul.f32.gmra.mxu0 %v1965
    %v2496 = vpop.f32.mrf.mxu0
    %v2497 = vadd.f32 0.0, %v2496
    %2498 = vmatmul.f32.gmra.mxu0 %v1967
    %v2499 = vpop.f32.mrf.mxu0
    %v2500 = vadd.f32 0.0, %v2499
    %2501 = vmatmul.f32.gmra.mxu0 %v1970
    %v2502 = vpop.f32.mrf.mxu0
    %v2503 = vadd.f32 0.0, %v2502
    %2504 = vmatmul.f32.gmra.mxu0 %v1972
    %v2505 = vpop.f32.mrf.mxu0
    %v2506 = vadd.f32 0.0, %v2505
    %2507 = vmatmul.f32.gmra.mxu0 %v1975
    %v2508 = vpop.f32.mrf.mxu0
    %v2509 = vadd.f32 0.0, %v2508
    %2510 = vmatmul.f32.gmra.mxu0 %v1977
    %v2511 = vpop.f32.mrf.mxu0
    %v2512 = vadd.f32 0.0, %v2511
    %2513 = vmatmul.f32.gmra.mxu0 %v1980
    %v2514 = vpop.f32.mrf.mxu0
    %v2515 = vadd.f32 0.0, %v2514
    %2516 = vmatmul.f32.gmra.mxu0 %v1982
    %v2517 = vpop.f32.mrf.mxu0
    %v2518 = vadd.f32 0.0, %v2517
    %2519 = vmatmul.f32.gmra.mxu0 %v1985
    %v2520 = vpop.f32.mrf.mxu0
    %v2521 = vadd.f32 0.0, %v2520
    %2522 = vmatmul.f32.gmra.mxu0 %v1987
    %v2523 = vpop.f32.mrf.mxu0
    %v2524 = vadd.f32 0.0, %v2523
    %2525 = vmatmul.f32.gmra.mxu0 %v1990
    %v2526 = vpop.f32.mrf.mxu0
    %v2527 = vadd.f32 0.0, %v2526
    %2528 = vmatmul.f32.gmra.mxu0 %v1992
    %v2529 = vpop.f32.mrf.mxu0
    %v2530 = vadd.f32 0.0, %v2529
    %2531 = vmatmul.f32.gmra.mxu0 %v1995
    %v2532 = vpop.f32.mrf.mxu0
    %v2533 = vadd.f32 0.0, %v2532
    %2534 = vmatmul.f32.gmra.mxu0 %v1997
    %v2535 = vpop.f32.mrf.mxu0
    %v2536 = vadd.f32 0.0, %v2535
    %2537 = vmatmul.f32.gmra.mxu0 %v2000
    %v2538 = vpop.f32.mrf.mxu0
    %v2539 = vadd.f32 0.0, %v2538
    %2540 = vmatmul.f32.gmra.mxu0 %v2002
    %v2541 = vpop.f32.mrf.mxu0
    %v2542 = vadd.f32 0.0, %v2541
    %2543 = vmatmul.f32.gmra.mxu0 %v2005
    %v2544 = vpop.f32.mrf.mxu0
    %v2545 = vadd.f32 0.0, %v2544
    %2546 = vmatmul.f32.gmra.mxu0 %v2007
    %v2547 = vpop.f32.mrf.mxu0
    %v2548 = vadd.f32 0.0, %v2547
    %2549 = vmatmul.f32.gmra.mxu0 %v2010
    %v2550 = vpop.f32.mrf.mxu0
    %v2551 = vadd.f32 0.0, %v2550
    %2552 = vmatmul.f32.gmra.mxu0 %v2012
    %v2553 = vpop.f32.mrf.mxu0
    %v2554 = vadd.f32 0.0, %v2553
    %2555 = vmatmul.f32.gmra.mxu0 %v2015
    %v2556 = vpop.f32.mrf.mxu0
    %v2557 = vadd.f32 0.0, %v2556
    %2558 = vmatmul.f32.gmra.mxu0 %v2017
    %v2559 = vpop.f32.mrf.mxu0
    %v2560 = vadd.f32 0.0, %v2559
    %2561 = vmatmul.f32.gmra.mxu0 %v2020
    %v2562 = vpop.f32.mrf.mxu0
    %v2563 = vadd.f32 0.0, %v2562
    %2564 = vmatmul.f32.gmra.mxu0 %v2022
    %v2565 = vpop.f32.mrf.mxu0
    %v2566 = vadd.f32 0.0, %v2565
    %2567 = vmatmul.f32.gmra.mxu0 %v2025
    %v2568 = vpop.f32.mrf.mxu0
    %v2569 = vadd.f32 0.0, %v2568
    %2570 = vmatmul.f32.gmra.mxu0 %v2027
    %v2571 = vpop.f32.mrf.mxu0
    %v2572 = vadd.f32 0.0, %v2571
    %2573 = vdwg.mxu0
    %v2574 = vadd.f32 %v1324, %v2191
    %v2575 = vadd.f32 %v1327, %v2194
    %v2576 = vadd.f32 %v1330, %v2197
    %v2577 = vadd.f32 %v1333, %v2200
    %v2578 = vadd.f32 %v1336, %v2203
    %v2579 = vadd.f32 %v1339, %v2206
    %v2580 = vadd.f32 %v1342, %v2209
    %v2581 = vadd.f32 %v1345, %v2212
    %v2582 = vadd.f32 %v1348, %v2215
    %v2583 = vadd.f32 %v1351, %v2218
    %v2584 = vadd.f32 %v1354, %v2221
    %v2585 = vadd.f32 %v1357, %v2224
    %v2586 = vadd.f32 %v1360, %v2227
    %v2587 = vadd.f32 %v1363, %v2230
    %v2588 = vadd.f32 %v1366, %v2233
    %v2589 = vadd.f32 %v1369, %v2236
    %v2590 = vadd.f32 %v1372, %v2239
    %v2591 = vadd.f32 %v1375, %v2242
    %v2592 = vadd.f32 %v1378, %v2245
    %v2593 = vadd.f32 %v1381, %v2248
    %v2594 = vadd.f32 %v1384, %v2251
    %v2595 = vadd.f32 %v1387, %v2254
    %v2596 = vadd.f32 %v1390, %v2257
    %v2597 = vadd.f32 %v1393, %v2260
    %v2598 = vadd.f32 %v1396, %v2263
    %v2599 = vadd.f32 %v1399, %v2266
    %v2600 = vadd.f32 %v1402, %v2269
    %v2601 = vadd.f32 %v1405, %v2272
    %v2602 = vadd.f32 %v1408, %v2275
    %v2603 = vadd.f32 %v1411, %v2278
    %v2604 = vadd.f32 %v1414, %v2281
    %v2605 = vadd.f32 %v1417, %v2284
    %v2606 = vadd.f32 %v1420, %v2287
    %v2607 = vadd.f32 %v1423, %v2290
    %v2608 = vadd.f32 %v1426, %v2293
    %v2609 = vadd.f32 %v1429, %v2296
    %v2610 = vadd.f32 %v1432, %v2299
    %v2611 = vadd.f32 %v1435, %v2302
    %v2612 = vadd.f32 %v1438, %v2305
    %v2613 = vadd.f32 %v1441, %v2308
    %v2614 = vadd.f32 %v1444, %v2311
    %v2615 = vadd.f32 %v1447, %v2314
    %v2616 = vadd.f32 %v1450, %v2317
    %v2617 = vadd.f32 %v1453, %v2320
    %v2618 = vadd.f32 %v1456, %v2323
    %v2619 = vadd.f32 %v1459, %v2326
    %v2620 = vadd.f32 %v1462, %v2329
    %v2621 = vadd.f32 %v1465, %v2332
    %v2622 = vadd.f32 %v1468, %v2335
    %v2623 = vadd.f32 %v1471, %v2338
    %v2624 = vadd.f32 %v1474, %v2341
    %v2625 = vadd.f32 %v1477, %v2344
    %v2626 = vadd.f32 %v1480, %v2347
    %v2627 = vadd.f32 %v1483, %v2350
    %v2628 = vadd.f32 %v1486, %v2353
    %v2629 = vadd.f32 %v1489, %v2356
    %v2630 = vadd.f32 %v1492, %v2359
    %v2631 = vadd.f32 %v1495, %v2362
    %v2632 = vadd.f32 %v1498, %v2365
    %v2633 = vadd.f32 %v1501, %v2368
    %v2634 = vadd.f32 %v1504, %v2371
    %v2635 = vadd.f32 %v1507, %v2374
    %v2636 = vadd.f32 %v1510, %v2377
    %v2637 = vadd.f32 %v1513, %v2380
    %v2638 = vadd.f32 %v1516, %v2383
    %v2639 = vadd.f32 %v1519, %v2386
    %v2640 = vadd.f32 %v1522, %v2389
    %v2641 = vadd.f32 %v1525, %v2392
    %v2642 = vadd.f32 %v1528, %v2395
    %v2643 = vadd.f32 %v1531, %v2398
    %v2644 = vadd.f32 %v1534, %v2401
    %v2645 = vadd.f32 %v1537, %v2404
    %v2646 = vadd.f32 %v1540, %v2407
    %v2647 = vadd.f32 %v1543, %v2410
    %v2648 = vadd.f32 %v1546, %v2413
    %v2649 = vadd.f32 %v1549, %v2416
    %v2650 = vadd.f32 %v1552, %v2419
    %v2651 = vadd.f32 %v1555, %v2422
    %v2652 = vadd.f32 %v1558, %v2425
    %v2653 = vadd.f32 %v1561, %v2428
    %v2654 = vadd.f32 %v1564, %v2431
    %v2655 = vadd.f32 %v1567, %v2434
    %v2656 = vadd.f32 %v1570, %v2437
    %v2657 = vadd.f32 %v1573, %v2440
    %v2658 = vadd.f32 %v1576, %v2443
    %v2659 = vadd.f32 %v1579, %v2446
    %v2660 = vadd.f32 %v1582, %v2449
    %v2661 = vadd.f32 %v1585, %v2452
    %v2662 = vadd.f32 %v1588, %v2455
    %v2663 = vadd.f32 %v1591, %v2458
    %v2664 = vadd.f32 %v1594, %v2461
    %v2665 = vadd.f32 %v1597, %v2464
    %v2666 = vadd.f32 %v1600, %v2467
    %v2667 = vadd.f32 %v1603, %v2470
    %v2668 = vadd.f32 %v1606, %v2473
    %v2669 = vadd.f32 %v1609, %v2476
    %v2670 = vadd.f32 %v1612, %v2479
    %v2671 = vadd.f32 %v1615, %v2482
    %v2672 = vadd.f32 %v1618, %v2485
    %v2673 = vadd.f32 %v1621, %v2488
    %v2674 = vadd.f32 %v1624, %v2491
    %v2675 = vadd.f32 %v1627, %v2494
    %v2676 = vadd.f32 %v1630, %v2497
    %v2677 = vadd.f32 %v1633, %v2500
    %v2678 = vadd.f32 %v1636, %v2503
    %v2679 = vadd.f32 %v1639, %v2506
    %v2680 = vadd.f32 %v1642, %v2509
    %v2681 = vadd.f32 %v1645, %v2512
    %v2682 = vadd.f32 %v1648, %v2515
    %v2683 = vadd.f32 %v1651, %v2518
    %v2684 = vadd.f32 %v1654, %v2521
    %v2685 = vadd.f32 %v1657, %v2524
    %v2686 = vadd.f32 %v1660, %v2527
    %v2687 = vadd.f32 %v1663, %v2530
    %v2688 = vadd.f32 %v1666, %v2533
    %v2689 = vadd.f32 %v1669, %v2536
    %v2690 = vadd.f32 %v1672, %v2539
    %v2691 = vadd.f32 %v1675, %v2542
    %v2692 = vadd.f32 %v1678, %v2545
    %v2693 = vadd.f32 %v1681, %v2548
    %v2694 = vadd.f32 %v1684, %v2551
    %v2695 = vadd.f32 %v1687, %v2554
    %v2696 = vadd.f32 %v1690, %v2557
    %v2697 = vadd.f32 %v1693, %v2560
    %v2698 = vadd.f32 %v1696, %v2563
    %v2699 = vadd.f32 %v1699, %v2566
    %v2700 = vadd.f32 %v1702, %v2569
    %v2701 = vadd.f32 %v1705, %v2572
    %s2702 = scalar_lea.vmem %s1, 384
    %v2703 = vld [vmem:[%s2702] sm:$0xff]
    %v2704 = vld [vmem:[%s2702 + $0x8] sm:$0xff]
    %v2705 = vld [vmem:[%s2702 + $0x10] sm:$0xff]
    %v2706 = vld [vmem:[%s2702 + $0x18] sm:$0xff]
    %v2707 = vld [vmem:[%s2702 + $0x20] sm:$0xff]
    %v2708 = vld [vmem:[%s2702 + $0x28] sm:$0xff]
    %v2709 = vld [vmem:[%s2702 + $0x30] sm:$0xff]
    %v2710 = vld [vmem:[%s2702 + $0x38] sm:$0xff]
    %v2711 = vld [vmem:[%s2702 + $0x40] sm:$0xff]
    %v2712 = vld [vmem:[%s2702 + $0x48] sm:$0xff]
    %v2713 = vld [vmem:[%s2702 + $0x50] sm:$0xff]
    %v2714 = vld [vmem:[%s2702 + $0x58] sm:$0xff]
    %v2715 = vld [vmem:[%s2702 + $0x60] sm:$0xff]
    %v2716 = vld [vmem:[%s2702 + $0x68] sm:$0xff]
    %v2717 = vld [vmem:[%s2702 + $0x70] sm:$0xff]
    %v2718 = vld [vmem:[%s2702 + $0x78] sm:$0xff]
    %2719 = vmatpush.msra.mxu0 %v2718
    %2720 = vmatpush.msra.mxu0 %v2717
    %2721 = vmatpush.msra.mxu0 %v2716
    %2722 = vmatpush.msra.mxu0 %v2715
    %2723 = vmatpush.msra.mxu0 %v2714
    %2724 = vmatpush.msra.mxu0 %v2713
    %2725 = vmatpush.msra.mxu0 %v2712
    %2726 = vmatpush.msra.mxu0 %v2711
    %2727 = vmatpush.msra.mxu0 %v2710
    %2728 = vmatpush.msra.mxu0 %v2709
    %2729 = vmatpush.msra.mxu0 %v2708
    %2730 = vmatpush.msra.mxu0 %v2707
    %2731 = vmatpush.msra.mxu0 %v2706
    %2732 = vmatpush.msra.mxu0 %v2705
    %2733 = vmatpush.msra.mxu0 %v2704
    %2734 = vmatpush.msra.mxu0 %v2703
    %2735 = vmatmul.f32.gmra.mxu0 %v18
    %v2736 = vpop.f32.mrf.mxu0
    %v2737 = vadd.f32 0.0, %v2736
    %2738 = vmatmul.f32.gmra.mxu0 %v19
    %v2739 = vpop.f32.mrf.mxu0
    %v2740 = vadd.f32 0.0, %v2739
    %2741 = vmatmul.f32.gmra.mxu0 %v21
    %v2742 = vpop.f32.mrf.mxu0
    %v2743 = vadd.f32 0.0, %v2742
    %2744 = vmatmul.f32.gmra.mxu0 %v22
    %v2745 = vpop.f32.mrf.mxu0
    %v2746 = vadd.f32 0.0, %v2745
    %2747 = vmatmul.f32.gmra.mxu0 %v24
    %v2748 = vpop.f32.mrf.mxu0
    %v2749 = vadd.f32 0.0, %v2748
    %2750 = vmatmul.f32.gmra.mxu0 %v25
    %v2751 = vpop.f32.mrf.mxu0
    %v2752 = vadd.f32 0.0, %v2751
    %2753 = vmatmul.f32.gmra.mxu0 %v27
    %v2754 = vpop.f32.mrf.mxu0
    %v2755 = vadd.f32 0.0, %v2754
    %2756 = vmatmul.f32.gmra.mxu0 %v28
    %v2757 = vpop.f32.mrf.mxu0
    %v2758 = vadd.f32 0.0, %v2757
    %2759 = vmatmul.f32.gmra.mxu0 %v30
    %v2760 = vpop.f32.mrf.mxu0
    %v2761 = vadd.f32 0.0, %v2760
    %2762 = vmatmul.f32.gmra.mxu0 %v31
    %v2763 = vpop.f32.mrf.mxu0
    %v2764 = vadd.f32 0.0, %v2763
    %2765 = vmatmul.f32.gmra.mxu0 %v33
    %v2766 = vpop.f32.mrf.mxu0
    %v2767 = vadd.f32 0.0, %v2766
    %2768 = vmatmul.f32.gmra.mxu0 %v34
    %v2769 = vpop.f32.mrf.mxu0
    %v2770 = vadd.f32 0.0, %v2769
    %2771 = vmatmul.f32.gmra.mxu0 %v36
    %v2772 = vpop.f32.mrf.mxu0
    %v2773 = vadd.f32 0.0, %v2772
    %2774 = vmatmul.f32.gmra.mxu0 %v37
    %v2775 = vpop.f32.mrf.mxu0
    %v2776 = vadd.f32 0.0, %v2775
    %2777 = vmatmul.f32.gmra.mxu0 %v39
    %v2778 = vpop.f32.mrf.mxu0
    %v2779 = vadd.f32 0.0, %v2778
    %2780 = vmatmul.f32.gmra.mxu0 %v40
    %v2781 = vpop.f32.mrf.mxu0
    %v2782 = vadd.f32 0.0, %v2781
    %2783 = vmatmul.f32.gmra.mxu0 %v42
    %v2784 = vpop.f32.mrf.mxu0
    %v2785 = vadd.f32 0.0, %v2784
    %2786 = vmatmul.f32.gmra.mxu0 %v43
    %v2787 = vpop.f32.mrf.mxu0
    %v2788 = vadd.f32 0.0, %v2787
    %2789 = vmatmul.f32.gmra.mxu0 %v45
    %v2790 = vpop.f32.mrf.mxu0
    %v2791 = vadd.f32 0.0, %v2790
    %2792 = vmatmul.f32.gmra.mxu0 %v46
    %v2793 = vpop.f32.mrf.mxu0
    %v2794 = vadd.f32 0.0, %v2793
    %2795 = vmatmul.f32.gmra.mxu0 %v48
    %v2796 = vpop.f32.mrf.mxu0
    %v2797 = vadd.f32 0.0, %v2796
    %2798 = vmatmul.f32.gmra.mxu0 %v49
    %v2799 = vpop.f32.mrf.mxu0
    %v2800 = vadd.f32 0.0, %v2799
    %2801 = vmatmul.f32.gmra.mxu0 %v51
    %v2802 = vpop.f32.mrf.mxu0
    %v2803 = vadd.f32 0.0, %v2802
    %2804 = vmatmul.f32.gmra.mxu0 %v52
    %v2805 = vpop.f32.mrf.mxu0
    %v2806 = vadd.f32 0.0, %v2805
    %2807 = vmatmul.f32.gmra.mxu0 %v54
    %v2808 = vpop.f32.mrf.mxu0
    %v2809 = vadd.f32 0.0, %v2808
    %2810 = vmatmul.f32.gmra.mxu0 %v55
    %v2811 = vpop.f32.mrf.mxu0
    %v2812 = vadd.f32 0.0, %v2811
    %2813 = vmatmul.f32.gmra.mxu0 %v57
    %v2814 = vpop.f32.mrf.mxu0
    %v2815 = vadd.f32 0.0, %v2814
    %2816 = vmatmul.f32.gmra.mxu0 %v58
    %v2817 = vpop.f32.mrf.mxu0
    %v2818 = vadd.f32 0.0, %v2817
    %2819 = vmatmul.f32.gmra.mxu0 %v60
    %v2820 = vpop.f32.mrf.mxu0
    %v2821 = vadd.f32 0.0, %v2820
    %2822 = vmatmul.f32.gmra.mxu0 %v61
    %v2823 = vpop.f32.mrf.mxu0
    %v2824 = vadd.f32 0.0, %v2823
    %2825 = vmatmul.f32.gmra.mxu0 %v63
    %v2826 = vpop.f32.mrf.mxu0
    %v2827 = vadd.f32 0.0, %v2826
    %2828 = vmatmul.f32.gmra.mxu0 %v64
    %v2829 = vpop.f32.mrf.mxu0
    %v2830 = vadd.f32 0.0, %v2829
    %2831 = vmatmul.f32.gmra.mxu0 %v72
    %v2832 = vpop.f32.mrf.mxu0
    %v2833 = vadd.f32 0.0, %v2832
    %2834 = vmatmul.f32.gmra.mxu0 %v73
    %v2835 = vpop.f32.mrf.mxu0
    %v2836 = vadd.f32 0.0, %v2835
    %2837 = vmatmul.f32.gmra.mxu0 %v75
    %v2838 = vpop.f32.mrf.mxu0
    %v2839 = vadd.f32 0.0, %v2838
    %2840 = vmatmul.f32.gmra.mxu0 %v76
    %v2841 = vpop.f32.mrf.mxu0
    %v2842 = vadd.f32 0.0, %v2841
    %2843 = vmatmul.f32.gmra.mxu0 %v78
    %v2844 = vpop.f32.mrf.mxu0
    %v2845 = vadd.f32 0.0, %v2844
    %2846 = vmatmul.f32.gmra.mxu0 %v79
    %v2847 = vpop.f32.mrf.mxu0
    %v2848 = vadd.f32 0.0, %v2847
    %2849 = vmatmul.f32.gmra.mxu0 %v81
    %v2850 = vpop.f32.mrf.mxu0
    %v2851 = vadd.f32 0.0, %v2850
    %2852 = vmatmul.f32.gmra.mxu0 %v82
    %v2853 = vpop.f32.mrf.mxu0
    %v2854 = vadd.f32 0.0, %v2853
    %2855 = vmatmul.f32.gmra.mxu0 %v84
    %v2856 = vpop.f32.mrf.mxu0
    %v2857 = vadd.f32 0.0, %v2856
    %2858 = vmatmul.f32.gmra.mxu0 %v85
    %v2859 = vpop.f32.mrf.mxu0
    %v2860 = vadd.f32 0.0, %v2859
    %2861 = vmatmul.f32.gmra.mxu0 %v87
    %v2862 = vpop.f32.mrf.mxu0
    %v2863 = vadd.f32 0.0, %v2862
    %2864 = vmatmul.f32.gmra.mxu0 %v88
    %v2865 = vpop.f32.mrf.mxu0
    %v2866 = vadd.f32 0.0, %v2865
    %2867 = vmatmul.f32.gmra.mxu0 %v90
    %v2868 = vpop.f32.mrf.mxu0
    %v2869 = vadd.f32 0.0, %v2868
    %2870 = vmatmul.f32.gmra.mxu0 %v91
    %v2871 = vpop.f32.mrf.mxu0
    %v2872 = vadd.f32 0.0, %v2871
    %2873 = vmatmul.f32.gmra.mxu0 %v93
    %v2874 = vpop.f32.mrf.mxu0
    %v2875 = vadd.f32 0.0, %v2874
    %2876 = vmatmul.f32.gmra.mxu0 %v94
    %v2877 = vpop.f32.mrf.mxu0
    %v2878 = vadd.f32 0.0, %v2877
    %2879 = vmatmul.f32.gmra.mxu0 %v96
    %v2880 = vpop.f32.mrf.mxu0
    %v2881 = vadd.f32 0.0, %v2880
    %2882 = vmatmul.f32.gmra.mxu0 %v97
    %v2883 = vpop.f32.mrf.mxu0
    %v2884 = vadd.f32 0.0, %v2883
    %2885 = vmatmul.f32.gmra.mxu0 %v99
    %v2886 = vpop.f32.mrf.mxu0
    %v2887 = vadd.f32 0.0, %v2886
    %2888 = vmatmul.f32.gmra.mxu0 %v100
    %v2889 = vpop.f32.mrf.mxu0
    %v2890 = vadd.f32 0.0, %v2889
    %2891 = vmatmul.f32.gmra.mxu0 %v102
    %v2892 = vpop.f32.mrf.mxu0
    %v2893 = vadd.f32 0.0, %v2892
    %2894 = vmatmul.f32.gmra.mxu0 %v103
    %v2895 = vpop.f32.mrf.mxu0
    %v2896 = vadd.f32 0.0, %v2895
    %2897 = vmatmul.f32.gmra.mxu0 %v105
    %v2898 = vpop.f32.mrf.mxu0
    %v2899 = vadd.f32 0.0, %v2898
    %2900 = vmatmul.f32.gmra.mxu0 %v106
    %v2901 = vpop.f32.mrf.mxu0
    %v2902 = vadd.f32 0.0, %v2901
    %2903 = vmatmul.f32.gmra.mxu0 %v108
    %v2904 = vpop.f32.mrf.mxu0
    %v2905 = vadd.f32 0.0, %v2904
    %2906 = vmatmul.f32.gmra.mxu0 %v109
    %v2907 = vpop.f32.mrf.mxu0
    %v2908 = vadd.f32 0.0, %v2907
    %2909 = vmatmul.f32.gmra.mxu0 %v111
    %v2910 = vpop.f32.mrf.mxu0
    %v2911 = vadd.f32 0.0, %v2910
    %2912 = vmatmul.f32.gmra.mxu0 %v112
    %v2913 = vpop.f32.mrf.mxu0
    %v2914 = vadd.f32 0.0, %v2913
    %2915 = vmatmul.f32.gmra.mxu0 %v114
    %v2916 = vpop.f32.mrf.mxu0
    %v2917 = vadd.f32 0.0, %v2916
    %2918 = vmatmul.f32.gmra.mxu0 %v115
    %v2919 = vpop.f32.mrf.mxu0
    %v2920 = vadd.f32 0.0, %v2919
    %2921 = vmatmul.f32.gmra.mxu0 %v117
    %v2922 = vpop.f32.mrf.mxu0
    %v2923 = vadd.f32 0.0, %v2922
    %2924 = vmatmul.f32.gmra.mxu0 %v118
    %v2925 = vpop.f32.mrf.mxu0
    %v2926 = vadd.f32 0.0, %v2925
    %2927 = vmatmul.f32.gmra.mxu0 %v126
    %v2928 = vpop.f32.mrf.mxu0
    %v2929 = vadd.f32 0.0, %v2928
    %2930 = vmatmul.f32.gmra.mxu0 %v127
    %v2931 = vpop.f32.mrf.mxu0
    %v2932 = vadd.f32 0.0, %v2931
    %2933 = vmatmul.f32.gmra.mxu0 %v129
    %v2934 = vpop.f32.mrf.mxu0
    %v2935 = vadd.f32 0.0, %v2934
    %2936 = vmatmul.f32.gmra.mxu0 %v130
    %v2937 = vpop.f32.mrf.mxu0
    %v2938 = vadd.f32 0.0, %v2937
    %2939 = vmatmul.f32.gmra.mxu0 %v132
    %v2940 = vpop.f32.mrf.mxu0
    %v2941 = vadd.f32 0.0, %v2940
    %2942 = vmatmul.f32.gmra.mxu0 %v133
    %v2943 = vpop.f32.mrf.mxu0
    %v2944 = vadd.f32 0.0, %v2943
    %2945 = vmatmul.f32.gmra.mxu0 %v135
    %v2946 = vpop.f32.mrf.mxu0
    %v2947 = vadd.f32 0.0, %v2946
    %2948 = vmatmul.f32.gmra.mxu0 %v136
    %v2949 = vpop.f32.mrf.mxu0
    %v2950 = vadd.f32 0.0, %v2949
    %2951 = vmatmul.f32.gmra.mxu0 %v138
    %v2952 = vpop.f32.mrf.mxu0
    %v2953 = vadd.f32 0.0, %v2952
    %2954 = vmatmul.f32.gmra.mxu0 %v139
    %v2955 = vpop.f32.mrf.mxu0
    %v2956 = vadd.f32 0.0, %v2955
    %2957 = vmatmul.f32.gmra.mxu0 %v141
    %v2958 = vpop.f32.mrf.mxu0
    %v2959 = vadd.f32 0.0, %v2958
    %2960 = vmatmul.f32.gmra.mxu0 %v142
    %v2961 = vpop.f32.mrf.mxu0
    %v2962 = vadd.f32 0.0, %v2961
    %2963 = vmatmul.f32.gmra.mxu0 %v144
    %v2964 = vpop.f32.mrf.mxu0
    %v2965 = vadd.f32 0.0, %v2964
    %2966 = vmatmul.f32.gmra.mxu0 %v145
    %v2967 = vpop.f32.mrf.mxu0
    %v2968 = vadd.f32 0.0, %v2967
    %2969 = vmatmul.f32.gmra.mxu0 %v147
    %v2970 = vpop.f32.mrf.mxu0
    %v2971 = vadd.f32 0.0, %v2970
    %2972 = vmatmul.f32.gmra.mxu0 %v148
    %v2973 = vpop.f32.mrf.mxu0
    %v2974 = vadd.f32 0.0, %v2973
    %2975 = vmatmul.f32.gmra.mxu0 %v150
    %v2976 = vpop.f32.mrf.mxu0
    %v2977 = vadd.f32 0.0, %v2976
    %2978 = vmatmul.f32.gmra.mxu0 %v151
    %v2979 = vpop.f32.mrf.mxu0
    %v2980 = vadd.f32 0.0, %v2979
    %2981 = vmatmul.f32.gmra.mxu0 %v153
    %v2982 = vpop.f32.mrf.mxu0
    %v2983 = vadd.f32 0.0, %v2982
    %2984 = vmatmul.f32.gmra.mxu0 %v154
    %v2985 = vpop.f32.mrf.mxu0
    %v2986 = vadd.f32 0.0, %v2985
    %2987 = vmatmul.f32.gmra.mxu0 %v156
    %v2988 = vpop.f32.mrf.mxu0
    %v2989 = vadd.f32 0.0, %v2988
    %2990 = vmatmul.f32.gmra.mxu0 %v157
    %v2991 = vpop.f32.mrf.mxu0
    %v2992 = vadd.f32 0.0, %v2991
    %2993 = vmatmul.f32.gmra.mxu0 %v159
    %v2994 = vpop.f32.mrf.mxu0
    %v2995 = vadd.f32 0.0, %v2994
    %2996 = vmatmul.f32.gmra.mxu0 %v160
    %v2997 = vpop.f32.mrf.mxu0
    %v2998 = vadd.f32 0.0, %v2997
    %2999 = vmatmul.f32.gmra.mxu0 %v162
    %v3000 = vpop.f32.mrf.mxu0
    %v3001 = vadd.f32 0.0, %v3000
    %3002 = vmatmul.f32.gmra.mxu0 %v163
    %v3003 = vpop.f32.mrf.mxu0
    %v3004 = vadd.f32 0.0, %v3003
    %3005 = vmatmul.f32.gmra.mxu0 %v165
    %v3006 = vpop.f32.mrf.mxu0
    %v3007 = vadd.f32 0.0, %v3006
    %3008 = vmatmul.f32.gmra.mxu0 %v166
    %v3009 = vpop.f32.mrf.mxu0
    %v3010 = vadd.f32 0.0, %v3009
    %3011 = vmatmul.f32.gmra.mxu0 %v168
    %v3012 = vpop.f32.mrf.mxu0
    %v3013 = vadd.f32 0.0, %v3012
    %3014 = vmatmul.f32.gmra.mxu0 %v169
    %v3015 = vpop.f32.mrf.mxu0
    %v3016 = vadd.f32 0.0, %v3015
    %3017 = vmatmul.f32.gmra.mxu0 %v171
    %v3018 = vpop.f32.mrf.mxu0
    %v3019 = vadd.f32 0.0, %v3018
    %3020 = vmatmul.f32.gmra.mxu0 %v172
    %v3021 = vpop.f32.mrf.mxu0
    %v3022 = vadd.f32 0.0, %v3021
    %3023 = vmatmul.f32.gmra.mxu0 %v180
    %v3024 = vpop.f32.mrf.mxu0
    %v3025 = vadd.f32 0.0, %v3024
    %3026 = vmatmul.f32.gmra.mxu0 %v181
    %v3027 = vpop.f32.mrf.mxu0
    %v3028 = vadd.f32 0.0, %v3027
    %3029 = vmatmul.f32.gmra.mxu0 %v183
    %v3030 = vpop.f32.mrf.mxu0
    %v3031 = vadd.f32 0.0, %v3030
    %3032 = vmatmul.f32.gmra.mxu0 %v184
    %v3033 = vpop.f32.mrf.mxu0
    %v3034 = vadd.f32 0.0, %v3033
    %3035 = vmatmul.f32.gmra.mxu0 %v186
    %v3036 = vpop.f32.mrf.mxu0
    %v3037 = vadd.f32 0.0, %v3036
    %3038 = vmatmul.f32.gmra.mxu0 %v187
    %v3039 = vpop.f32.mrf.mxu0
    %v3040 = vadd.f32 0.0, %v3039
    %3041 = vmatmul.f32.gmra.mxu0 %v189
    %v3042 = vpop.f32.mrf.mxu0
    %v3043 = vadd.f32 0.0, %v3042
    %3044 = vmatmul.f32.gmra.mxu0 %v190
    %v3045 = vpop.f32.mrf.mxu0
    %v3046 = vadd.f32 0.0, %v3045
    %3047 = vmatmul.f32.gmra.mxu0 %v192
    %v3048 = vpop.f32.mrf.mxu0
    %v3049 = vadd.f32 0.0, %v3048
    %3050 = vmatmul.f32.gmra.mxu0 %v193
    %v3051 = vpop.f32.mrf.mxu0
    %v3052 = vadd.f32 0.0, %v3051
    %3053 = vmatmul.f32.gmra.mxu0 %v195
    %v3054 = vpop.f32.mrf.mxu0
    %v3055 = vadd.f32 0.0, %v3054
    %3056 = vmatmul.f32.gmra.mxu0 %v196
    %v3057 = vpop.f32.mrf.mxu0
    %v3058 = vadd.f32 0.0, %v3057
    %3059 = vmatmul.f32.gmra.mxu0 %v198
    %v3060 = vpop.f32.mrf.mxu0
    %v3061 = vadd.f32 0.0, %v3060
    %3062 = vmatmul.f32.gmra.mxu0 %v199
    %v3063 = vpop.f32.mrf.mxu0
    %v3064 = vadd.f32 0.0, %v3063
    %3065 = vmatmul.f32.gmra.mxu0 %v201
    %v3066 = vpop.f32.mrf.mxu0
    %v3067 = vadd.f32 0.0, %v3066
    %3068 = vmatmul.f32.gmra.mxu0 %v202
    %v3069 = vpop.f32.mrf.mxu0
    %v3070 = vadd.f32 0.0, %v3069
    %3071 = vmatmul.f32.gmra.mxu0 %v204
    %v3072 = vpop.f32.mrf.mxu0
    %v3073 = vadd.f32 0.0, %v3072
    %3074 = vmatmul.f32.gmra.mxu0 %v205
    %v3075 = vpop.f32.mrf.mxu0
    %v3076 = vadd.f32 0.0, %v3075
    %3077 = vmatmul.f32.gmra.mxu0 %v207
    %v3078 = vpop.f32.mrf.mxu0
    %v3079 = vadd.f32 0.0, %v3078
    %3080 = vmatmul.f32.gmra.mxu0 %v208
    %v3081 = vpop.f32.mrf.mxu0
    %v3082 = vadd.f32 0.0, %v3081
    %3083 = vmatmul.f32.gmra.mxu0 %v210
    %v3084 = vpop.f32.mrf.mxu0
    %v3085 = vadd.f32 0.0, %v3084
    %3086 = vmatmul.f32.gmra.mxu0 %v211
    %v3087 = vpop.f32.mrf.mxu0
    %v3088 = vadd.f32 0.0, %v3087
    %3089 = vmatmul.f32.gmra.mxu0 %v213
    %v3090 = vpop.f32.mrf.mxu0
    %v3091 = vadd.f32 0.0, %v3090
    %3092 = vmatmul.f32.gmra.mxu0 %v214
    %v3093 = vpop.f32.mrf.mxu0
    %v3094 = vadd.f32 0.0, %v3093
    %3095 = vmatmul.f32.gmra.mxu0 %v216
    %v3096 = vpop.f32.mrf.mxu0
    %v3097 = vadd.f32 0.0, %v3096
    %3098 = vmatmul.f32.gmra.mxu0 %v217
    %v3099 = vpop.f32.mrf.mxu0
    %v3100 = vadd.f32 0.0, %v3099
    %3101 = vmatmul.f32.gmra.mxu0 %v219
    %v3102 = vpop.f32.mrf.mxu0
    %v3103 = vadd.f32 0.0, %v3102
    %3104 = vmatmul.f32.gmra.mxu0 %v220
    %v3105 = vpop.f32.mrf.mxu0
    %v3106 = vadd.f32 0.0, %v3105
    %3107 = vmatmul.f32.gmra.mxu0 %v222
    %v3108 = vpop.f32.mrf.mxu0
    %v3109 = vadd.f32 0.0, %v3108
    %3110 = vmatmul.f32.gmra.mxu0 %v223
    %v3111 = vpop.f32.mrf.mxu0
    %v3112 = vadd.f32 0.0, %v3111
    %3113 = vmatmul.f32.gmra.mxu0 %v225
    %v3114 = vpop.f32.mrf.mxu0
    %v3115 = vadd.f32 0.0, %v3114
    %3116 = vmatmul.f32.gmra.mxu0 %v226
    %v3117 = vpop.f32.mrf.mxu0
    %v3118 = vadd.f32 0.0, %v3117
    %3119 = vdwg.mxu0
    %v3120 = vadd.f32 %v2574, %v2737
    %v3121 = vadd.f32 %v2575, %v2740
    %v3122 = vadd.f32 %v2576, %v2743
    %v3123 = vadd.f32 %v2577, %v2746
    %v3124 = vadd.f32 %v2578, %v2749
    %v3125 = vadd.f32 %v2579, %v2752
    %v3126 = vadd.f32 %v2580, %v2755
    %v3127 = vadd.f32 %v2581, %v2758
    %v3128 = vadd.f32 %v2582, %v2761
    %v3129 = vadd.f32 %v2583, %v2764
    %v3130 = vadd.f32 %v2584, %v2767
    %v3131 = vadd.f32 %v2585, %v2770
    %v3132 = vadd.f32 %v2586, %v2773
    %v3133 = vadd.f32 %v2587, %v2776
    %v3134 = vadd.f32 %v2588, %v2779
    %v3135 = vadd.f32 %v2589, %v2782
    %v3136 = vadd.f32 %v2590, %v2785
    %v3137 = vadd.f32 %v2591, %v2788
    %v3138 = vadd.f32 %v2592, %v2791
    %v3139 = vadd.f32 %v2593, %v2794
    %v3140 = vadd.f32 %v2594, %v2797
    %v3141 = vadd.f32 %v2595, %v2800
    %v3142 = vadd.f32 %v2596, %v2803
    %v3143 = vadd.f32 %v2597, %v2806
    %v3144 = vadd.f32 %v2598, %v2809
    %v3145 = vadd.f32 %v2599, %v2812
    %v3146 = vadd.f32 %v2600, %v2815
    %v3147 = vadd.f32 %v2601, %v2818
    %v3148 = vadd.f32 %v2602, %v2821
    %v3149 = vadd.f32 %v2603, %v2824
    %v3150 = vadd.f32 %v2604, %v2827
    %v3151 = vadd.f32 %v2605, %v2830
    %v3152 = vadd.f32 %v2606, %v2833
    %v3153 = vadd.f32 %v2607, %v2836
    %v3154 = vadd.f32 %v2608, %v2839
    %v3155 = vadd.f32 %v2609, %v2842
    %v3156 = vadd.f32 %v2610, %v2845
    %v3157 = vadd.f32 %v2611, %v2848
    %v3158 = vadd.f32 %v2612, %v2851
    %v3159 = vadd.f32 %v2613, %v2854
    %v3160 = vadd.f32 %v2614, %v2857
    %v3161 = vadd.f32 %v2615, %v2860
    %v3162 = vadd.f32 %v2616, %v2863
    %v3163 = vadd.f32 %v2617, %v2866
    %v3164 = vadd.f32 %v2618, %v2869
    %v3165 = vadd.f32 %v2619, %v2872
    %v3166 = vadd.f32 %v2620, %v2875
    %v3167 = vadd.f32 %v2621, %v2878
    %v3168 = vadd.f32 %v2622, %v2881
    %v3169 = vadd.f32 %v2623, %v2884
    %v3170 = vadd.f32 %v2624, %v2887
    %v3171 = vadd.f32 %v2625, %v2890
    %v3172 = vadd.f32 %v2626, %v2893
    %v3173 = vadd.f32 %v2627, %v2896
    %v3174 = vadd.f32 %v2628, %v2899
    %v3175 = vadd.f32 %v2629, %v2902
    %v3176 = vadd.f32 %v2630, %v2905
    %v3177 = vadd.f32 %v2631, %v2908
    %v3178 = vadd.f32 %v2632, %v2911
    %v3179 = vadd.f32 %v2633, %v2914
    %v3180 = vadd.f32 %v2634, %v2917
    %v3181 = vadd.f32 %v2635, %v2920
    %v3182 = vadd.f32 %v2636, %v2923
    %v3183 = vadd.f32 %v2637, %v2926
    %v3184 = vadd.f32 %v2638, %v2929
    %v3185 = vadd.f32 %v2639, %v2932
    %v3186 = vadd.f32 %v2640, %v2935
    %v3187 = vadd.f32 %v2641, %v2938
    %v3188 = vadd.f32 %v2642, %v2941
    %v3189 = vadd.f32 %v2643, %v2944
    %v3190 = vadd.f32 %v2644, %v2947
    %v3191 = vadd.f32 %v2645, %v2950
    %v3192 = vadd.f32 %v2646, %v2953
    %v3193 = vadd.f32 %v2647, %v2956
    %v3194 = vadd.f32 %v2648, %v2959
    %v3195 = vadd.f32 %v2649, %v2962
    %v3196 = vadd.f32 %v2650, %v2965
    %v3197 = vadd.f32 %v2651, %v2968
    %v3198 = vadd.f32 %v2652, %v2971
    %v3199 = vadd.f32 %v2653, %v2974
    %v3200 = vadd.f32 %v2654, %v2977
    %v3201 = vadd.f32 %v2655, %v2980
    %v3202 = vadd.f32 %v2656, %v2983
    %v3203 = vadd.f32 %v2657, %v2986
    %v3204 = vadd.f32 %v2658, %v2989
    %v3205 = vadd.f32 %v2659, %v2992
    %v3206 = vadd.f32 %v2660, %v2995
    %v3207 = vadd.f32 %v2661, %v2998
    %v3208 = vadd.f32 %v2662, %v3001
    %v3209 = vadd.f32 %v2663, %v3004
    %v3210 = vadd.f32 %v2664, %v3007
    %v3211 = vadd.f32 %v2665, %v3010
    %v3212 = vadd.f32 %v2666, %v3013
    %v3213 = vadd.f32 %v2667, %v3016
    %v3214 = vadd.f32 %v2668, %v3019
    %v3215 = vadd.f32 %v2669, %v3022
    %v3216 = vadd.f32 %v2670, %v3025
    %v3217 = vadd.f32 %v2671, %v3028
    %v3218 = vadd.f32 %v2672, %v3031
    %v3219 = vadd.f32 %v2673, %v3034
    %v3220 = vadd.f32 %v2674, %v3037
    %v3221 = vadd.f32 %v2675, %v3040
    %v3222 = vadd.f32 %v2676, %v3043
    %v3223 = vadd.f32 %v2677, %v3046
    %v3224 = vadd.f32 %v2678, %v3049
    %v3225 = vadd.f32 %v2679, %v3052
    %v3226 = vadd.f32 %v2680, %v3055
    %v3227 = vadd.f32 %v2681, %v3058
    %v3228 = vadd.f32 %v2682, %v3061
    %v3229 = vadd.f32 %v2683, %v3064
    %v3230 = vadd.f32 %v2684, %v3067
    %v3231 = vadd.f32 %v2685, %v3070
    %v3232 = vadd.f32 %v2686, %v3073
    %v3233 = vadd.f32 %v2687, %v3076
    %v3234 = vadd.f32 %v2688, %v3079
    %v3235 = vadd.f32 %v2689, %v3082
    %v3236 = vadd.f32 %v2690, %v3085
    %v3237 = vadd.f32 %v2691, %v3088
    %v3238 = vadd.f32 %v2692, %v3091
    %v3239 = vadd.f32 %v2693, %v3094
    %v3240 = vadd.f32 %v2694, %v3097
    %v3241 = vadd.f32 %v2695, %v3100
    %v3242 = vadd.f32 %v2696, %v3103
    %v3243 = vadd.f32 %v2697, %v3106
    %v3244 = vadd.f32 %v2698, %v3109
    %v3245 = vadd.f32 %v2699, %v3112
    %v3246 = vadd.f32 %v2700, %v3115
    %v3247 = vadd.f32 %v2701, %v3118
    %v3260 = vrot.slane %v63, 1
    %v3261 = vrot.slane %v64, 1
    %v3262 = vsel %vm439, %v3260, %v3261
    %v3263 = vrot.slane %v65, 1
    %v3264 = vsel %vm439, %v3261, %v3263
    %v3265 = vrot.slane %v117, 1
    %v3266 = vrot.slane %v118, 1
    %v3267 = vsel %vm439, %v3265, %v3266
    %v3268 = vrot.slane %v119, 1
    %v3269 = vsel %vm439, %v3266, %v3268
    %v3270 = vrot.slane %v171, 1
    %v3271 = vrot.slane %v172, 1
    %v3272 = vsel %vm439, %v3270, %v3271
    %v3273 = vrot.slane %v173, 1
    %v3274 = vsel %vm439, %v3271, %v3273
    %v3275 = vrot.slane %v225, 1
    %v3276 = vrot.slane %v226, 1
    %v3277 = vsel %vm439, %v3275, %v3276
    %v3278 = vrot.slane %v227, 1
    %v3279 = vsel %vm439, %v3276, %v3278
    %s3288 = scalar_lea.vmem %s1, 512
    %v3289 = vld [vmem:[%s3288] sm:$0xff]
    %v3290 = vld [vmem:[%s3288 + $0x8] sm:$0xff]
    %v3291 = vld [vmem:[%s3288 + $0x10] sm:$0xff]
    %v3292 = vld [vmem:[%s3288 + $0x18] sm:$0xff]
    %v3293 = vld [vmem:[%s3288 + $0x20] sm:$0xff]
    %v3294 = vld [vmem:[%s3288 + $0x28] sm:$0xff]
    %v3295 = vld [vmem:[%s3288 + $0x30] sm:$0xff]
    %v3296 = vld [vmem:[%s3288 + $0x38] sm:$0xff]
    %v3297 = vld [vmem:[%s3288 + $0x40] sm:$0xff]
    %v3298 = vld [vmem:[%s3288 + $0x48] sm:$0xff]
    %v3299 = vld [vmem:[%s3288 + $0x50] sm:$0xff]
    %v3300 = vld [vmem:[%s3288 + $0x58] sm:$0xff]
    %v3301 = vld [vmem:[%s3288 + $0x60] sm:$0xff]
    %v3302 = vld [vmem:[%s3288 + $0x68] sm:$0xff]
    %v3303 = vld [vmem:[%s3288 + $0x70] sm:$0xff]
    %v3304 = vld [vmem:[%s3288 + $0x78] sm:$0xff]
    %3305 = vmatpush.msra.mxu0 %v3304
    %3306 = vmatpush.msra.mxu0 %v3303
    %3307 = vmatpush.msra.mxu0 %v3302
    %3308 = vmatpush.msra.mxu0 %v3301
    %3309 = vmatpush.msra.mxu0 %v3300
    %3310 = vmatpush.msra.mxu0 %v3299
    %3311 = vmatpush.msra.mxu0 %v3298
    %3312 = vmatpush.msra.mxu0 %v3297
    %3313 = vmatpush.msra.mxu0 %v3296
    %3314 = vmatpush.msra.mxu0 %v3295
    %3315 = vmatpush.msra.mxu0 %v3294
    %3316 = vmatpush.msra.mxu0 %v3293
    %3317 = vmatpush.msra.mxu0 %v3292
    %3318 = vmatpush.msra.mxu0 %v3291
    %3319 = vmatpush.msra.mxu0 %v3290
    %3320 = vmatpush.msra.mxu0 %v3289
    %3321 = vmatmul.f32.gmra.mxu0 %v447
    %v3322 = vpop.f32.mrf.mxu0
    %v3323 = vadd.f32 0.0, %v3322
    %3324 = vmatmul.f32.gmra.mxu0 %v449
    %v3325 = vpop.f32.mrf.mxu0
    %v3326 = vadd.f32 0.0, %v3325
    %3327 = vmatmul.f32.gmra.mxu0 %v452
    %v3328 = vpop.f32.mrf.mxu0
    %v3329 = vadd.f32 0.0, %v3328
    %3330 = vmatmul.f32.gmra.mxu0 %v454
    %v3331 = vpop.f32.mrf.mxu0
    %v3332 = vadd.f32 0.0, %v3331
    %3333 = vmatmul.f32.gmra.mxu0 %v457
    %v3334 = vpop.f32.mrf.mxu0
    %v3335 = vadd.f32 0.0, %v3334
    %3336 = vmatmul.f32.gmra.mxu0 %v459
    %v3337 = vpop.f32.mrf.mxu0
    %v3338 = vadd.f32 0.0, %v3337
    %3339 = vmatmul.f32.gmra.mxu0 %v462
    %v3340 = vpop.f32.mrf.mxu0
    %v3341 = vadd.f32 0.0, %v3340
    %3342 = vmatmul.f32.gmra.mxu0 %v464
    %v3343 = vpop.f32.mrf.mxu0
    %v3344 = vadd.f32 0.0, %v3343
    %3345 = vmatmul.f32.gmra.mxu0 %v467
    %v3346 = vpop.f32.mrf.mxu0
    %v3347 = vadd.f32 0.0, %v3346
    %3348 = vmatmul.f32.gmra.mxu0 %v469
    %v3349 = vpop.f32.mrf.mxu0
    %v3350 = vadd.f32 0.0, %v3349
    %3351 = vmatmul.f32.gmra.mxu0 %v472
    %v3352 = vpop.f32.mrf.mxu0
    %v3353 = vadd.f32 0.0, %v3352
    %3354 = vmatmul.f32.gmra.mxu0 %v474
    %v3355 = vpop.f32.mrf.mxu0
    %v3356 = vadd.f32 0.0, %v3355
    %3357 = vmatmul.f32.gmra.mxu0 %v477
    %v3358 = vpop.f32.mrf.mxu0
    %v3359 = vadd.f32 0.0, %v3358
    %3360 = vmatmul.f32.gmra.mxu0 %v479
    %v3361 = vpop.f32.mrf.mxu0
    %v3362 = vadd.f32 0.0, %v3361
    %3363 = vmatmul.f32.gmra.mxu0 %v482
    %v3364 = vpop.f32.mrf.mxu0
    %v3365 = vadd.f32 0.0, %v3364
    %3366 = vmatmul.f32.gmra.mxu0 %v484
    %v3367 = vpop.f32.mrf.mxu0
    %v3368 = vadd.f32 0.0, %v3367
    %3369 = vmatmul.f32.gmra.mxu0 %v487
    %v3370 = vpop.f32.mrf.mxu0
    %v3371 = vadd.f32 0.0, %v3370
    %3372 = vmatmul.f32.gmra.mxu0 %v489
    %v3373 = vpop.f32.mrf.mxu0
    %v3374 = vadd.f32 0.0, %v3373
    %3375 = vmatmul.f32.gmra.mxu0 %v492
    %v3376 = vpop.f32.mrf.mxu0
    %v3377 = vadd.f32 0.0, %v3376
    %3378 = vmatmul.f32.gmra.mxu0 %v494
    %v3379 = vpop.f32.mrf.mxu0
    %v3380 = vadd.f32 0.0, %v3379
    %3381 = vmatmul.f32.gmra.mxu0 %v497
    %v3382 = vpop.f32.mrf.mxu0
    %v3383 = vadd.f32 0.0, %v3382
    %3384 = vmatmul.f32.gmra.mxu0 %v499
    %v3385 = vpop.f32.mrf.mxu0
    %v3386 = vadd.f32 0.0, %v3385
    %3387 = vmatmul.f32.gmra.mxu0 %v502
    %v3388 = vpop.f32.mrf.mxu0
    %v3389 = vadd.f32 0.0, %v3388
    %3390 = vmatmul.f32.gmra.mxu0 %v504
    %v3391 = vpop.f32.mrf.mxu0
    %v3392 = vadd.f32 0.0, %v3391
    %3393 = vmatmul.f32.gmra.mxu0 %v507
    %v3394 = vpop.f32.mrf.mxu0
    %v3395 = vadd.f32 0.0, %v3394
    %3396 = vmatmul.f32.gmra.mxu0 %v509
    %v3397 = vpop.f32.mrf.mxu0
    %v3398 = vadd.f32 0.0, %v3397
    %3399 = vmatmul.f32.gmra.mxu0 %v512
    %v3400 = vpop.f32.mrf.mxu0
    %v3401 = vadd.f32 0.0, %v3400
    %3402 = vmatmul.f32.gmra.mxu0 %v514
    %v3403 = vpop.f32.mrf.mxu0
    %v3404 = vadd.f32 0.0, %v3403
    %3405 = vmatmul.f32.gmra.mxu0 %v517
    %v3406 = vpop.f32.mrf.mxu0
    %v3407 = vadd.f32 0.0, %v3406
    %3408 = vmatmul.f32.gmra.mxu0 %v519
    %v3409 = vpop.f32.mrf.mxu0
    %v3410 = vadd.f32 0.0, %v3409
    %3411 = vmatmul.f32.gmra.mxu0 %v3262
    %v3412 = vpop.f32.mrf.mxu0
    %v3413 = vadd.f32 0.0, %v3412
    %3414 = vmatmul.f32.gmra.mxu0 %v3264
    %v3415 = vpop.f32.mrf.mxu0
    %v3416 = vadd.f32 0.0, %v3415
    %3417 = vmatmul.f32.gmra.mxu0 %v527
    %v3418 = vpop.f32.mrf.mxu0
    %v3419 = vadd.f32 0.0, %v3418
    %3420 = vmatmul.f32.gmra.mxu0 %v529
    %v3421 = vpop.f32.mrf.mxu0
    %v3422 = vadd.f32 0.0, %v3421
    %3423 = vmatmul.f32.gmra.mxu0 %v532
    %v3424 = vpop.f32.mrf.mxu0
    %v3425 = vadd.f32 0.0, %v3424
    %3426 = vmatmul.f32.gmra.mxu0 %v534
    %v3427 = vpop.f32.mrf.mxu0
    %v3428 = vadd.f32 0.0, %v3427
    %3429 = vmatmul.f32.gmra.mxu0 %v537
    %v3430 = vpop.f32.mrf.mxu0
    %v3431 = vadd.f32 0.0, %v3430
    %3432 = vmatmul.f32.gmra.mxu0 %v539
    %v3433 = vpop.f32.mrf.mxu0
    %v3434 = vadd.f32 0.0, %v3433
    %3435 = vmatmul.f32.gmra.mxu0 %v542
    %v3436 = vpop.f32.mrf.mxu0
    %v3437 = vadd.f32 0.0, %v3436
    %3438 = vmatmul.f32.gmra.mxu0 %v544
    %v3439 = vpop.f32.mrf.mxu0
    %v3440 = vadd.f32 0.0, %v3439
    %3441 = vmatmul.f32.gmra.mxu0 %v547
    %v3442 = vpop.f32.mrf.mxu0
    %v3443 = vadd.f32 0.0, %v3442
    %3444 = vmatmul.f32.gmra.mxu0 %v549
    %v3445 = vpop.f32.mrf.mxu0
    %v3446 = vadd.f32 0.0, %v3445
    %3447 = vmatmul.f32.gmra.mxu0 %v552
    %v3448 = vpop.f32.mrf.mxu0
    %v3449 = vadd.f32 0.0, %v3448
    %3450 = vmatmul.f32.gmra.mxu0 %v554
    %v3451 = vpop.f32.mrf.mxu0
    %v3452 = vadd.f32 0.0, %v3451
    %3453 = vmatmul.f32.gmra.mxu0 %v557
    %v3454 = vpop.f32.mrf.mxu0
    %v3455 = vadd.f32 0.0, %v3454
    %3456 = vmatmul.f32.gmra.mxu0 %v559
    %v3457 = vpop.f32.mrf.mxu0
    %v3458 = vadd.f32 0.0, %v3457
    %3459 = vmatmul.f32.gmra.mxu0 %v562
    %v3460 = vpop.f32.mrf.mxu0
    %v3461 = vadd.f32 0.0, %v3460
    %3462 = vmatmul.f32.gmra.mxu0 %v564
    %v3463 = vpop.f32.mrf.mxu0
    %v3464 = vadd.f32 0.0, %v3463
    %3465 = vmatmul.f32.gmra.mxu0 %v567
    %v3466 = vpop.f32.mrf.mxu0
    %v3467 = vadd.f32 0.0, %v3466
    %3468 = vmatmul.f32.gmra.mxu0 %v569
    %v3469 = vpop.f32.mrf.mxu0
    %v3470 = vadd.f32 0.0, %v3469
    %3471 = vmatmul.f32.gmra.mxu0 %v572
    %v3472 = vpop.f32.mrf.mxu0
    %v3473 = vadd.f32 0.0, %v3472
    %3474 = vmatmul.f32.gmra.mxu0 %v574
    %v3475 = vpop.f32.mrf.mxu0
    %v3476 = vadd.f32 0.0, %v3475
    %3477 = vmatmul.f32.gmra.mxu0 %v577
    %v3478 = vpop.f32.mrf.mxu0
    %v3479 = vadd.f32 0.0, %v3478
    %3480 = vmatmul.f32.gmra.mxu0 %v579
    %v3481 = vpop.f32.mrf.mxu0
    %v3482 = vadd.f32 0.0, %v3481
    %3483 = vmatmul.f32.gmra.mxu0 %v582
    %v3484 = vpop.f32.mrf.mxu0
    %v3485 = vadd.f32 0.0, %v3484
    %3486 = vmatmul.f32.gmra.mxu0 %v584
    %v3487 = vpop.f32.mrf.mxu0
    %v3488 = vadd.f32 0.0, %v3487
    %3489 = vmatmul.f32.gmra.mxu0 %v587
    %v3490 = vpop.f32.mrf.mxu0
    %v3491 = vadd.f32 0.0, %v3490
    %3492 = vmatmul.f32.gmra.mxu0 %v589
    %v3493 = vpop.f32.mrf.mxu0
    %v3494 = vadd.f32 0.0, %v3493
    %3495 = vmatmul.f32.gmra.mxu0 %v592
    %v3496 = vpop.f32.mrf.mxu0
    %v3497 = vadd.f32 0.0, %v3496
    %3498 = vmatmul.f32.gmra.mxu0 %v594
    %v3499 = vpop.f32.mrf.mxu0
    %v3500 = vadd.f32 0.0, %v3499
    %3501 = vmatmul.f32.gmra.mxu0 %v597
    %v3502 = vpop.f32.mrf.mxu0
    %v3503 = vadd.f32 0.0, %v3502
    %3504 = vmatmul.f32.gmra.mxu0 %v599
    %v3505 = vpop.f32.mrf.mxu0
    %v3506 = vadd.f32 0.0, %v3505
    %3507 = vmatmul.f32.gmra.mxu0 %v3267
    %v3508 = vpop.f32.mrf.mxu0
    %v3509 = vadd.f32 0.0, %v3508
    %3510 = vmatmul.f32.gmra.mxu0 %v3269
    %v3511 = vpop.f32.mrf.mxu0
    %v3512 = vadd.f32 0.0, %v3511
    %3513 = vmatmul.f32.gmra.mxu0 %v607
    %v3514 = vpop.f32.mrf.mxu0
    %v3515 = vadd.f32 0.0, %v3514
    %3516 = vmatmul.f32.gmra.mxu0 %v609
    %v3517 = vpop.f32.mrf.mxu0
    %v3518 = vadd.f32 0.0, %v3517
    %3519 = vmatmul.f32.gmra.mxu0 %v612
    %v3520 = vpop.f32.mrf.mxu0
    %v3521 = vadd.f32 0.0, %v3520
    %3522 = vmatmul.f32.gmra.mxu0 %v614
    %v3523 = vpop.f32.mrf.mxu0
    %v3524 = vadd.f32 0.0, %v3523
    %3525 = vmatmul.f32.gmra.mxu0 %v617
    %v3526 = vpop.f32.mrf.mxu0
    %v3527 = vadd.f32 0.0, %v3526
    %3528 = vmatmul.f32.gmra.mxu0 %v619
    %v3529 = vpop.f32.mrf.mxu0
    %v3530 = vadd.f32 0.0, %v3529
    %3531 = vmatmul.f32.gmra.mxu0 %v622
    %v3532 = vpop.f32.mrf.mxu0
    %v3533 = vadd.f32 0.0, %v3532
    %3534 = vmatmul.f32.gmra.mxu0 %v624
    %v3535 = vpop.f32.mrf.mxu0
    %v3536 = vadd.f32 0.0, %v3535
    %3537 = vmatmul.f32.gmra.mxu0 %v627
    %v3538 = vpop.f32.mrf.mxu0
    %v3539 = vadd.f32 0.0, %v3538
    %3540 = vmatmul.f32.gmra.mxu0 %v629
    %v3541 = vpop.f32.mrf.mxu0
    %v3542 = vadd.f32 0.0, %v3541
    %3543 = vmatmul.f32.gmra.mxu0 %v632
    %v3544 = vpop.f32.mrf.mxu0
    %v3545 = vadd.f32 0.0, %v3544
    %3546 = vmatmul.f32.gmra.mxu0 %v634
    %v3547 = vpop.f32.mrf.mxu0
    %v3548 = vadd.f32 0.0, %v3547
    %3549 = vmatmul.f32.gmra.mxu0 %v637
    %v3550 = vpop.f32.mrf.mxu0
    %v3551 = vadd.f32 0.0, %v3550
    %3552 = vmatmul.f32.gmra.mxu0 %v639
    %v3553 = vpop.f32.mrf.mxu0
    %v3554 = vadd.f32 0.0, %v3553
    %3555 = vmatmul.f32.gmra.mxu0 %v642
    %v3556 = vpop.f32.mrf.mxu0
    %v3557 = vadd.f32 0.0, %v3556
    %3558 = vmatmul.f32.gmra.mxu0 %v644
    %v3559 = vpop.f32.mrf.mxu0
    %v3560 = vadd.f32 0.0, %v3559
    %3561 = vmatmul.f32.gmra.mxu0 %v647
    %v3562 = vpop.f32.mrf.mxu0
    %v3563 = vadd.f32 0.0, %v3562
    %3564 = vmatmul.f32.gmra.mxu0 %v649
    %v3565 = vpop.f32.mrf.mxu0
    %v3566 = vadd.f32 0.0, %v3565
    %3567 = vmatmul.f32.gmra.mxu0 %v652
    %v3568 = vpop.f32.mrf.mxu0
    %v3569 = vadd.f32 0.0, %v3568
    %3570 = vmatmul.f32.gmra.mxu0 %v654
    %v3571 = vpop.f32.mrf.mxu0
    %v3572 = vadd.f32 0.0, %v3571
    %3573 = vmatmul.f32.gmra.mxu0 %v657
    %v3574 = vpop.f32.mrf.mxu0
    %v3575 = vadd.f32 0.0, %v3574
    %3576 = vmatmul.f32.gmra.mxu0 %v659
    %v3577 = vpop.f32.mrf.mxu0
    %v3578 = vadd.f32 0.0, %v3577
    %3579 = vmatmul.f32.gmra.mxu0 %v662
    %v3580 = vpop.f32.mrf.mxu0
    %v3581 = vadd.f32 0.0, %v3580
    %3582 = vmatmul.f32.gmra.mxu0 %v664
    %v3583 = vpop.f32.mrf.mxu0
    %v3584 = vadd.f32 0.0, %v3583
    %3585 = vmatmul.f32.gmra.mxu0 %v667
    %v3586 = vpop.f32.mrf.mxu0
    %v3587 = vadd.f32 0.0, %v3586
    %3588 = vmatmul.f32.gmra.mxu0 %v669
    %v3589 = vpop.f32.mrf.mxu0
    %v3590 = vadd.f32 0.0, %v3589
    %3591 = vmatmul.f32.gmra.mxu0 %v672
    %v3592 = vpop.f32.mrf.mxu0
    %v3593 = vadd.f32 0.0, %v3592
    %3594 = vmatmul.f32.gmra.mxu0 %v674
    %v3595 = vpop.f32.mrf.mxu0
    %v3596 = vadd.f32 0.0, %v3595
    %3597 = vmatmul.f32.gmra.mxu0 %v677
    %v3598 = vpop.f32.mrf.mxu0
    %v3599 = vadd.f32 0.0, %v3598
    %3600 = vmatmul.f32.gmra.mxu0 %v679
    %v3601 = vpop.f32.mrf.mxu0
    %v3602 = vadd.f32 0.0, %v3601
    %3603 = vmatmul.f32.gmra.mxu0 %v3272
    %v3604 = vpop.f32.mrf.mxu0
    %v3605 = vadd.f32 0.0, %v3604
    %3606 = vmatmul.f32.gmra.mxu0 %v3274
    %v3607 = vpop.f32.mrf.mxu0
    %v3608 = vadd.f32 0.0, %v3607
    %3609 = vmatmul.f32.gmra.mxu0 %v687
    %v3610 = vpop.f32.mrf.mxu0
    %v3611 = vadd.f32 0.0, %v3610
    %3612 = vmatmul.f32.gmra.mxu0 %v689
    %v3613 = vpop.f32.mrf.mxu0
    %v3614 = vadd.f32 0.0, %v3613
    %3615 = vmatmul.f32.gmra.mxu0 %v692
    %v3616 = vpop.f32.mrf.mxu0
    %v3617 = vadd.f32 0.0, %v3616
    %3618 = vmatmul.f32.gmra.mxu0 %v694
    %v3619 = vpop.f32.mrf.mxu0
    %v3620 = vadd.f32 0.0, %v3619
    %3621 = vmatmul.f32.gmra.mxu0 %v697
    %v3622 = vpop.f32.mrf.mxu0
    %v3623 = vadd.f32 0.0, %v3622
    %3624 = vmatmul.f32.gmra.mxu0 %v699
    %v3625 = vpop.f32.mrf.mxu0
    %v3626 = vadd.f32 0.0, %v3625
    %3627 = vmatmul.f32.gmra.mxu0 %v702
    %v3628 = vpop.f32.mrf.mxu0
    %v3629 = vadd.f32 0.0, %v3628
    %3630 = vmatmul.f32.gmra.mxu0 %v704
    %v3631 = vpop.f32.mrf.mxu0
    %v3632 = vadd.f32 0.0, %v3631
    %3633 = vmatmul.f32.gmra.mxu0 %v707
    %v3634 = vpop.f32.mrf.mxu0
    %v3635 = vadd.f32 0.0, %v3634
    %3636 = vmatmul.f32.gmra.mxu0 %v709
    %v3637 = vpop.f32.mrf.mxu0
    %v3638 = vadd.f32 0.0, %v3637
    %3639 = vmatmul.f32.gmra.mxu0 %v712
    %v3640 = vpop.f32.mrf.mxu0
    %v3641 = vadd.f32 0.0, %v3640
    %3642 = vmatmul.f32.gmra.mxu0 %v714
    %v3643 = vpop.f32.mrf.mxu0
    %v3644 = vadd.f32 0.0, %v3643
    %3645 = vmatmul.f32.gmra.mxu0 %v717
    %v3646 = vpop.f32.mrf.mxu0
    %v3647 = vadd.f32 0.0, %v3646
    %3648 = vmatmul.f32.gmra.mxu0 %v719
    %v3649 = vpop.f32.mrf.mxu0
    %v3650 = vadd.f32 0.0, %v3649
    %3651 = vmatmul.f32.gmra.mxu0 %v722
    %v3652 = vpop.f32.mrf.mxu0
    %v3653 = vadd.f32 0.0, %v3652
    %3654 = vmatmul.f32.gmra.mxu0 %v724
    %v3655 = vpop.f32.mrf.mxu0
    %v3656 = vadd.f32 0.0, %v3655
    %3657 = vmatmul.f32.gmra.mxu0 %v727
    %v3658 = vpop.f32.mrf.mxu0
    %v3659 = vadd.f32 0.0, %v3658
    %3660 = vmatmul.f32.gmra.mxu0 %v729
    %v3661 = vpop.f32.mrf.mxu0
    %v3662 = vadd.f32 0.0, %v3661
    %3663 = vmatmul.f32.gmra.mxu0 %v732
    %v3664 = vpop.f32.mrf.mxu0
    %v3665 = vadd.f32 0.0, %v3664
    %3666 = vmatmul.f32.gmra.mxu0 %v734
    %v3667 = vpop.f32.mrf.mxu0
    %v3668 = vadd.f32 0.0, %v3667
    %3669 = vmatmul.f32.gmra.mxu0 %v737
    %v3670 = vpop.f32.mrf.mxu0
    %v3671 = vadd.f32 0.0, %v3670
    %3672 = vmatmul.f32.gmra.mxu0 %v739
    %v3673 = vpop.f32.mrf.mxu0
    %v3674 = vadd.f32 0.0, %v3673
    %3675 = vmatmul.f32.gmra.mxu0 %v742
    %v3676 = vpop.f32.mrf.mxu0
    %v3677 = vadd.f32 0.0, %v3676
    %3678 = vmatmul.f32.gmra.mxu0 %v744
    %v3679 = vpop.f32.mrf.mxu0
    %v3680 = vadd.f32 0.0, %v3679
    %3681 = vmatmul.f32.gmra.mxu0 %v747
    %v3682 = vpop.f32.mrf.mxu0
    %v3683 = vadd.f32 0.0, %v3682
    %3684 = vmatmul.f32.gmra.mxu0 %v749
    %v3685 = vpop.f32.mrf.mxu0
    %v3686 = vadd.f32 0.0, %v3685
    %3687 = vmatmul.f32.gmra.mxu0 %v752
    %v3688 = vpop.f32.mrf.mxu0
    %v3689 = vadd.f32 0.0, %v3688
    %3690 = vmatmul.f32.gmra.mxu0 %v754
    %v3691 = vpop.f32.mrf.mxu0
    %v3692 = vadd.f32 0.0, %v3691
    %3693 = vmatmul.f32.gmra.mxu0 %v757
    %v3694 = vpop.f32.mrf.mxu0
    %v3695 = vadd.f32 0.0, %v3694
    %3696 = vmatmul.f32.gmra.mxu0 %v759
    %v3697 = vpop.f32.mrf.mxu0
    %v3698 = vadd.f32 0.0, %v3697
    %3699 = vmatmul.f32.gmra.mxu0 %v3277
    %v3700 = vpop.f32.mrf.mxu0
    %v3701 = vadd.f32 0.0, %v3700
    %3702 = vmatmul.f32.gmra.mxu0 %v3279
    %v3703 = vpop.f32.mrf.mxu0
    %v3704 = vadd.f32 0.0, %v3703
    %3705 = vdwg.mxu0
    %v3706 = vadd.f32 %v3120, %v3323
    %v3707 = vadd.f32 %v3121, %v3326
    %v3708 = vadd.f32 %v3122, %v3329
    %v3709 = vadd.f32 %v3123, %v3332
    %v3710 = vadd.f32 %v3124, %v3335
    %v3711 = vadd.f32 %v3125, %v3338
    %v3712 = vadd.f32 %v3126, %v3341
    %v3713 = vadd.f32 %v3127, %v3344
    %v3714 = vadd.f32 %v3128, %v3347
    %v3715 = vadd.f32 %v3129, %v3350
    %v3716 = vadd.f32 %v3130, %v3353
    %v3717 = vadd.f32 %v3131, %v3356
    %v3718 = vadd.f32 %v3132, %v3359
    %v3719 = vadd.f32 %v3133, %v3362
    %v3720 = vadd.f32 %v3134, %v3365
    %v3721 = vadd.f32 %v3135, %v3368
    %v3722 = vadd.f32 %v3136, %v3371
    %v3723 = vadd.f32 %v3137, %v3374
    %v3724 = vadd.f32 %v3138, %v3377
    %v3725 = vadd.f32 %v3139, %v3380
    %v3726 = vadd.f32 %v3140, %v3383
    %v3727 = vadd.f32 %v3141, %v3386
    %v3728 = vadd.f32 %v3142, %v3389
    %v3729 = vadd.f32 %v3143, %v3392
    %v3730 = vadd.f32 %v3144, %v3395
    %v3731 = vadd.f32 %v3145, %v3398
    %v3732 = vadd.f32 %v3146, %v3401
    %v3733 = vadd.f32 %v3147, %v3404
    %v3734 = vadd.f32 %v3148, %v3407
    %v3735 = vadd.f32 %v3149, %v3410
    %v3736 = vadd.f32 %v3150, %v3413
    %v3737 = vadd.f32 %v3151, %v3416
    %v3738 = vadd.f32 %v3152, %v3419
    %v3739 = vadd.f32 %v3153, %v3422
    %v3740 = vadd.f32 %v3154, %v3425
    %v3741 = vadd.f32 %v3155, %v3428
    %v3742 = vadd.f32 %v3156, %v3431
    %v3743 = vadd.f32 %v3157, %v3434
    %v3744 = vadd.f32 %v3158, %v3437
    %v3745 = vadd.f32 %v3159, %v3440
    %v3746 = vadd.f32 %v3160, %v3443
    %v3747 = vadd.f32 %v3161, %v3446
    %v3748 = vadd.f32 %v3162, %v3449
    %v3749 = vadd.f32 %v3163, %v3452
    %v3750 = vadd.f32 %v3164, %v3455
    %v3751 = vadd.f32 %v3165, %v3458
    %v3752 = vadd.f32 %v3166, %v3461
    %v3753 = vadd.f32 %v3167, %v3464
    %v3754 = vadd.f32 %v3168, %v3467
    %v3755 = vadd.f32 %v3169, %v3470
    %v3756 = vadd.f32 %v3170, %v3473
    %v3757 = vadd.f32 %v3171, %v3476
    %v3758 = vadd.f32 %v3172, %v3479
    %v3759 = vadd.f32 %v3173, %v3482
    %v3760 = vadd.f32 %v3174, %v3485
    %v3761 = vadd.f32 %v3175, %v3488
    %v3762 = vadd.f32 %v3176, %v3491
    %v3763 = vadd.f32 %v3177, %v3494
    %v3764 = vadd.f32 %v3178, %v3497
    %v3765 = vadd.f32 %v3179, %v3500
    %v3766 = vadd.f32 %v3180, %v3503
    %v3767 = vadd.f32 %v3181, %v3506
    %v3768 = vadd.f32 %v3182, %v3509
    %v3769 = vadd.f32 %v3183, %v3512
    %v3770 = vadd.f32 %v3184, %v3515
    %v3771 = vadd.f32 %v3185, %v3518
    %v3772 = vadd.f32 %v3186, %v3521
    %v3773 = vadd.f32 %v3187, %v3524
    %v3774 = vadd.f32 %v3188, %v3527
    %v3775 = vadd.f32 %v3189, %v3530
    %v3776 = vadd.f32 %v3190, %v3533
    %v3777 = vadd.f32 %v3191, %v3536
    %v3778 = vadd.f32 %v3192, %v3539
    %v3779 = vadd.f32 %v3193, %v3542
    %v3780 = vadd.f32 %v3194, %v3545
    %v3781 = vadd.f32 %v3195, %v3548
    %v3782 = vadd.f32 %v3196, %v3551
    %v3783 = vadd.f32 %v3197, %v3554
    %v3784 = vadd.f32 %v3198, %v3557
    %v3785 = vadd.f32 %v3199, %v3560
    %v3786 = vadd.f32 %v3200, %v3563
    %v3787 = vadd.f32 %v3201, %v3566
    %v3788 = vadd.f32 %v3202, %v3569
    %v3789 = vadd.f32 %v3203, %v3572
    %v3790 = vadd.f32 %v3204, %v3575
    %v3791 = vadd.f32 %v3205, %v3578
    %v3792 = vadd.f32 %v3206, %v3581
    %v3793 = vadd.f32 %v3207, %v3584
    %v3794 = vadd.f32 %v3208, %v3587
    %v3795 = vadd.f32 %v3209, %v3590
    %v3796 = vadd.f32 %v3210, %v3593
    %v3797 = vadd.f32 %v3211, %v3596
    %v3798 = vadd.f32 %v3212, %v3599
    %v3799 = vadd.f32 %v3213, %v3602
    %v3800 = vadd.f32 %v3214, %v3605
    %v3801 = vadd.f32 %v3215, %v3608
    %v3802 = vadd.f32 %v3216, %v3611
    %v3803 = vadd.f32 %v3217, %v3614
    %v3804 = vadd.f32 %v3218, %v3617
    %v3805 = vadd.f32 %v3219, %v3620
    %v3806 = vadd.f32 %v3220, %v3623
    %v3807 = vadd.f32 %v3221, %v3626
    %v3808 = vadd.f32 %v3222, %v3629
    %v3809 = vadd.f32 %v3223, %v3632
    %v3810 = vadd.f32 %v3224, %v3635
    %v3811 = vadd.f32 %v3225, %v3638
    %v3812 = vadd.f32 %v3226, %v3641
    %v3813 = vadd.f32 %v3227, %v3644
    %v3814 = vadd.f32 %v3228, %v3647
    %v3815 = vadd.f32 %v3229, %v3650
    %v3816 = vadd.f32 %v3230, %v3653
    %v3817 = vadd.f32 %v3231, %v3656
    %v3818 = vadd.f32 %v3232, %v3659
    %v3819 = vadd.f32 %v3233, %v3662
    %v3820 = vadd.f32 %v3234, %v3665
    %v3821 = vadd.f32 %v3235, %v3668
    %v3822 = vadd.f32 %v3236, %v3671
    %v3823 = vadd.f32 %v3237, %v3674
    %v3824 = vadd.f32 %v3238, %v3677
    %v3825 = vadd.f32 %v3239, %v3680
    %v3826 = vadd.f32 %v3240, %v3683
    %v3827 = vadd.f32 %v3241, %v3686
    %v3828 = vadd.f32 %v3242, %v3689
    %v3829 = vadd.f32 %v3243, %v3692
    %v3830 = vadd.f32 %v3244, %v3695
    %v3831 = vadd.f32 %v3245, %v3698
    %v3832 = vadd.f32 %v3246, %v3701
    %v3833 = vadd.f32 %v3247, %v3704
    %v3834 = vrot.slane %v63, 2
    %v3835 = vrot.slane %v64, 2
    %v3836 = vsel %vm1707, %v3834, %v3835
    %v3837 = vrot.slane %v65, 2
    %v3838 = vsel %vm1707, %v3835, %v3837
    %v3839 = vrot.slane %v117, 2
    %v3840 = vrot.slane %v118, 2
    %v3841 = vsel %vm1707, %v3839, %v3840
    %v3842 = vrot.slane %v119, 2
    %v3843 = vsel %vm1707, %v3840, %v3842
    %v3844 = vrot.slane %v171, 2
    %v3845 = vrot.slane %v172, 2
    %v3846 = vsel %vm1707, %v3844, %v3845
    %v3847 = vrot.slane %v173, 2
    %v3848 = vsel %vm1707, %v3845, %v3847
    %v3849 = vrot.slane %v225, 2
    %v3850 = vrot.slane %v226, 2
    %v3851 = vsel %vm1707, %v3849, %v3850
    %v3852 = vrot.slane %v227, 2
    %v3853 = vsel %vm1707, %v3850, %v3852
    %s3862 = scalar_lea.vmem %s1, 640
    %v3863 = vld [vmem:[%s3862] sm:$0xff]
    %v3864 = vld [vmem:[%s3862 + $0x8] sm:$0xff]
    %v3865 = vld [vmem:[%s3862 + $0x10] sm:$0xff]
    %v3866 = vld [vmem:[%s3862 + $0x18] sm:$0xff]
    %v3867 = vld [vmem:[%s3862 + $0x20] sm:$0xff]
    %v3868 = vld [vmem:[%s3862 + $0x28] sm:$0xff]
    %v3869 = vld [vmem:[%s3862 + $0x30] sm:$0xff]
    %v3870 = vld [vmem:[%s3862 + $0x38] sm:$0xff]
    %v3871 = vld [vmem:[%s3862 + $0x40] sm:$0xff]
    %v3872 = vld [vmem:[%s3862 + $0x48] sm:$0xff]
    %v3873 = vld [vmem:[%s3862 + $0x50] sm:$0xff]
    %v3874 = vld [vmem:[%s3862 + $0x58] sm:$0xff]
    %v3875 = vld [vmem:[%s3862 + $0x60] sm:$0xff]
    %v3876 = vld [vmem:[%s3862 + $0x68] sm:$0xff]
    %v3877 = vld [vmem:[%s3862 + $0x70] sm:$0xff]
    %v3878 = vld [vmem:[%s3862 + $0x78] sm:$0xff]
    %3879 = vmatpush.msra.mxu0 %v3878
    %3880 = vmatpush.msra.mxu0 %v3877
    %3881 = vmatpush.msra.mxu0 %v3876
    %3882 = vmatpush.msra.mxu0 %v3875
    %3883 = vmatpush.msra.mxu0 %v3874
    %3884 = vmatpush.msra.mxu0 %v3873
    %3885 = vmatpush.msra.mxu0 %v3872
    %3886 = vmatpush.msra.mxu0 %v3871
    %3887 = vmatpush.msra.mxu0 %v3870
    %3888 = vmatpush.msra.mxu0 %v3869
    %3889 = vmatpush.msra.mxu0 %v3868
    %3890 = vmatpush.msra.mxu0 %v3867
    %3891 = vmatpush.msra.mxu0 %v3866
    %3892 = vmatpush.msra.mxu0 %v3865
    %3893 = vmatpush.msra.mxu0 %v3864
    %3894 = vmatpush.msra.mxu0 %v3863
    %3895 = vmatmul.f32.gmra.mxu0 %v1715
    %v3896 = vpop.f32.mrf.mxu0
    %v3897 = vadd.f32 0.0, %v3896
    %3898 = vmatmul.f32.gmra.mxu0 %v1717
    %v3899 = vpop.f32.mrf.mxu0
    %v3900 = vadd.f32 0.0, %v3899
    %3901 = vmatmul.f32.gmra.mxu0 %v1720
    %v3902 = vpop.f32.mrf.mxu0
    %v3903 = vadd.f32 0.0, %v3902
    %3904 = vmatmul.f32.gmra.mxu0 %v1722
    %v3905 = vpop.f32.mrf.mxu0
    %v3906 = vadd.f32 0.0, %v3905
    %3907 = vmatmul.f32.gmra.mxu0 %v1725
    %v3908 = vpop.f32.mrf.mxu0
    %v3909 = vadd.f32 0.0, %v3908
    %3910 = vmatmul.f32.gmra.mxu0 %v1727
    %v3911 = vpop.f32.mrf.mxu0
    %v3912 = vadd.f32 0.0, %v3911
    %3913 = vmatmul.f32.gmra.mxu0 %v1730
    %v3914 = vpop.f32.mrf.mxu0
    %v3915 = vadd.f32 0.0, %v3914
    %3916 = vmatmul.f32.gmra.mxu0 %v1732
    %v3917 = vpop.f32.mrf.mxu0
    %v3918 = vadd.f32 0.0, %v3917
    %3919 = vmatmul.f32.gmra.mxu0 %v1735
    %v3920 = vpop.f32.mrf.mxu0
    %v3921 = vadd.f32 0.0, %v3920
    %3922 = vmatmul.f32.gmra.mxu0 %v1737
    %v3923 = vpop.f32.mrf.mxu0
    %v3924 = vadd.f32 0.0, %v3923
    %3925 = vmatmul.f32.gmra.mxu0 %v1740
    %v3926 = vpop.f32.mrf.mxu0
    %v3927 = vadd.f32 0.0, %v3926
    %3928 = vmatmul.f32.gmra.mxu0 %v1742
    %v3929 = vpop.f32.mrf.mxu0
    %v3930 = vadd.f32 0.0, %v3929
    %3931 = vmatmul.f32.gmra.mxu0 %v1745
    %v3932 = vpop.f32.mrf.mxu0
    %v3933 = vadd.f32 0.0, %v3932
    %3934 = vmatmul.f32.gmra.mxu0 %v1747
    %v3935 = vpop.f32.mrf.mxu0
    %v3936 = vadd.f32 0.0, %v3935
    %3937 = vmatmul.f32.gmra.mxu0 %v1750
    %v3938 = vpop.f32.mrf.mxu0
    %v3939 = vadd.f32 0.0, %v3938
    %3940 = vmatmul.f32.gmra.mxu0 %v1752
    %v3941 = vpop.f32.mrf.mxu0
    %v3942 = vadd.f32 0.0, %v3941
    %3943 = vmatmul.f32.gmra.mxu0 %v1755
    %v3944 = vpop.f32.mrf.mxu0
    %v3945 = vadd.f32 0.0, %v3944
    %3946 = vmatmul.f32.gmra.mxu0 %v1757
    %v3947 = vpop.f32.mrf.mxu0
    %v3948 = vadd.f32 0.0, %v3947
    %3949 = vmatmul.f32.gmra.mxu0 %v1760
    %v3950 = vpop.f32.mrf.mxu0
    %v3951 = vadd.f32 0.0, %v3950
    %3952 = vmatmul.f32.gmra.mxu0 %v1762
    %v3953 = vpop.f32.mrf.mxu0
    %v3954 = vadd.f32 0.0, %v3953
    %3955 = vmatmul.f32.gmra.mxu0 %v1765
    %v3956 = vpop.f32.mrf.mxu0
    %v3957 = vadd.f32 0.0, %v3956
    %3958 = vmatmul.f32.gmra.mxu0 %v1767
    %v3959 = vpop.f32.mrf.mxu0
    %v3960 = vadd.f32 0.0, %v3959
    %3961 = vmatmul.f32.gmra.mxu0 %v1770
    %v3962 = vpop.f32.mrf.mxu0
    %v3963 = vadd.f32 0.0, %v3962
    %3964 = vmatmul.f32.gmra.mxu0 %v1772
    %v3965 = vpop.f32.mrf.mxu0
    %v3966 = vadd.f32 0.0, %v3965
    %3967 = vmatmul.f32.gmra.mxu0 %v1775
    %v3968 = vpop.f32.mrf.mxu0
    %v3969 = vadd.f32 0.0, %v3968
    %3970 = vmatmul.f32.gmra.mxu0 %v1777
    %v3971 = vpop.f32.mrf.mxu0
    %v3972 = vadd.f32 0.0, %v3971
    %3973 = vmatmul.f32.gmra.mxu0 %v1780
    %v3974 = vpop.f32.mrf.mxu0
    %v3975 = vadd.f32 0.0, %v3974
    %3976 = vmatmul.f32.gmra.mxu0 %v1782
    %v3977 = vpop.f32.mrf.mxu0
    %v3978 = vadd.f32 0.0, %v3977
    %3979 = vmatmul.f32.gmra.mxu0 %v1785
    %v3980 = vpop.f32.mrf.mxu0
    %v3981 = vadd.f32 0.0, %v3980
    %3982 = vmatmul.f32.gmra.mxu0 %v1787
    %v3983 = vpop.f32.mrf.mxu0
    %v3984 = vadd.f32 0.0, %v3983
    %3985 = vmatmul.f32.gmra.mxu0 %v3836
    %v3986 = vpop.f32.mrf.mxu0
    %v3987 = vadd.f32 0.0, %v3986
    %3988 = vmatmul.f32.gmra.mxu0 %v3838
    %v3989 = vpop.f32.mrf.mxu0
    %v3990 = vadd.f32 0.0, %v3989
    %3991 = vmatmul.f32.gmra.mxu0 %v1795
    %v3992 = vpop.f32.mrf.mxu0
    %v3993 = vadd.f32 0.0, %v3992
    %3994 = vmatmul.f32.gmra.mxu0 %v1797
    %v3995 = vpop.f32.mrf.mxu0
    %v3996 = vadd.f32 0.0, %v3995
    %3997 = vmatmul.f32.gmra.mxu0 %v1800
    %v3998 = vpop.f32.mrf.mxu0
    %v3999 = vadd.f32 0.0, %v3998
    %4000 = vmatmul.f32.gmra.mxu0 %v1802
    %v4001 = vpop.f32.mrf.mxu0
    %v4002 = vadd.f32 0.0, %v4001
    %4003 = vmatmul.f32.gmra.mxu0 %v1805
    %v4004 = vpop.f32.mrf.mxu0
    %v4005 = vadd.f32 0.0, %v4004
    %4006 = vmatmul.f32.gmra.mxu0 %v1807
    %v4007 = vpop.f32.mrf.mxu0
    %v4008 = vadd.f32 0.0, %v4007
    %4009 = vmatmul.f32.gmra.mxu0 %v1810
    %v4010 = vpop.f32.mrf.mxu0
    %v4011 = vadd.f32 0.0, %v4010
    %4012 = vmatmul.f32.gmra.mxu0 %v1812
    %v4013 = vpop.f32.mrf.mxu0
    %v4014 = vadd.f32 0.0, %v4013
    %4015 = vmatmul.f32.gmra.mxu0 %v1815
    %v4016 = vpop.f32.mrf.mxu0
    %v4017 = vadd.f32 0.0, %v4016
    %4018 = vmatmul.f32.gmra.mxu0 %v1817
    %v4019 = vpop.f32.mrf.mxu0
    %v4020 = vadd.f32 0.0, %v4019
    %4021 = vmatmul.f32.gmra.mxu0 %v1820
    %v4022 = vpop.f32.mrf.mxu0
    %v4023 = vadd.f32 0.0, %v4022
    %4024 = vmatmul.f32.gmra.mxu0 %v1822
    %v4025 = vpop.f32.mrf.mxu0
    %v4026 = vadd.f32 0.0, %v4025
    %4027 = vmatmul.f32.gmra.mxu0 %v1825
    %v4028 = vpop.f32.mrf.mxu0
    %v4029 = vadd.f32 0.0, %v4028
    %4030 = vmatmul.f32.gmra.mxu0 %v1827
    %v4031 = vpop.f32.mrf.mxu0
    %v4032 = vadd.f32 0.0, %v4031
    %4033 = vmatmul.f32.gmra.mxu0 %v1830
    %v4034 = vpop.f32.mrf.mxu0
    %v4035 = vadd.f32 0.0, %v4034
    %4036 = vmatmul.f32.gmra.mxu0 %v1832
    %v4037 = vpop.f32.mrf.mxu0
    %v4038 = vadd.f32 0.0, %v4037
    %4039 = vmatmul.f32.gmra.mxu0 %v1835
    %v4040 = vpop.f32.mrf.mxu0
    %v4041 = vadd.f32 0.0, %v4040
    %4042 = vmatmul.f32.gmra.mxu0 %v1837
    %v4043 = vpop.f32.mrf.mxu0
    %v4044 = vadd.f32 0.0, %v4043
    %4045 = vmatmul.f32.gmra.mxu0 %v1840
    %v4046 = vpop.f32.mrf.mxu0
    %v4047 = vadd.f32 0.0, %v4046
    %4048 = vmatmul.f32.gmra.mxu0 %v1842
    %v4049 = vpop.f32.mrf.mxu0
    %v4050 = vadd.f32 0.0, %v4049
    %4051 = vmatmul.f32.gmra.mxu0 %v1845
    %v4052 = vpop.f32.mrf.mxu0
    %v4053 = vadd.f32 0.0, %v4052
    %4054 = vmatmul.f32.gmra.mxu0 %v1847
    %v4055 = vpop.f32.mrf.mxu0
    %v4056 = vadd.f32 0.0, %v4055
    %4057 = vmatmul.f32.gmra.mxu0 %v1850
    %v4058 = vpop.f32.mrf.mxu0
    %v4059 = vadd.f32 0.0, %v4058
    %4060 = vmatmul.f32.gmra.mxu0 %v1852
    %v4061 = vpop.f32.mrf.mxu0
    %v4062 = vadd.f32 0.0, %v4061
    %4063 = vmatmul.f32.gmra.mxu0 %v1855
    %v4064 = vpop.f32.mrf.mxu0
    %v4065 = vadd.f32 0.0, %v4064
    %4066 = vmatmul.f32.gmra.mxu0 %v1857
    %v4067 = vpop.f32.mrf.mxu0
    %v4068 = vadd.f32 0.0, %v4067
    %4069 = vmatmul.f32.gmra.mxu0 %v1860
    %v4070 = vpop.f32.mrf.mxu0
    %v4071 = vadd.f32 0.0, %v4070
    %4072 = vmatmul.f32.gmra.mxu0 %v1862
    %v4073 = vpop.f32.mrf.mxu0
    %v4074 = vadd.f32 0.0, %v4073
    %4075 = vmatmul.f32.gmra.mxu0 %v1865
    %v4076 = vpop.f32.mrf.mxu0
    %v4077 = vadd.f32 0.0, %v4076
    %4078 = vmatmul.f32.gmra.mxu0 %v1867
    %v4079 = vpop.f32.mrf.mxu0
    %v4080 = vadd.f32 0.0, %v4079
    %4081 = vmatmul.f32.gmra.mxu0 %v3841
    %v4082 = vpop.f32.mrf.mxu0
    %v4083 = vadd.f32 0.0, %v4082
    %4084 = vmatmul.f32.gmra.mxu0 %v3843
    %v4085 = vpop.f32.mrf.mxu0
    %v4086 = vadd.f32 0.0, %v4085
    %4087 = vmatmul.f32.gmra.mxu0 %v1875
    %v4088 = vpop.f32.mrf.mxu0
    %v4089 = vadd.f32 0.0, %v4088
    %4090 = vmatmul.f32.gmra.mxu0 %v1877
    %v4091 = vpop.f32.mrf.mxu0
    %v4092 = vadd.f32 0.0, %v4091
    %4093 = vmatmul.f32.gmra.mxu0 %v1880
    %v4094 = vpop.f32.mrf.mxu0
    %v4095 = vadd.f32 0.0, %v4094
    %4096 = vmatmul.f32.gmra.mxu0 %v1882
    %v4097 = vpop.f32.mrf.mxu0
    %v4098 = vadd.f32 0.0, %v4097
    %4099 = vmatmul.f32.gmra.mxu0 %v1885
    %v4100 = vpop.f32.mrf.mxu0
    %v4101 = vadd.f32 0.0, %v4100
    %4102 = vmatmul.f32.gmra.mxu0 %v1887
    %v4103 = vpop.f32.mrf.mxu0
    %v4104 = vadd.f32 0.0, %v4103
    %4105 = vmatmul.f32.gmra.mxu0 %v1890
    %v4106 = vpop.f32.mrf.mxu0
    %v4107 = vadd.f32 0.0, %v4106
    %4108 = vmatmul.f32.gmra.mxu0 %v1892
    %v4109 = vpop.f32.mrf.mxu0
    %v4110 = vadd.f32 0.0, %v4109
    %4111 = vmatmul.f32.gmra.mxu0 %v1895
    %v4112 = vpop.f32.mrf.mxu0
    %v4113 = vadd.f32 0.0, %v4112
    %4114 = vmatmul.f32.gmra.mxu0 %v1897
    %v4115 = vpop.f32.mrf.mxu0
    %v4116 = vadd.f32 0.0, %v4115
    %4117 = vmatmul.f32.gmra.mxu0 %v1900
    %v4118 = vpop.f32.mrf.mxu0
    %v4119 = vadd.f32 0.0, %v4118
    %4120 = vmatmul.f32.gmra.mxu0 %v1902
    %v4121 = vpop.f32.mrf.mxu0
    %v4122 = vadd.f32 0.0, %v4121
    %4123 = vmatmul.f32.gmra.mxu0 %v1905
    %v4124 = vpop.f32.mrf.mxu0
    %v4125 = vadd.f32 0.0, %v4124
    %4126 = vmatmul.f32.gmra.mxu0 %v1907
    %v4127 = vpop.f32.mrf.mxu0
    %v4128 = vadd.f32 0.0, %v4127
    %4129 = vmatmul.f32.gmra.mxu0 %v1910
    %v4130 = vpop.f32.mrf.mxu0
    %v4131 = vadd.f32 0.0, %v4130
    %4132 = vmatmul.f32.gmra.mxu0 %v1912
    %v4133 = vpop.f32.mrf.mxu0
    %v4134 = vadd.f32 0.0, %v4133
    %4135 = vmatmul.f32.gmra.mxu0 %v1915
    %v4136 = vpop.f32.mrf.mxu0
    %v4137 = vadd.f32 0.0, %v4136
    %4138 = vmatmul.f32.gmra.mxu0 %v1917
    %v4139 = vpop.f32.mrf.mxu0
    %v4140 = vadd.f32 0.0, %v4139
    %4141 = vmatmul.f32.gmra.mxu0 %v1920
    %v4142 = vpop.f32.mrf.mxu0
    %v4143 = vadd.f32 0.0, %v4142
    %4144 = vmatmul.f32.gmra.mxu0 %v1922
    %v4145 = vpop.f32.mrf.mxu0
    %v4146 = vadd.f32 0.0, %v4145
    %4147 = vmatmul.f32.gmra.mxu0 %v1925
    %v4148 = vpop.f32.mrf.mxu0
    %v4149 = vadd.f32 0.0, %v4148
    %4150 = vmatmul.f32.gmra.mxu0 %v1927
    %v4151 = vpop.f32.mrf.mxu0
    %v4152 = vadd.f32 0.0, %v4151
    %4153 = vmatmul.f32.gmra.mxu0 %v1930
    %v4154 = vpop.f32.mrf.mxu0
    %v4155 = vadd.f32 0.0, %v4154
    %4156 = vmatmul.f32.gmra.mxu0 %v1932
    %v4157 = vpop.f32.mrf.mxu0
    %v4158 = vadd.f32 0.0, %v4157
    %4159 = vmatmul.f32.gmra.mxu0 %v1935
    %v4160 = vpop.f32.mrf.mxu0
    %v4161 = vadd.f32 0.0, %v4160
    %4162 = vmatmul.f32.gmra.mxu0 %v1937
    %v4163 = vpop.f32.mrf.mxu0
    %v4164 = vadd.f32 0.0, %v4163
    %4165 = vmatmul.f32.gmra.mxu0 %v1940
    %v4166 = vpop.f32.mrf.mxu0
    %v4167 = vadd.f32 0.0, %v4166
    %4168 = vmatmul.f32.gmra.mxu0 %v1942
    %v4169 = vpop.f32.mrf.mxu0
    %v4170 = vadd.f32 0.0, %v4169
    %4171 = vmatmul.f32.gmra.mxu0 %v1945
    %v4172 = vpop.f32.mrf.mxu0
    %v4173 = vadd.f32 0.0, %v4172
    %4174 = vmatmul.f32.gmra.mxu0 %v1947
    %v4175 = vpop.f32.mrf.mxu0
    %v4176 = vadd.f32 0.0, %v4175
    %4177 = vmatmul.f32.gmra.mxu0 %v3846
    %v4178 = vpop.f32.mrf.mxu0
    %v4179 = vadd.f32 0.0, %v4178
    %4180 = vmatmul.f32.gmra.mxu0 %v3848
    %v4181 = vpop.f32.mrf.mxu0
    %v4182 = vadd.f32 0.0, %v4181
    %4183 = vmatmul.f32.gmra.mxu0 %v1955
    %v4184 = vpop.f32.mrf.mxu0
    %v4185 = vadd.f32 0.0, %v4184
    %4186 = vmatmul.f32.gmra.mxu0 %v1957
    %v4187 = vpop.f32.mrf.mxu0
    %v4188 = vadd.f32 0.0, %v4187
    %4189 = vmatmul.f32.gmra.mxu0 %v1960
    %v4190 = vpop.f32.mrf.mxu0
    %v4191 = vadd.f32 0.0, %v4190
    %4192 = vmatmul.f32.gmra.mxu0 %v1962
    %v4193 = vpop.f32.mrf.mxu0
    %v4194 = vadd.f32 0.0, %v4193
    %4195 = vmatmul.f32.gmra.mxu0 %v1965
    %v4196 = vpop.f32.mrf.mxu0
    %v4197 = vadd.f32 0.0, %v4196
    %4198 = vmatmul.f32.gmra.mxu0 %v1967
    %v4199 = vpop.f32.mrf.mxu0
    %v4200 = vadd.f32 0.0, %v4199
    %4201 = vmatmul.f32.gmra.mxu0 %v1970
    %v4202 = vpop.f32.mrf.mxu0
    %v4203 = vadd.f32 0.0, %v4202
    %4204 = vmatmul.f32.gmra.mxu0 %v1972
    %v4205 = vpop.f32.mrf.mxu0
    %v4206 = vadd.f32 0.0, %v4205
    %4207 = vmatmul.f32.gmra.mxu0 %v1975
    %v4208 = vpop.f32.mrf.mxu0
    %v4209 = vadd.f32 0.0, %v4208
    %4210 = vmatmul.f32.gmra.mxu0 %v1977
    %v4211 = vpop.f32.mrf.mxu0
    %v4212 = vadd.f32 0.0, %v4211
    %4213 = vmatmul.f32.gmra.mxu0 %v1980
    %v4214 = vpop.f32.mrf.mxu0
    %v4215 = vadd.f32 0.0, %v4214
    %4216 = vmatmul.f32.gmra.mxu0 %v1982
    %v4217 = vpop.f32.mrf.mxu0
    %v4218 = vadd.f32 0.0, %v4217
    %4219 = vmatmul.f32.gmra.mxu0 %v1985
    %v4220 = vpop.f32.mrf.mxu0
    %v4221 = vadd.f32 0.0, %v4220
    %4222 = vmatmul.f32.gmra.mxu0 %v1987
    %v4223 = vpop.f32.mrf.mxu0
    %v4224 = vadd.f32 0.0, %v4223
    %4225 = vmatmul.f32.gmra.mxu0 %v1990
    %v4226 = vpop.f32.mrf.mxu0
    %v4227 = vadd.f32 0.0, %v4226
    %4228 = vmatmul.f32.gmra.mxu0 %v1992
    %v4229 = vpop.f32.mrf.mxu0
    %v4230 = vadd.f32 0.0, %v4229
    %4231 = vmatmul.f32.gmra.mxu0 %v1995
    %v4232 = vpop.f32.mrf.mxu0
    %v4233 = vadd.f32 0.0, %v4232
    %4234 = vmatmul.f32.gmra.mxu0 %v1997
    %v4235 = vpop.f32.mrf.mxu0
    %v4236 = vadd.f32 0.0, %v4235
    %4237 = vmatmul.f32.gmra.mxu0 %v2000
    %v4238 = vpop.f32.mrf.mxu0
    %v4239 = vadd.f32 0.0, %v4238
    %4240 = vmatmul.f32.gmra.mxu0 %v2002
    %v4241 = vpop.f32.mrf.mxu0
    %v4242 = vadd.f32 0.0, %v4241
    %4243 = vmatmul.f32.gmra.mxu0 %v2005
    %v4244 = vpop.f32.mrf.mxu0
    %v4245 = vadd.f32 0.0, %v4244
    %4246 = vmatmul.f32.gmra.mxu0 %v2007
    %v4247 = vpop.f32.mrf.mxu0
    %v4248 = vadd.f32 0.0, %v4247
    %4249 = vmatmul.f32.gmra.mxu0 %v2010
    %v4250 = vpop.f32.mrf.mxu0
    %v4251 = vadd.f32 0.0, %v4250
    %4252 = vmatmul.f32.gmra.mxu0 %v2012
    %v4253 = vpop.f32.mrf.mxu0
    %v4254 = vadd.f32 0.0, %v4253
    %4255 = vmatmul.f32.gmra.mxu0 %v2015
    %v4256 = vpop.f32.mrf.mxu0
    %v4257 = vadd.f32 0.0, %v4256
    %4258 = vmatmul.f32.gmra.mxu0 %v2017
    %v4259 = vpop.f32.mrf.mxu0
    %v4260 = vadd.f32 0.0, %v4259
    %4261 = vmatmul.f32.gmra.mxu0 %v2020
    %v4262 = vpop.f32.mrf.mxu0
    %v4263 = vadd.f32 0.0, %v4262
    %4264 = vmatmul.f32.gmra.mxu0 %v2022
    %v4265 = vpop.f32.mrf.mxu0
    %v4266 = vadd.f32 0.0, %v4265
    %4267 = vmatmul.f32.gmra.mxu0 %v2025
    %v4268 = vpop.f32.mrf.mxu0
    %v4269 = vadd.f32 0.0, %v4268
    %4270 = vmatmul.f32.gmra.mxu0 %v2027
    %v4271 = vpop.f32.mrf.mxu0
    %v4272 = vadd.f32 0.0, %v4271
    %4273 = vmatmul.f32.gmra.mxu0 %v3851
    %v4274 = vpop.f32.mrf.mxu0
    %v4275 = vadd.f32 0.0, %v4274
    %4276 = vmatmul.f32.gmra.mxu0 %v3853
    %v4277 = vpop.f32.mrf.mxu0
    %v4278 = vadd.f32 0.0, %v4277
    %4279 = vdwg.mxu0
    %v4280 = vadd.f32 %v3706, %v3897
    %v4281 = vadd.f32 %v3707, %v3900
    %v4282 = vadd.f32 %v3708, %v3903
    %v4283 = vadd.f32 %v3709, %v3906
    %v4284 = vadd.f32 %v3710, %v3909
    %v4285 = vadd.f32 %v3711, %v3912
    %v4286 = vadd.f32 %v3712, %v3915
    %v4287 = vadd.f32 %v3713, %v3918
    %v4288 = vadd.f32 %v3714, %v3921
    %v4289 = vadd.f32 %v3715, %v3924
    %v4290 = vadd.f32 %v3716, %v3927
    %v4291 = vadd.f32 %v3717, %v3930
    %v4292 = vadd.f32 %v3718, %v3933
    %v4293 = vadd.f32 %v3719, %v3936
    %v4294 = vadd.f32 %v3720, %v3939
    %v4295 = vadd.f32 %v3721, %v3942
    %v4296 = vadd.f32 %v3722, %v3945
    %v4297 = vadd.f32 %v3723, %v3948
    %v4298 = vadd.f32 %v3724, %v3951
    %v4299 = vadd.f32 %v3725, %v3954
    %v4300 = vadd.f32 %v3726, %v3957
    %v4301 = vadd.f32 %v3727, %v3960
    %v4302 = vadd.f32 %v3728, %v3963
    %v4303 = vadd.f32 %v3729, %v3966
    %v4304 = vadd.f32 %v3730, %v3969
    %v4305 = vadd.f32 %v3731, %v3972
    %v4306 = vadd.f32 %v3732, %v3975
    %v4307 = vadd.f32 %v3733, %v3978
    %v4308 = vadd.f32 %v3734, %v3981
    %v4309 = vadd.f32 %v3735, %v3984
    %v4310 = vadd.f32 %v3736, %v3987
    %v4311 = vadd.f32 %v3737, %v3990
    %v4312 = vadd.f32 %v3738, %v3993
    %v4313 = vadd.f32 %v3739, %v3996
    %v4314 = vadd.f32 %v3740, %v3999
    %v4315 = vadd.f32 %v3741, %v4002
    %v4316 = vadd.f32 %v3742, %v4005
    %v4317 = vadd.f32 %v3743, %v4008
    %v4318 = vadd.f32 %v3744, %v4011
    %v4319 = vadd.f32 %v3745, %v4014
    %v4320 = vadd.f32 %v3746, %v4017
    %v4321 = vadd.f32 %v3747, %v4020
    %v4322 = vadd.f32 %v3748, %v4023
    %v4323 = vadd.f32 %v3749, %v4026
    %v4324 = vadd.f32 %v3750, %v4029
    %v4325 = vadd.f32 %v3751, %v4032
    %v4326 = vadd.f32 %v3752, %v4035
    %v4327 = vadd.f32 %v3753, %v4038
    %v4328 = vadd.f32 %v3754, %v4041
    %v4329 = vadd.f32 %v3755, %v4044
    %v4330 = vadd.f32 %v3756, %v4047
    %v4331 = vadd.f32 %v3757, %v4050
    %v4332 = vadd.f32 %v3758, %v4053
    %v4333 = vadd.f32 %v3759, %v4056
    %v4334 = vadd.f32 %v3760, %v4059
    %v4335 = vadd.f32 %v3761, %v4062
    %v4336 = vadd.f32 %v3762, %v4065
    %v4337 = vadd.f32 %v3763, %v4068
    %v4338 = vadd.f32 %v3764, %v4071
    %v4339 = vadd.f32 %v3765, %v4074
    %v4340 = vadd.f32 %v3766, %v4077
    %v4341 = vadd.f32 %v3767, %v4080
    %v4342 = vadd.f32 %v3768, %v4083
    %v4343 = vadd.f32 %v3769, %v4086
    %v4344 = vadd.f32 %v3770, %v4089
    %v4345 = vadd.f32 %v3771, %v4092
    %v4346 = vadd.f32 %v3772, %v4095
    %v4347 = vadd.f32 %v3773, %v4098
    %v4348 = vadd.f32 %v3774, %v4101
    %v4349 = vadd.f32 %v3775, %v4104
    %v4350 = vadd.f32 %v3776, %v4107
    %v4351 = vadd.f32 %v3777, %v4110
    %v4352 = vadd.f32 %v3778, %v4113
    %v4353 = vadd.f32 %v3779, %v4116
    %v4354 = vadd.f32 %v3780, %v4119
    %v4355 = vadd.f32 %v3781, %v4122
    %v4356 = vadd.f32 %v3782, %v4125
    %v4357 = vadd.f32 %v3783, %v4128
    %v4358 = vadd.f32 %v3784, %v4131
    %v4359 = vadd.f32 %v3785, %v4134
    %v4360 = vadd.f32 %v3786, %v4137
    %v4361 = vadd.f32 %v3787, %v4140
    %v4362 = vadd.f32 %v3788, %v4143
    %v4363 = vadd.f32 %v3789, %v4146
    %v4364 = vadd.f32 %v3790, %v4149
    %v4365 = vadd.f32 %v3791, %v4152
    %v4366 = vadd.f32 %v3792, %v4155
    %v4367 = vadd.f32 %v3793, %v4158
    %v4368 = vadd.f32 %v3794, %v4161
    %v4369 = vadd.f32 %v3795, %v4164
    %v4370 = vadd.f32 %v3796, %v4167
    %v4371 = vadd.f32 %v3797, %v4170
    %v4372 = vadd.f32 %v3798, %v4173
    %v4373 = vadd.f32 %v3799, %v4176
    %v4374 = vadd.f32 %v3800, %v4179
    %v4375 = vadd.f32 %v3801, %v4182
    %v4376 = vadd.f32 %v3802, %v4185
    %v4377 = vadd.f32 %v3803, %v4188
    %v4378 = vadd.f32 %v3804, %v4191
    %v4379 = vadd.f32 %v3805, %v4194
    %v4380 = vadd.f32 %v3806, %v4197
    %v4381 = vadd.f32 %v3807, %v4200
    %v4382 = vadd.f32 %v3808, %v4203
    %v4383 = vadd.f32 %v3809, %v4206
    %v4384 = vadd.f32 %v3810, %v4209
    %v4385 = vadd.f32 %v3811, %v4212
    %v4386 = vadd.f32 %v3812, %v4215
    %v4387 = vadd.f32 %v3813, %v4218
    %v4388 = vadd.f32 %v3814, %v4221
    %v4389 = vadd.f32 %v3815, %v4224
    %v4390 = vadd.f32 %v3816, %v4227
    %v4391 = vadd.f32 %v3817, %v4230
    %v4392 = vadd.f32 %v3818, %v4233
    %v4393 = vadd.f32 %v3819, %v4236
    %v4394 = vadd.f32 %v3820, %v4239
    %v4395 = vadd.f32 %v3821, %v4242
    %v4396 = vadd.f32 %v3822, %v4245
    %v4397 = vadd.f32 %v3823, %v4248
    %v4398 = vadd.f32 %v3824, %v4251
    %v4399 = vadd.f32 %v3825, %v4254
    %v4400 = vadd.f32 %v3826, %v4257
    %v4401 = vadd.f32 %v3827, %v4260
    %v4402 = vadd.f32 %v3828, %v4263
    %v4403 = vadd.f32 %v3829, %v4266
    %v4404 = vadd.f32 %v3830, %v4269
    %v4405 = vadd.f32 %v3831, %v4272
    %v4406 = vadd.f32 %v3832, %v4275
    %v4407 = vadd.f32 %v3833, %v4278
    %s4408 = scalar_lea.vmem %s1, 768
    %v4409 = vld [vmem:[%s4408] sm:$0xff]
    %v4410 = vld [vmem:[%s4408 + $0x8] sm:$0xff]
    %v4411 = vld [vmem:[%s4408 + $0x10] sm:$0xff]
    %v4412 = vld [vmem:[%s4408 + $0x18] sm:$0xff]
    %v4413 = vld [vmem:[%s4408 + $0x20] sm:$0xff]
    %v4414 = vld [vmem:[%s4408 + $0x28] sm:$0xff]
    %v4415 = vld [vmem:[%s4408 + $0x30] sm:$0xff]
    %v4416 = vld [vmem:[%s4408 + $0x38] sm:$0xff]
    %v4417 = vld [vmem:[%s4408 + $0x40] sm:$0xff]
    %v4418 = vld [vmem:[%s4408 + $0x48] sm:$0xff]
    %v4419 = vld [vmem:[%s4408 + $0x50] sm:$0xff]
    %v4420 = vld [vmem:[%s4408 + $0x58] sm:$0xff]
    %v4421 = vld [vmem:[%s4408 + $0x60] sm:$0xff]
    %v4422 = vld [vmem:[%s4408 + $0x68] sm:$0xff]
    %v4423 = vld [vmem:[%s4408 + $0x70] sm:$0xff]
    %v4424 = vld [vmem:[%s4408 + $0x78] sm:$0xff]
    %4425 = vmatpush.msra.mxu0 %v4424
    %4426 = vmatpush.msra.mxu0 %v4423
    %4427 = vmatpush.msra.mxu0 %v4422
    %4428 = vmatpush.msra.mxu0 %v4421
    %4429 = vmatpush.msra.mxu0 %v4420
    %4430 = vmatpush.msra.mxu0 %v4419
    %4431 = vmatpush.msra.mxu0 %v4418
    %4432 = vmatpush.msra.mxu0 %v4417
    %4433 = vmatpush.msra.mxu0 %v4416
    %4434 = vmatpush.msra.mxu0 %v4415
    %4435 = vmatpush.msra.mxu0 %v4414
    %4436 = vmatpush.msra.mxu0 %v4413
    %4437 = vmatpush.msra.mxu0 %v4412
    %4438 = vmatpush.msra.mxu0 %v4411
    %4439 = vmatpush.msra.mxu0 %v4410
    %4440 = vmatpush.msra.mxu0 %v4409
    %4441 = vmatmul.f32.gmra.mxu0 %v21
    %v4442 = vpop.f32.mrf.mxu0
    %v4443 = vadd.f32 0.0, %v4442
    %4444 = vmatmul.f32.gmra.mxu0 %v22
    %v4445 = vpop.f32.mrf.mxu0
    %v4446 = vadd.f32 0.0, %v4445
    %4447 = vmatmul.f32.gmra.mxu0 %v24
    %v4448 = vpop.f32.mrf.mxu0
    %v4449 = vadd.f32 0.0, %v4448
    %4450 = vmatmul.f32.gmra.mxu0 %v25
    %v4451 = vpop.f32.mrf.mxu0
    %v4452 = vadd.f32 0.0, %v4451
    %4453 = vmatmul.f32.gmra.mxu0 %v27
    %v4454 = vpop.f32.mrf.mxu0
    %v4455 = vadd.f32 0.0, %v4454
    %4456 = vmatmul.f32.gmra.mxu0 %v28
    %v4457 = vpop.f32.mrf.mxu0
    %v4458 = vadd.f32 0.0, %v4457
    %4459 = vmatmul.f32.gmra.mxu0 %v30
    %v4460 = vpop.f32.mrf.mxu0
    %v4461 = vadd.f32 0.0, %v4460
    %4462 = vmatmul.f32.gmra.mxu0 %v31
    %v4463 = vpop.f32.mrf.mxu0
    %v4464 = vadd.f32 0.0, %v4463
    %4465 = vmatmul.f32.gmra.mxu0 %v33
    %v4466 = vpop.f32.mrf.mxu0
    %v4467 = vadd.f32 0.0, %v4466
    %4468 = vmatmul.f32.gmra.mxu0 %v34
    %v4469 = vpop.f32.mrf.mxu0
    %v4470 = vadd.f32 0.0, %v4469
    %4471 = vmatmul.f32.gmra.mxu0 %v36
    %v4472 = vpop.f32.mrf.mxu0
    %v4473 = vadd.f32 0.0, %v4472
    %4474 = vmatmul.f32.gmra.mxu0 %v37
    %v4475 = vpop.f32.mrf.mxu0
    %v4476 = vadd.f32 0.0, %v4475
    %4477 = vmatmul.f32.gmra.mxu0 %v39
    %v4478 = vpop.f32.mrf.mxu0
    %v4479 = vadd.f32 0.0, %v4478
    %4480 = vmatmul.f32.gmra.mxu0 %v40
    %v4481 = vpop.f32.mrf.mxu0
    %v4482 = vadd.f32 0.0, %v4481
    %4483 = vmatmul.f32.gmra.mxu0 %v42
    %v4484 = vpop.f32.mrf.mxu0
    %v4485 = vadd.f32 0.0, %v4484
    %4486 = vmatmul.f32.gmra.mxu0 %v43
    %v4487 = vpop.f32.mrf.mxu0
    %v4488 = vadd.f32 0.0, %v4487
    %4489 = vmatmul.f32.gmra.mxu0 %v45
    %v4490 = vpop.f32.mrf.mxu0
    %v4491 = vadd.f32 0.0, %v4490
    %4492 = vmatmul.f32.gmra.mxu0 %v46
    %v4493 = vpop.f32.mrf.mxu0
    %v4494 = vadd.f32 0.0, %v4493
    %4495 = vmatmul.f32.gmra.mxu0 %v48
    %v4496 = vpop.f32.mrf.mxu0
    %v4497 = vadd.f32 0.0, %v4496
    %4498 = vmatmul.f32.gmra.mxu0 %v49
    %v4499 = vpop.f32.mrf.mxu0
    %v4500 = vadd.f32 0.0, %v4499
    %4501 = vmatmul.f32.gmra.mxu0 %v51
    %v4502 = vpop.f32.mrf.mxu0
    %v4503 = vadd.f32 0.0, %v4502
    %4504 = vmatmul.f32.gmra.mxu0 %v52
    %v4505 = vpop.f32.mrf.mxu0
    %v4506 = vadd.f32 0.0, %v4505
    %4507 = vmatmul.f32.gmra.mxu0 %v54
    %v4508 = vpop.f32.mrf.mxu0
    %v4509 = vadd.f32 0.0, %v4508
    %4510 = vmatmul.f32.gmra.mxu0 %v55
    %v4511 = vpop.f32.mrf.mxu0
    %v4512 = vadd.f32 0.0, %v4511
    %4513 = vmatmul.f32.gmra.mxu0 %v57
    %v4514 = vpop.f32.mrf.mxu0
    %v4515 = vadd.f32 0.0, %v4514
    %4516 = vmatmul.f32.gmra.mxu0 %v58
    %v4517 = vpop.f32.mrf.mxu0
    %v4518 = vadd.f32 0.0, %v4517
    %4519 = vmatmul.f32.gmra.mxu0 %v60
    %v4520 = vpop.f32.mrf.mxu0
    %v4521 = vadd.f32 0.0, %v4520
    %4522 = vmatmul.f32.gmra.mxu0 %v61
    %v4523 = vpop.f32.mrf.mxu0
    %v4524 = vadd.f32 0.0, %v4523
    %4525 = vmatmul.f32.gmra.mxu0 %v63
    %v4526 = vpop.f32.mrf.mxu0
    %v4527 = vadd.f32 0.0, %v4526
    %4528 = vmatmul.f32.gmra.mxu0 %v64
    %v4529 = vpop.f32.mrf.mxu0
    %v4530 = vadd.f32 0.0, %v4529
    %4531 = vmatmul.f32.gmra.mxu0 %v66
    %v4532 = vpop.f32.mrf.mxu0
    %v4533 = vadd.f32 0.0, %v4532
    %4534 = vmatmul.f32.gmra.mxu0 %v67
    %v4535 = vpop.f32.mrf.mxu0
    %v4536 = vadd.f32 0.0, %v4535
    %4537 = vmatmul.f32.gmra.mxu0 %v75
    %v4538 = vpop.f32.mrf.mxu0
    %v4539 = vadd.f32 0.0, %v4538
    %4540 = vmatmul.f32.gmra.mxu0 %v76
    %v4541 = vpop.f32.mrf.mxu0
    %v4542 = vadd.f32 0.0, %v4541
    %4543 = vmatmul.f32.gmra.mxu0 %v78
    %v4544 = vpop.f32.mrf.mxu0
    %v4545 = vadd.f32 0.0, %v4544
    %4546 = vmatmul.f32.gmra.mxu0 %v79
    %v4547 = vpop.f32.mrf.mxu0
    %v4548 = vadd.f32 0.0, %v4547
    %4549 = vmatmul.f32.gmra.mxu0 %v81
    %v4550 = vpop.f32.mrf.mxu0
    %v4551 = vadd.f32 0.0, %v4550
    %4552 = vmatmul.f32.gmra.mxu0 %v82
    %v4553 = vpop.f32.mrf.mxu0
    %v4554 = vadd.f32 0.0, %v4553
    %4555 = vmatmul.f32.gmra.mxu0 %v84
    %v4556 = vpop.f32.mrf.mxu0
    %v4557 = vadd.f32 0.0, %v4556
    %4558 = vmatmul.f32.gmra.mxu0 %v85
    %v4559 = vpop.f32.mrf.mxu0
    %v4560 = vadd.f32 0.0, %v4559
    %4561 = vmatmul.f32.gmra.mxu0 %v87
    %v4562 = vpop.f32.mrf.mxu0
    %v4563 = vadd.f32 0.0, %v4562
    %4564 = vmatmul.f32.gmra.mxu0 %v88
    %v4565 = vpop.f32.mrf.mxu0
    %v4566 = vadd.f32 0.0, %v4565
    %4567 = vmatmul.f32.gmra.mxu0 %v90
    %v4568 = vpop.f32.mrf.mxu0
    %v4569 = vadd.f32 0.0, %v4568
    %4570 = vmatmul.f32.gmra.mxu0 %v91
    %v4571 = vpop.f32.mrf.mxu0
    %v4572 = vadd.f32 0.0, %v4571
    %4573 = vmatmul.f32.gmra.mxu0 %v93
    %v4574 = vpop.f32.mrf.mxu0
    %v4575 = vadd.f32 0.0, %v4574
    %4576 = vmatmul.f32.gmra.mxu0 %v94
    %v4577 = vpop.f32.mrf.mxu0
    %v4578 = vadd.f32 0.0, %v4577
    %4579 = vmatmul.f32.gmra.mxu0 %v96
    %v4580 = vpop.f32.mrf.mxu0
    %v4581 = vadd.f32 0.0, %v4580
    %4582 = vmatmul.f32.gmra.mxu0 %v97
    %v4583 = vpop.f32.mrf.mxu0
    %v4584 = vadd.f32 0.0, %v4583
    %4585 = vmatmul.f32.gmra.mxu0 %v99
    %v4586 = vpop.f32.mrf.mxu0
    %v4587 = vadd.f32 0.0, %v4586
    %4588 = vmatmul.f32.gmra.mxu0 %v100
    %v4589 = vpop.f32.mrf.mxu0
    %v4590 = vadd.f32 0.0, %v4589
    %4591 = vmatmul.f32.gmra.mxu0 %v102
    %v4592 = vpop.f32.mrf.mxu0
    %v4593 = vadd.f32 0.0, %v4592
    %4594 = vmatmul.f32.gmra.mxu0 %v103
    %v4595 = vpop.f32.mrf.mxu0
    %v4596 = vadd.f32 0.0, %v4595
    %4597 = vmatmul.f32.gmra.mxu0 %v105
    %v4598 = vpop.f32.mrf.mxu0
    %v4599 = vadd.f32 0.0, %v4598
    %4600 = vmatmul.f32.gmra.mxu0 %v106
    %v4601 = vpop.f32.mrf.mxu0
    %v4602 = vadd.f32 0.0, %v4601
    %4603 = vmatmul.f32.gmra.mxu0 %v108
    %v4604 = vpop.f32.mrf.mxu0
    %v4605 = vadd.f32 0.0, %v4604
    %4606 = vmatmul.f32.gmra.mxu0 %v109
    %v4607 = vpop.f32.mrf.mxu0
    %v4608 = vadd.f32 0.0, %v4607
    %4609 = vmatmul.f32.gmra.mxu0 %v111
    %v4610 = vpop.f32.mrf.mxu0
    %v4611 = vadd.f32 0.0, %v4610
    %4612 = vmatmul.f32.gmra.mxu0 %v112
    %v4613 = vpop.f32.mrf.mxu0
    %v4614 = vadd.f32 0.0, %v4613
    %4615 = vmatmul.f32.gmra.mxu0 %v114
    %v4616 = vpop.f32.mrf.mxu0
    %v4617 = vadd.f32 0.0, %v4616
    %4618 = vmatmul.f32.gmra.mxu0 %v115
    %v4619 = vpop.f32.mrf.mxu0
    %v4620 = vadd.f32 0.0, %v4619
    %4621 = vmatmul.f32.gmra.mxu0 %v117
    %v4622 = vpop.f32.mrf.mxu0
    %v4623 = vadd.f32 0.0, %v4622
    %4624 = vmatmul.f32.gmra.mxu0 %v118
    %v4625 = vpop.f32.mrf.mxu0
    %v4626 = vadd.f32 0.0, %v4625
    %4627 = vmatmul.f32.gmra.mxu0 %v120
    %v4628 = vpop.f32.mrf.mxu0
    %v4629 = vadd.f32 0.0, %v4628
    %4630 = vmatmul.f32.gmra.mxu0 %v121
    %v4631 = vpop.f32.mrf.mxu0
    %v4632 = vadd.f32 0.0, %v4631
    %4633 = vmatmul.f32.gmra.mxu0 %v129
    %v4634 = vpop.f32.mrf.mxu0
    %v4635 = vadd.f32 0.0, %v4634
    %4636 = vmatmul.f32.gmra.mxu0 %v130
    %v4637 = vpop.f32.mrf.mxu0
    %v4638 = vadd.f32 0.0, %v4637
    %4639 = vmatmul.f32.gmra.mxu0 %v132
    %v4640 = vpop.f32.mrf.mxu0
    %v4641 = vadd.f32 0.0, %v4640
    %4642 = vmatmul.f32.gmra.mxu0 %v133
    %v4643 = vpop.f32.mrf.mxu0
    %v4644 = vadd.f32 0.0, %v4643
    %4645 = vmatmul.f32.gmra.mxu0 %v135
    %v4646 = vpop.f32.mrf.mxu0
    %v4647 = vadd.f32 0.0, %v4646
    %4648 = vmatmul.f32.gmra.mxu0 %v136
    %v4649 = vpop.f32.mrf.mxu0
    %v4650 = vadd.f32 0.0, %v4649
    %4651 = vmatmul.f32.gmra.mxu0 %v138
    %v4652 = vpop.f32.mrf.mxu0
    %v4653 = vadd.f32 0.0, %v4652
    %4654 = vmatmul.f32.gmra.mxu0 %v139
    %v4655 = vpop.f32.mrf.mxu0
    %v4656 = vadd.f32 0.0, %v4655
    %4657 = vmatmul.f32.gmra.mxu0 %v141
    %v4658 = vpop.f32.mrf.mxu0
    %v4659 = vadd.f32 0.0, %v4658
    %4660 = vmatmul.f32.gmra.mxu0 %v142
    %v4661 = vpop.f32.mrf.mxu0
    %v4662 = vadd.f32 0.0, %v4661
    %4663 = vmatmul.f32.gmra.mxu0 %v144
    %v4664 = vpop.f32.mrf.mxu0
    %v4665 = vadd.f32 0.0, %v4664
    %4666 = vmatmul.f32.gmra.mxu0 %v145
    %v4667 = vpop.f32.mrf.mxu0
    %v4668 = vadd.f32 0.0, %v4667
    %4669 = vmatmul.f32.gmra.mxu0 %v147
    %v4670 = vpop.f32.mrf.mxu0
    %v4671 = vadd.f32 0.0, %v4670
    %4672 = vmatmul.f32.gmra.mxu0 %v148
    %v4673 = vpop.f32.mrf.mxu0
    %v4674 = vadd.f32 0.0, %v4673
    %4675 = vmatmul.f32.gmra.mxu0 %v150
    %v4676 = vpop.f32.mrf.mxu0
    %v4677 = vadd.f32 0.0, %v4676
    %4678 = vmatmul.f32.gmra.mxu0 %v151
    %v4679 = vpop.f32.mrf.mxu0
    %v4680 = vadd.f32 0.0, %v4679
    %4681 = vmatmul.f32.gmra.mxu0 %v153
    %v4682 = vpop.f32.mrf.mxu0
    %v4683 = vadd.f32 0.0, %v4682
    %4684 = vmatmul.f32.gmra.mxu0 %v154
    %v4685 = vpop.f32.mrf.mxu0
    %v4686 = vadd.f32 0.0, %v4685
    %4687 = vmatmul.f32.gmra.mxu0 %v156
    %v4688 = vpop.f32.mrf.mxu0
    %v4689 = vadd.f32 0.0, %v4688
    %4690 = vmatmul.f32.gmra.mxu0 %v157
    %v4691 = vpop.f32.mrf.mxu0
    %v4692 = vadd.f32 0.0, %v4691
    %4693 = vmatmul.f32.gmra.mxu0 %v159
    %v4694 = vpop.f32.mrf.mxu0
    %v4695 = vadd.f32 0.0, %v4694
    %4696 = vmatmul.f32.gmra.mxu0 %v160
    %v4697 = vpop.f32.mrf.mxu0
    %v4698 = vadd.f32 0.0, %v4697
    %4699 = vmatmul.f32.gmra.mxu0 %v162
    %v4700 = vpop.f32.mrf.mxu0
    %v4701 = vadd.f32 0.0, %v4700
    %4702 = vmatmul.f32.gmra.mxu0 %v163
    %v4703 = vpop.f32.mrf.mxu0
    %v4704 = vadd.f32 0.0, %v4703
    %4705 = vmatmul.f32.gmra.mxu0 %v165
    %v4706 = vpop.f32.mrf.mxu0
    %v4707 = vadd.f32 0.0, %v4706
    %4708 = vmatmul.f32.gmra.mxu0 %v166
    %v4709 = vpop.f32.mrf.mxu0
    %v4710 = vadd.f32 0.0, %v4709
    %4711 = vmatmul.f32.gmra.mxu0 %v168
    %v4712 = vpop.f32.mrf.mxu0
    %v4713 = vadd.f32 0.0, %v4712
    %4714 = vmatmul.f32.gmra.mxu0 %v169
    %v4715 = vpop.f32.mrf.mxu0
    %v4716 = vadd.f32 0.0, %v4715
    %4717 = vmatmul.f32.gmra.mxu0 %v171
    %v4718 = vpop.f32.mrf.mxu0
    %v4719 = vadd.f32 0.0, %v4718
    %4720 = vmatmul.f32.gmra.mxu0 %v172
    %v4721 = vpop.f32.mrf.mxu0
    %v4722 = vadd.f32 0.0, %v4721
    %4723 = vmatmul.f32.gmra.mxu0 %v174
    %v4724 = vpop.f32.mrf.mxu0
    %v4725 = vadd.f32 0.0, %v4724
    %4726 = vmatmul.f32.gmra.mxu0 %v175
    %v4727 = vpop.f32.mrf.mxu0
    %v4728 = vadd.f32 0.0, %v4727
    %4729 = vmatmul.f32.gmra.mxu0 %v183
    %v4730 = vpop.f32.mrf.mxu0
    %v4731 = vadd.f32 0.0, %v4730
    %4732 = vmatmul.f32.gmra.mxu0 %v184
    %v4733 = vpop.f32.mrf.mxu0
    %v4734 = vadd.f32 0.0, %v4733
    %4735 = vmatmul.f32.gmra.mxu0 %v186
    %v4736 = vpop.f32.mrf.mxu0
    %v4737 = vadd.f32 0.0, %v4736
    %4738 = vmatmul.f32.gmra.mxu0 %v187
    %v4739 = vpop.f32.mrf.mxu0
    %v4740 = vadd.f32 0.0, %v4739
    %4741 = vmatmul.f32.gmra.mxu0 %v189
    %v4742 = vpop.f32.mrf.mxu0
    %v4743 = vadd.f32 0.0, %v4742
    %4744 = vmatmul.f32.gmra.mxu0 %v190
    %v4745 = vpop.f32.mrf.mxu0
    %v4746 = vadd.f32 0.0, %v4745
    %4747 = vmatmul.f32.gmra.mxu0 %v192
    %v4748 = vpop.f32.mrf.mxu0
    %v4749 = vadd.f32 0.0, %v4748
    %4750 = vmatmul.f32.gmra.mxu0 %v193
    %v4751 = vpop.f32.mrf.mxu0
    %v4752 = vadd.f32 0.0, %v4751
    %4753 = vmatmul.f32.gmra.mxu0 %v195
    %v4754 = vpop.f32.mrf.mxu0
    %v4755 = vadd.f32 0.0, %v4754
    %4756 = vmatmul.f32.gmra.mxu0 %v196
    %v4757 = vpop.f32.mrf.mxu0
    %v4758 = vadd.f32 0.0, %v4757
    %4759 = vmatmul.f32.gmra.mxu0 %v198
    %v4760 = vpop.f32.mrf.mxu0
    %v4761 = vadd.f32 0.0, %v4760
    %4762 = vmatmul.f32.gmra.mxu0 %v199
    %v4763 = vpop.f32.mrf.mxu0
    %v4764 = vadd.f32 0.0, %v4763
    %4765 = vmatmul.f32.gmra.mxu0 %v201
    %v4766 = vpop.f32.mrf.mxu0
    %v4767 = vadd.f32 0.0, %v4766
    %4768 = vmatmul.f32.gmra.mxu0 %v202
    %v4769 = vpop.f32.mrf.mxu0
    %v4770 = vadd.f32 0.0, %v4769
    %4771 = vmatmul.f32.gmra.mxu0 %v204
    %v4772 = vpop.f32.mrf.mxu0
    %v4773 = vadd.f32 0.0, %v4772
    %4774 = vmatmul.f32.gmra.mxu0 %v205
    %v4775 = vpop.f32.mrf.mxu0
    %v4776 = vadd.f32 0.0, %v4775
    %4777 = vmatmul.f32.gmra.mxu0 %v207
    %v4778 = vpop.f32.mrf.mxu0
    %v4779 = vadd.f32 0.0, %v4778
    %4780 = vmatmul.f32.gmra.mxu0 %v208
    %v4781 = vpop.f32.mrf.mxu0
    %v4782 = vadd.f32 0.0, %v4781
    %4783 = vmatmul.f32.gmra.mxu0 %v210
    %v4784 = vpop.f32.mrf.mxu0
    %v4785 = vadd.f32 0.0, %v4784
    %4786 = vmatmul.f32.gmra.mxu0 %v211
    %v4787 = vpop.f32.mrf.mxu0
    %v4788 = vadd.f32 0.0, %v4787
    %4789 = vmatmul.f32.gmra.mxu0 %v213
    %v4790 = vpop.f32.mrf.mxu0
    %v4791 = vadd.f32 0.0, %v4790
    %4792 = vmatmul.f32.gmra.mxu0 %v214
    %v4793 = vpop.f32.mrf.mxu0
    %v4794 = vadd.f32 0.0, %v4793
    %4795 = vmatmul.f32.gmra.mxu0 %v216
    %v4796 = vpop.f32.mrf.mxu0
    %v4797 = vadd.f32 0.0, %v4796
    %4798 = vmatmul.f32.gmra.mxu0 %v217
    %v4799 = vpop.f32.mrf.mxu0
    %v4800 = vadd.f32 0.0, %v4799
    %4801 = vmatmul.f32.gmra.mxu0 %v219
    %v4802 = vpop.f32.mrf.mxu0
    %v4803 = vadd.f32 0.0, %v4802
    %4804 = vmatmul.f32.gmra.mxu0 %v220
    %v4805 = vpop.f32.mrf.mxu0
    %v4806 = vadd.f32 0.0, %v4805
    %4807 = vmatmul.f32.gmra.mxu0 %v222
    %v4808 = vpop.f32.mrf.mxu0
    %v4809 = vadd.f32 0.0, %v4808
    %4810 = vmatmul.f32.gmra.mxu0 %v223
    %v4811 = vpop.f32.mrf.mxu0
    %v4812 = vadd.f32 0.0, %v4811
    %4813 = vmatmul.f32.gmra.mxu0 %v225
    %v4814 = vpop.f32.mrf.mxu0
    %v4815 = vadd.f32 0.0, %v4814
    %4816 = vmatmul.f32.gmra.mxu0 %v226
    %v4817 = vpop.f32.mrf.mxu0
    %v4818 = vadd.f32 0.0, %v4817
    %4819 = vmatmul.f32.gmra.mxu0 %v228
    %v4820 = vpop.f32.mrf.mxu0
    %v4821 = vadd.f32 0.0, %v4820
    %4822 = vmatmul.f32.gmra.mxu0 %v229
    %v4823 = vpop.f32.mrf.mxu0
    %v4824 = vadd.f32 0.0, %v4823
    %4825 = vdwg.mxu0
    %v4826 = vadd.f32 %v4280, %v4443
    %v4827 = vadd.f32 %v4281, %v4446
    %v4828 = vadd.f32 %v4282, %v4449
    %v4829 = vadd.f32 %v4283, %v4452
    %v4830 = vadd.f32 %v4284, %v4455
    %v4831 = vadd.f32 %v4285, %v4458
    %v4832 = vadd.f32 %v4286, %v4461
    %v4833 = vadd.f32 %v4287, %v4464
    %v4834 = vadd.f32 %v4288, %v4467
    %v4835 = vadd.f32 %v4289, %v4470
    %v4836 = vadd.f32 %v4290, %v4473
    %v4837 = vadd.f32 %v4291, %v4476
    %v4838 = vadd.f32 %v4292, %v4479
    %v4839 = vadd.f32 %v4293, %v4482
    %v4840 = vadd.f32 %v4294, %v4485
    %v4841 = vadd.f32 %v4295, %v4488
    %v4842 = vadd.f32 %v4296, %v4491
    %v4843 = vadd.f32 %v4297, %v4494
    %v4844 = vadd.f32 %v4298, %v4497
    %v4845 = vadd.f32 %v4299, %v4500
    %v4846 = vadd.f32 %v4300, %v4503
    %v4847 = vadd.f32 %v4301, %v4506
    %v4848 = vadd.f32 %v4302, %v4509
    %v4849 = vadd.f32 %v4303, %v4512
    %v4850 = vadd.f32 %v4304, %v4515
    %v4851 = vadd.f32 %v4305, %v4518
    %v4852 = vadd.f32 %v4306, %v4521
    %v4853 = vadd.f32 %v4307, %v4524
    %v4854 = vadd.f32 %v4308, %v4527
    %v4855 = vadd.f32 %v4309, %v4530
    %v4856 = vadd.f32 %v4310, %v4533
    %v4857 = vadd.f32 %v4311, %v4536
    %v4858 = vadd.f32 %v4312, %v4539
    %v4859 = vadd.f32 %v4313, %v4542
    %v4860 = vadd.f32 %v4314, %v4545
    %v4861 = vadd.f32 %v4315, %v4548
    %v4862 = vadd.f32 %v4316, %v4551
    %v4863 = vadd.f32 %v4317, %v4554
    %v4864 = vadd.f32 %v4318, %v4557
    %v4865 = vadd.f32 %v4319, %v4560
    %v4866 = vadd.f32 %v4320, %v4563
    %v4867 = vadd.f32 %v4321, %v4566
    %v4868 = vadd.f32 %v4322, %v4569
    %v4869 = vadd.f32 %v4323, %v4572
    %v4870 = vadd.f32 %v4324, %v4575
    %v4871 = vadd.f32 %v4325, %v4578
    %v4872 = vadd.f32 %v4326, %v4581
    %v4873 = vadd.f32 %v4327, %v4584
    %v4874 = vadd.f32 %v4328, %v4587
    %v4875 = vadd.f32 %v4329, %v4590
    %v4876 = vadd.f32 %v4330, %v4593
    %v4877 = vadd.f32 %v4331, %v4596
    %v4878 = vadd.f32 %v4332, %v4599
    %v4879 = vadd.f32 %v4333, %v4602
    %v4880 = vadd.f32 %v4334, %v4605
    %v4881 = vadd.f32 %v4335, %v4608
    %v4882 = vadd.f32 %v4336, %v4611
    %v4883 = vadd.f32 %v4337, %v4614
    %v4884 = vadd.f32 %v4338, %v4617
    %v4885 = vadd.f32 %v4339, %v4620
    %v4886 = vadd.f32 %v4340, %v4623
    %v4887 = vadd.f32 %v4341, %v4626
    %v4888 = vadd.f32 %v4342, %v4629
    %v4889 = vadd.f32 %v4343, %v4632
    %v4890 = vadd.f32 %v4344, %v4635
    %v4891 = vadd.f32 %v4345, %v4638
    %v4892 = vadd.f32 %v4346, %v4641
    %v4893 = vadd.f32 %v4347, %v4644
    %v4894 = vadd.f32 %v4348, %v4647
    %v4895 = vadd.f32 %v4349, %v4650
    %v4896 = vadd.f32 %v4350, %v4653
    %v4897 = vadd.f32 %v4351, %v4656
    %v4898 = vadd.f32 %v4352, %v4659
    %v4899 = vadd.f32 %v4353, %v4662
    %v4900 = vadd.f32 %v4354, %v4665
    %v4901 = vadd.f32 %v4355, %v4668
    %v4902 = vadd.f32 %v4356, %v4671
    %v4903 = vadd.f32 %v4357, %v4674
    %v4904 = vadd.f32 %v4358, %v4677
    %v4905 = vadd.f32 %v4359, %v4680
    %v4906 = vadd.f32 %v4360, %v4683
    %v4907 = vadd.f32 %v4361, %v4686
    %v4908 = vadd.f32 %v4362, %v4689
    %v4909 = vadd.f32 %v4363, %v4692
    %v4910 = vadd.f32 %v4364, %v4695
    %v4911 = vadd.f32 %v4365, %v4698
    %v4912 = vadd.f32 %v4366, %v4701
    %v4913 = vadd.f32 %v4367, %v4704
    %v4914 = vadd.f32 %v4368, %v4707
    %v4915 = vadd.f32 %v4369, %v4710
    %v4916 = vadd.f32 %v4370, %v4713
    %v4917 = vadd.f32 %v4371, %v4716
    %v4918 = vadd.f32 %v4372, %v4719
    %v4919 = vadd.f32 %v4373, %v4722
    %v4920 = vadd.f32 %v4374, %v4725
    %v4921 = vadd.f32 %v4375, %v4728
    %v4922 = vadd.f32 %v4376, %v4731
    %v4923 = vadd.f32 %v4377, %v4734
    %v4924 = vadd.f32 %v4378, %v4737
    %v4925 = vadd.f32 %v4379, %v4740
    %v4926 = vadd.f32 %v4380, %v4743
    %v4927 = vadd.f32 %v4381, %v4746
    %v4928 = vadd.f32 %v4382, %v4749
    %v4929 = vadd.f32 %v4383, %v4752
    %v4930 = vadd.f32 %v4384, %v4755
    %v4931 = vadd.f32 %v4385, %v4758
    %v4932 = vadd.f32 %v4386, %v4761
    %v4933 = vadd.f32 %v4387, %v4764
    %v4934 = vadd.f32 %v4388, %v4767
    %v4935 = vadd.f32 %v4389, %v4770
    %v4936 = vadd.f32 %v4390, %v4773
    %v4937 = vadd.f32 %v4391, %v4776
    %v4938 = vadd.f32 %v4392, %v4779
    %v4939 = vadd.f32 %v4393, %v4782
    %v4940 = vadd.f32 %v4394, %v4785
    %v4941 = vadd.f32 %v4395, %v4788
    %v4942 = vadd.f32 %v4396, %v4791
    %v4943 = vadd.f32 %v4397, %v4794
    %v4944 = vadd.f32 %v4398, %v4797
    %v4945 = vadd.f32 %v4399, %v4800
    %v4946 = vadd.f32 %v4400, %v4803
    %v4947 = vadd.f32 %v4401, %v4806
    %v4948 = vadd.f32 %v4402, %v4809
    %v4949 = vadd.f32 %v4403, %v4812
    %v4950 = vadd.f32 %v4404, %v4815
    %v4951 = vadd.f32 %v4405, %v4818
    %v4952 = vadd.f32 %v4406, %v4821
    %v4953 = vadd.f32 %v4407, %v4824
    %v4966 = vrot.slane %v66, 1
    %v4967 = vrot.slane %v67, 1
    %v4968 = vsel %vm439, %v4966, %v4967
    %v4969 = vrot.slane %v68, 1
    %v4970 = vsel %vm439, %v4967, %v4969
    %v4971 = vrot.slane %v120, 1
    %v4972 = vrot.slane %v121, 1
    %v4973 = vsel %vm439, %v4971, %v4972
    %v4974 = vrot.slane %v122, 1
    %v4975 = vsel %vm439, %v4972, %v4974
    %v4976 = vrot.slane %v174, 1
    %v4977 = vrot.slane %v175, 1
    %v4978 = vsel %vm439, %v4976, %v4977
    %v4979 = vrot.slane %v176, 1
    %v4980 = vsel %vm439, %v4977, %v4979
    %v4981 = vrot.slane %v228, 1
    %v4982 = vrot.slane %v229, 1
    %v4983 = vsel %vm439, %v4981, %v4982
    %v4984 = vrot.slane %v230, 1
    %v4985 = vsel %vm439, %v4982, %v4984
    %s4994 = scalar_lea.vmem %s1, 896
    %v4995 = vld [vmem:[%s4994] sm:$0xff]
    %v4996 = vld [vmem:[%s4994 + $0x8] sm:$0xff]
    %v4997 = vld [vmem:[%s4994 + $0x10] sm:$0xff]
    %v4998 = vld [vmem:[%s4994 + $0x18] sm:$0xff]
    %v4999 = vld [vmem:[%s4994 + $0x20] sm:$0xff]
    %v5000 = vld [vmem:[%s4994 + $0x28] sm:$0xff]
    %v5001 = vld [vmem:[%s4994 + $0x30] sm:$0xff]
    %v5002 = vld [vmem:[%s4994 + $0x38] sm:$0xff]
    %v5003 = vld [vmem:[%s4994 + $0x40] sm:$0xff]
    %v5004 = vld [vmem:[%s4994 + $0x48] sm:$0xff]
    %v5005 = vld [vmem:[%s4994 + $0x50] sm:$0xff]
    %v5006 = vld [vmem:[%s4994 + $0x58] sm:$0xff]
    %v5007 = vld [vmem:[%s4994 + $0x60] sm:$0xff]
    %v5008 = vld [vmem:[%s4994 + $0x68] sm:$0xff]
    %v5009 = vld [vmem:[%s4994 + $0x70] sm:$0xff]
    %v5010 = vld [vmem:[%s4994 + $0x78] sm:$0xff]
    %5011 = vmatpush.msra.mxu0 %v5010
    %5012 = vmatpush.msra.mxu0 %v5009
    %5013 = vmatpush.msra.mxu0 %v5008
    %5014 = vmatpush.msra.mxu0 %v5007
    %5015 = vmatpush.msra.mxu0 %v5006
    %5016 = vmatpush.msra.mxu0 %v5005
    %5017 = vmatpush.msra.mxu0 %v5004
    %5018 = vmatpush.msra.mxu0 %v5003
    %5019 = vmatpush.msra.mxu0 %v5002
    %5020 = vmatpush.msra.mxu0 %v5001
    %5021 = vmatpush.msra.mxu0 %v5000
    %5022 = vmatpush.msra.mxu0 %v4999
    %5023 = vmatpush.msra.mxu0 %v4998
    %5024 = vmatpush.msra.mxu0 %v4997
    %5025 = vmatpush.msra.mxu0 %v4996
    %5026 = vmatpush.msra.mxu0 %v4995
    %5027 = vmatmul.f32.gmra.mxu0 %v452
    %v5028 = vpop.f32.mrf.mxu0
    %v5029 = vadd.f32 0.0, %v5028
    %5030 = vmatmul.f32.gmra.mxu0 %v454
    %v5031 = vpop.f32.mrf.mxu0
    %v5032 = vadd.f32 0.0, %v5031
    %5033 = vmatmul.f32.gmra.mxu0 %v457
    %v5034 = vpop.f32.mrf.mxu0
    %v5035 = vadd.f32 0.0, %v5034
    %5036 = vmatmul.f32.gmra.mxu0 %v459
    %v5037 = vpop.f32.mrf.mxu0
    %v5038 = vadd.f32 0.0, %v5037
    %5039 = vmatmul.f32.gmra.mxu0 %v462
    %v5040 = vpop.f32.mrf.mxu0
    %v5041 = vadd.f32 0.0, %v5040
    %5042 = vmatmul.f32.gmra.mxu0 %v464
    %v5043 = vpop.f32.mrf.mxu0
    %v5044 = vadd.f32 0.0, %v5043
    %5045 = vmatmul.f32.gmra.mxu0 %v467
    %v5046 = vpop.f32.mrf.mxu0
    %v5047 = vadd.f32 0.0, %v5046
    %5048 = vmatmul.f32.gmra.mxu0 %v469
    %v5049 = vpop.f32.mrf.mxu0
    %v5050 = vadd.f32 0.0, %v5049
    %5051 = vmatmul.f32.gmra.mxu0 %v472
    %v5052 = vpop.f32.mrf.mxu0
    %v5053 = vadd.f32 0.0, %v5052
    %5054 = vmatmul.f32.gmra.mxu0 %v474
    %v5055 = vpop.f32.mrf.mxu0
    %v5056 = vadd.f32 0.0, %v5055
    %5057 = vmatmul.f32.gmra.mxu0 %v477
    %v5058 = vpop.f32.mrf.mxu0
    %v5059 = vadd.f32 0.0, %v5058
    %5060 = vmatmul.f32.gmra.mxu0 %v479
    %v5061 = vpop.f32.mrf.mxu0
    %v5062 = vadd.f32 0.0, %v5061
    %5063 = vmatmul.f32.gmra.mxu0 %v482
    %v5064 = vpop.f32.mrf.mxu0
    %v5065 = vadd.f32 0.0, %v5064
    %5066 = vmatmul.f32.gmra.mxu0 %v484
    %v5067 = vpop.f32.mrf.mxu0
    %v5068 = vadd.f32 0.0, %v5067
    %5069 = vmatmul.f32.gmra.mxu0 %v487
    %v5070 = vpop.f32.mrf.mxu0
    %v5071 = vadd.f32 0.0, %v5070
    %5072 = vmatmul.f32.gmra.mxu0 %v489
    %v5073 = vpop.f32.mrf.mxu0
    %v5074 = vadd.f32 0.0, %v5073
    %5075 = vmatmul.f32.gmra.mxu0 %v492
    %v5076 = vpop.f32.mrf.mxu0
    %v5077 = vadd.f32 0.0, %v5076
    %5078 = vmatmul.f32.gmra.mxu0 %v494
    %v5079 = vpop.f32.mrf.mxu0
    %v5080 = vadd.f32 0.0, %v5079
    %5081 = vmatmul.f32.gmra.mxu0 %v497
    %v5082 = vpop.f32.mrf.mxu0
    %v5083 = vadd.f32 0.0, %v5082
    %5084 = vmatmul.f32.gmra.mxu0 %v499
    %v5085 = vpop.f32.mrf.mxu0
    %v5086 = vadd.f32 0.0, %v5085
    %5087 = vmatmul.f32.gmra.mxu0 %v502
    %v5088 = vpop.f32.mrf.mxu0
    %v5089 = vadd.f32 0.0, %v5088
    %5090 = vmatmul.f32.gmra.mxu0 %v504
    %v5091 = vpop.f32.mrf.mxu0
    %v5092 = vadd.f32 0.0, %v5091
    %5093 = vmatmul.f32.gmra.mxu0 %v507
    %v5094 = vpop.f32.mrf.mxu0
    %v5095 = vadd.f32 0.0, %v5094
    %5096 = vmatmul.f32.gmra.mxu0 %v509
    %v5097 = vpop.f32.mrf.mxu0
    %v5098 = vadd.f32 0.0, %v5097
    %5099 = vmatmul.f32.gmra.mxu0 %v512
    %v5100 = vpop.f32.mrf.mxu0
    %v5101 = vadd.f32 0.0, %v5100
    %5102 = vmatmul.f32.gmra.mxu0 %v514
    %v5103 = vpop.f32.mrf.mxu0
    %v5104 = vadd.f32 0.0, %v5103
    %5105 = vmatmul.f32.gmra.mxu0 %v517
    %v5106 = vpop.f32.mrf.mxu0
    %v5107 = vadd.f32 0.0, %v5106
    %5108 = vmatmul.f32.gmra.mxu0 %v519
    %v5109 = vpop.f32.mrf.mxu0
    %v5110 = vadd.f32 0.0, %v5109
    %5111 = vmatmul.f32.gmra.mxu0 %v3262
    %v5112 = vpop.f32.mrf.mxu0
    %v5113 = vadd.f32 0.0, %v5112
    %5114 = vmatmul.f32.gmra.mxu0 %v3264
    %v5115 = vpop.f32.mrf.mxu0
    %v5116 = vadd.f32 0.0, %v5115
    %5117 = vmatmul.f32.gmra.mxu0 %v4968
    %v5118 = vpop.f32.mrf.mxu0
    %v5119 = vadd.f32 0.0, %v5118
    %5120 = vmatmul.f32.gmra.mxu0 %v4970
    %v5121 = vpop.f32.mrf.mxu0
    %v5122 = vadd.f32 0.0, %v5121
    %5123 = vmatmul.f32.gmra.mxu0 %v532
    %v5124 = vpop.f32.mrf.mxu0
    %v5125 = vadd.f32 0.0, %v5124
    %5126 = vmatmul.f32.gmra.mxu0 %v534
    %v5127 = vpop.f32.mrf.mxu0
    %v5128 = vadd.f32 0.0, %v5127
    %5129 = vmatmul.f32.gmra.mxu0 %v537
    %v5130 = vpop.f32.mrf.mxu0
    %v5131 = vadd.f32 0.0, %v5130
    %5132 = vmatmul.f32.gmra.mxu0 %v539
    %v5133 = vpop.f32.mrf.mxu0
    %v5134 = vadd.f32 0.0, %v5133
    %5135 = vmatmul.f32.gmra.mxu0 %v542
    %v5136 = vpop.f32.mrf.mxu0
    %v5137 = vadd.f32 0.0, %v5136
    %5138 = vmatmul.f32.gmra.mxu0 %v544
    %v5139 = vpop.f32.mrf.mxu0
    %v5140 = vadd.f32 0.0, %v5139
    %5141 = vmatmul.f32.gmra.mxu0 %v547
    %v5142 = vpop.f32.mrf.mxu0
    %v5143 = vadd.f32 0.0, %v5142
    %5144 = vmatmul.f32.gmra.mxu0 %v549
    %v5145 = vpop.f32.mrf.mxu0
    %v5146 = vadd.f32 0.0, %v5145
    %5147 = vmatmul.f32.gmra.mxu0 %v552
    %v5148 = vpop.f32.mrf.mxu0
    %v5149 = vadd.f32 0.0, %v5148
    %5150 = vmatmul.f32.gmra.mxu0 %v554
    %v5151 = vpop.f32.mrf.mxu0
    %v5152 = vadd.f32 0.0, %v5151
    %5153 = vmatmul.f32.gmra.mxu0 %v557
    %v5154 = vpop.f32.mrf.mxu0
    %v5155 = vadd.f32 0.0, %v5154
    %5156 = vmatmul.f32.gmra.mxu0 %v559
    %v5157 = vpop.f32.mrf.mxu0
    %v5158 = vadd.f32 0.0, %v5157
    %5159 = vmatmul.f32.gmra.mxu0 %v562
    %v5160 = vpop.f32.mrf.mxu0
    %v5161 = vadd.f32 0.0, %v5160
    %5162 = vmatmul.f32.gmra.mxu0 %v564
    %v5163 = vpop.f32.mrf.mxu0
    %v5164 = vadd.f32 0.0, %v5163
    %5165 = vmatmul.f32.gmra.mxu0 %v567
    %v5166 = vpop.f32.mrf.mxu0
    %v5167 = vadd.f32 0.0, %v5166
    %5168 = vmatmul.f32.gmra.mxu0 %v569
    %v5169 = vpop.f32.mrf.mxu0
    %v5170 = vadd.f32 0.0, %v5169
    %5171 = vmatmul.f32.gmra.mxu0 %v572
    %v5172 = vpop.f32.mrf.mxu0
    %v5173 = vadd.f32 0.0, %v5172
    %5174 = vmatmul.f32.gmra.mxu0 %v574
    %v5175 = vpop.f32.mrf.mxu0
    %v5176 = vadd.f32 0.0, %v5175
    %5177 = vmatmul.f32.gmra.mxu0 %v577
    %v5178 = vpop.f32.mrf.mxu0
    %v5179 = vadd.f32 0.0, %v5178
    %5180 = vmatmul.f32.gmra.mxu0 %v579
    %v5181 = vpop.f32.mrf.mxu0
    %v5182 = vadd.f32 0.0, %v5181
    %5183 = vmatmul.f32.gmra.mxu0 %v582
    %v5184 = vpop.f32.mrf.mxu0
    %v5185 = vadd.f32 0.0, %v5184
    %5186 = vmatmul.f32.gmra.mxu0 %v584
    %v5187 = vpop.f32.mrf.mxu0
    %v5188 = vadd.f32 0.0, %v5187
    %5189 = vmatmul.f32.gmra.mxu0 %v587
    %v5190 = vpop.f32.mrf.mxu0
    %v5191 = vadd.f32 0.0, %v5190
    %5192 = vmatmul.f32.gmra.mxu0 %v589
    %v5193 = vpop.f32.mrf.mxu0
    %v5194 = vadd.f32 0.0, %v5193
    %5195 = vmatmul.f32.gmra.mxu0 %v592
    %v5196 = vpop.f32.mrf.mxu0
    %v5197 = vadd.f32 0.0, %v5196
    %5198 = vmatmul.f32.gmra.mxu0 %v594
    %v5199 = vpop.f32.mrf.mxu0
    %v5200 = vadd.f32 0.0, %v5199
    %5201 = vmatmul.f32.gmra.mxu0 %v597
    %v5202 = vpop.f32.mrf.mxu0
    %v5203 = vadd.f32 0.0, %v5202
    %5204 = vmatmul.f32.gmra.mxu0 %v599
    %v5205 = vpop.f32.mrf.mxu0
    %v5206 = vadd.f32 0.0, %v5205
    %5207 = vmatmul.f32.gmra.mxu0 %v3267
    %v5208 = vpop.f32.mrf.mxu0
    %v5209 = vadd.f32 0.0, %v5208
    %5210 = vmatmul.f32.gmra.mxu0 %v3269
    %v5211 = vpop.f32.mrf.mxu0
    %v5212 = vadd.f32 0.0, %v5211
    %5213 = vmatmul.f32.gmra.mxu0 %v4973
    %v5214 = vpop.f32.mrf.mxu0
    %v5215 = vadd.f32 0.0, %v5214
    %5216 = vmatmul.f32.gmra.mxu0 %v4975
    %v5217 = vpop.f32.mrf.mxu0
    %v5218 = vadd.f32 0.0, %v5217
    %5219 = vmatmul.f32.gmra.mxu0 %v612
    %v5220 = vpop.f32.mrf.mxu0
    %v5221 = vadd.f32 0.0, %v5220
    %5222 = vmatmul.f32.gmra.mxu0 %v614
    %v5223 = vpop.f32.mrf.mxu0
    %v5224 = vadd.f32 0.0, %v5223
    %5225 = vmatmul.f32.gmra.mxu0 %v617
    %v5226 = vpop.f32.mrf.mxu0
    %v5227 = vadd.f32 0.0, %v5226
    %5228 = vmatmul.f32.gmra.mxu0 %v619
    %v5229 = vpop.f32.mrf.mxu0
    %v5230 = vadd.f32 0.0, %v5229
    %5231 = vmatmul.f32.gmra.mxu0 %v622
    %v5232 = vpop.f32.mrf.mxu0
    %v5233 = vadd.f32 0.0, %v5232
    %5234 = vmatmul.f32.gmra.mxu0 %v624
    %v5235 = vpop.f32.mrf.mxu0
    %v5236 = vadd.f32 0.0, %v5235
    %5237 = vmatmul.f32.gmra.mxu0 %v627
    %v5238 = vpop.f32.mrf.mxu0
    %v5239 = vadd.f32 0.0, %v5238
    %5240 = vmatmul.f32.gmra.mxu0 %v629
    %v5241 = vpop.f32.mrf.mxu0
    %v5242 = vadd.f32 0.0, %v5241
    %5243 = vmatmul.f32.gmra.mxu0 %v632
    %v5244 = vpop.f32.mrf.mxu0
    %v5245 = vadd.f32 0.0, %v5244
    %5246 = vmatmul.f32.gmra.mxu0 %v634
    %v5247 = vpop.f32.mrf.mxu0
    %v5248 = vadd.f32 0.0, %v5247
    %5249 = vmatmul.f32.gmra.mxu0 %v637
    %v5250 = vpop.f32.mrf.mxu0
    %v5251 = vadd.f32 0.0, %v5250
    %5252 = vmatmul.f32.gmra.mxu0 %v639
    %v5253 = vpop.f32.mrf.mxu0
    %v5254 = vadd.f32 0.0, %v5253
    %5255 = vmatmul.f32.gmra.mxu0 %v642
    %v5256 = vpop.f32.mrf.mxu0
    %v5257 = vadd.f32 0.0, %v5256
    %5258 = vmatmul.f32.gmra.mxu0 %v644
    %v5259 = vpop.f32.mrf.mxu0
    %v5260 = vadd.f32 0.0, %v5259
    %5261 = vmatmul.f32.gmra.mxu0 %v647
    %v5262 = vpop.f32.mrf.mxu0
    %v5263 = vadd.f32 0.0, %v5262
    %5264 = vmatmul.f32.gmra.mxu0 %v649
    %v5265 = vpop.f32.mrf.mxu0
    %v5266 = vadd.f32 0.0, %v5265
    %5267 = vmatmul.f32.gmra.mxu0 %v652
    %v5268 = vpop.f32.mrf.mxu0
    %v5269 = vadd.f32 0.0, %v5268
    %5270 = vmatmul.f32.gmra.mxu0 %v654
    %v5271 = vpop.f32.mrf.mxu0
    %v5272 = vadd.f32 0.0, %v5271
    %5273 = vmatmul.f32.gmra.mxu0 %v657
    %v5274 = vpop.f32.mrf.mxu0
    %v5275 = vadd.f32 0.0, %v5274
    %5276 = vmatmul.f32.gmra.mxu0 %v659
    %v5277 = vpop.f32.mrf.mxu0
    %v5278 = vadd.f32 0.0, %v5277
    %5279 = vmatmul.f32.gmra.mxu0 %v662
    %v5280 = vpop.f32.mrf.mxu0
    %v5281 = vadd.f32 0.0, %v5280
    %5282 = vmatmul.f32.gmra.mxu0 %v664
    %v5283 = vpop.f32.mrf.mxu0
    %v5284 = vadd.f32 0.0, %v5283
    %5285 = vmatmul.f32.gmra.mxu0 %v667
    %v5286 = vpop.f32.mrf.mxu0
    %v5287 = vadd.f32 0.0, %v5286
    %5288 = vmatmul.f32.gmra.mxu0 %v669
    %v5289 = vpop.f32.mrf.mxu0
    %v5290 = vadd.f32 0.0, %v5289
    %5291 = vmatmul.f32.gmra.mxu0 %v672
    %v5292 = vpop.f32.mrf.mxu0
    %v5293 = vadd.f32 0.0, %v5292
    %5294 = vmatmul.f32.gmra.mxu0 %v674
    %v5295 = vpop.f32.mrf.mxu0
    %v5296 = vadd.f32 0.0, %v5295
    %5297 = vmatmul.f32.gmra.mxu0 %v677
    %v5298 = vpop.f32.mrf.mxu0
    %v5299 = vadd.f32 0.0, %v5298
    %5300 = vmatmul.f32.gmra.mxu0 %v679
    %v5301 = vpop.f32.mrf.mxu0
    %v5302 = vadd.f32 0.0, %v5301
    %5303 = vmatmul.f32.gmra.mxu0 %v3272
    %v5304 = vpop.f32.mrf.mxu0
    %v5305 = vadd.f32 0.0, %v5304
    %5306 = vmatmul.f32.gmra.mxu0 %v3274
    %v5307 = vpop.f32.mrf.mxu0
    %v5308 = vadd.f32 0.0, %v5307
    %5309 = vmatmul.f32.gmra.mxu0 %v4978
    %v5310 = vpop.f32.mrf.mxu0
    %v5311 = vadd.f32 0.0, %v5310
    %5312 = vmatmul.f32.gmra.mxu0 %v4980
    %v5313 = vpop.f32.mrf.mxu0
    %v5314 = vadd.f32 0.0, %v5313
    %5315 = vmatmul.f32.gmra.mxu0 %v692
    %v5316 = vpop.f32.mrf.mxu0
    %v5317 = vadd.f32 0.0, %v5316
    %5318 = vmatmul.f32.gmra.mxu0 %v694
    %v5319 = vpop.f32.mrf.mxu0
    %v5320 = vadd.f32 0.0, %v5319
    %5321 = vmatmul.f32.gmra.mxu0 %v697
    %v5322 = vpop.f32.mrf.mxu0
    %v5323 = vadd.f32 0.0, %v5322
    %5324 = vmatmul.f32.gmra.mxu0 %v699
    %v5325 = vpop.f32.mrf.mxu0
    %v5326 = vadd.f32 0.0, %v5325
    %5327 = vmatmul.f32.gmra.mxu0 %v702
    %v5328 = vpop.f32.mrf.mxu0
    %v5329 = vadd.f32 0.0, %v5328
    %5330 = vmatmul.f32.gmra.mxu0 %v704
    %v5331 = vpop.f32.mrf.mxu0
    %v5332 = vadd.f32 0.0, %v5331
    %5333 = vmatmul.f32.gmra.mxu0 %v707
    %v5334 = vpop.f32.mrf.mxu0
    %v5335 = vadd.f32 0.0, %v5334
    %5336 = vmatmul.f32.gmra.mxu0 %v709
    %v5337 = vpop.f32.mrf.mxu0
    %v5338 = vadd.f32 0.0, %v5337
    %5339 = vmatmul.f32.gmra.mxu0 %v712
    %v5340 = vpop.f32.mrf.mxu0
    %v5341 = vadd.f32 0.0, %v5340
    %5342 = vmatmul.f32.gmra.mxu0 %v714
    %v5343 = vpop.f32.mrf.mxu0
    %v5344 = vadd.f32 0.0, %v5343
    %5345 = vmatmul.f32.gmra.mxu0 %v717
    %v5346 = vpop.f32.mrf.mxu0
    %v5347 = vadd.f32 0.0, %v5346
    %5348 = vmatmul.f32.gmra.mxu0 %v719
    %v5349 = vpop.f32.mrf.mxu0
    %v5350 = vadd.f32 0.0, %v5349
    %5351 = vmatmul.f32.gmra.mxu0 %v722
    %v5352 = vpop.f32.mrf.mxu0
    %v5353 = vadd.f32 0.0, %v5352
    %5354 = vmatmul.f32.gmra.mxu0 %v724
    %v5355 = vpop.f32.mrf.mxu0
    %v5356 = vadd.f32 0.0, %v5355
    %5357 = vmatmul.f32.gmra.mxu0 %v727
    %v5358 = vpop.f32.mrf.mxu0
    %v5359 = vadd.f32 0.0, %v5358
    %5360 = vmatmul.f32.gmra.mxu0 %v729
    %v5361 = vpop.f32.mrf.mxu0
    %v5362 = vadd.f32 0.0, %v5361
    %5363 = vmatmul.f32.gmra.mxu0 %v732
    %v5364 = vpop.f32.mrf.mxu0
    %v5365 = vadd.f32 0.0, %v5364
    %5366 = vmatmul.f32.gmra.mxu0 %v734
    %v5367 = vpop.f32.mrf.mxu0
    %v5368 = vadd.f32 0.0, %v5367
    %5369 = vmatmul.f32.gmra.mxu0 %v737
    %v5370 = vpop.f32.mrf.mxu0
    %v5371 = vadd.f32 0.0, %v5370
    %5372 = vmatmul.f32.gmra.mxu0 %v739
    %v5373 = vpop.f32.mrf.mxu0
    %v5374 = vadd.f32 0.0, %v5373
    %5375 = vmatmul.f32.gmra.mxu0 %v742
    %v5376 = vpop.f32.mrf.mxu0
    %v5377 = vadd.f32 0.0, %v5376
    %5378 = vmatmul.f32.gmra.mxu0 %v744
    %v5379 = vpop.f32.mrf.mxu0
    %v5380 = vadd.f32 0.0, %v5379
    %5381 = vmatmul.f32.gmra.mxu0 %v747
    %v5382 = vpop.f32.mrf.mxu0
    %v5383 = vadd.f32 0.0, %v5382
    %5384 = vmatmul.f32.gmra.mxu0 %v749
    %v5385 = vpop.f32.mrf.mxu0
    %v5386 = vadd.f32 0.0, %v5385
    %5387 = vmatmul.f32.gmra.mxu0 %v752
    %v5388 = vpop.f32.mrf.mxu0
    %v5389 = vadd.f32 0.0, %v5388
    %5390 = vmatmul.f32.gmra.mxu0 %v754
    %v5391 = vpop.f32.mrf.mxu0
    %v5392 = vadd.f32 0.0, %v5391
    %5393 = vmatmul.f32.gmra.mxu0 %v757
    %v5394 = vpop.f32.mrf.mxu0
    %v5395 = vadd.f32 0.0, %v5394
    %5396 = vmatmul.f32.gmra.mxu0 %v759
    %v5397 = vpop.f32.mrf.mxu0
    %v5398 = vadd.f32 0.0, %v5397
    %5399 = vmatmul.f32.gmra.mxu0 %v3277
    %v5400 = vpop.f32.mrf.mxu0
    %v5401 = vadd.f32 0.0, %v5400
    %5402 = vmatmul.f32.gmra.mxu0 %v3279
    %v5403 = vpop.f32.mrf.mxu0
    %v5404 = vadd.f32 0.0, %v5403
    %5405 = vmatmul.f32.gmra.mxu0 %v4983
    %v5406 = vpop.f32.mrf.mxu0
    %v5407 = vadd.f32 0.0, %v5406
    %5408 = vmatmul.f32.gmra.mxu0 %v4985
    %v5409 = vpop.f32.mrf.mxu0
    %v5410 = vadd.f32 0.0, %v5409
    %5411 = vdwg.mxu0
    %v5412 = vadd.f32 %v4826, %v5029
    %v5413 = vadd.f32 %v4827, %v5032
    %v5414 = vadd.f32 %v4828, %v5035
    %v5415 = vadd.f32 %v4829, %v5038
    %v5416 = vadd.f32 %v4830, %v5041
    %v5417 = vadd.f32 %v4831, %v5044
    %v5418 = vadd.f32 %v4832, %v5047
    %v5419 = vadd.f32 %v4833, %v5050
    %v5420 = vadd.f32 %v4834, %v5053
    %v5421 = vadd.f32 %v4835, %v5056
    %v5422 = vadd.f32 %v4836, %v5059
    %v5423 = vadd.f32 %v4837, %v5062
    %v5424 = vadd.f32 %v4838, %v5065
    %v5425 = vadd.f32 %v4839, %v5068
    %v5426 = vadd.f32 %v4840, %v5071
    %v5427 = vadd.f32 %v4841, %v5074
    %v5428 = vadd.f32 %v4842, %v5077
    %v5429 = vadd.f32 %v4843, %v5080
    %v5430 = vadd.f32 %v4844, %v5083
    %v5431 = vadd.f32 %v4845, %v5086
    %v5432 = vadd.f32 %v4846, %v5089
    %v5433 = vadd.f32 %v4847, %v5092
    %v5434 = vadd.f32 %v4848, %v5095
    %v5435 = vadd.f32 %v4849, %v5098
    %v5436 = vadd.f32 %v4850, %v5101
    %v5437 = vadd.f32 %v4851, %v5104
    %v5438 = vadd.f32 %v4852, %v5107
    %v5439 = vadd.f32 %v4853, %v5110
    %v5440 = vadd.f32 %v4854, %v5113
    %v5441 = vadd.f32 %v4855, %v5116
    %v5442 = vadd.f32 %v4856, %v5119
    %v5443 = vadd.f32 %v4857, %v5122
    %v5444 = vadd.f32 %v4858, %v5125
    %v5445 = vadd.f32 %v4859, %v5128
    %v5446 = vadd.f32 %v4860, %v5131
    %v5447 = vadd.f32 %v4861, %v5134
    %v5448 = vadd.f32 %v4862, %v5137
    %v5449 = vadd.f32 %v4863, %v5140
    %v5450 = vadd.f32 %v4864, %v5143
    %v5451 = vadd.f32 %v4865, %v5146
    %v5452 = vadd.f32 %v4866, %v5149
    %v5453 = vadd.f32 %v4867, %v5152
    %v5454 = vadd.f32 %v4868, %v5155
    %v5455 = vadd.f32 %v4869, %v5158
    %v5456 = vadd.f32 %v4870, %v5161
    %v5457 = vadd.f32 %v4871, %v5164
    %v5458 = vadd.f32 %v4872, %v5167
    %v5459 = vadd.f32 %v4873, %v5170
    %v5460 = vadd.f32 %v4874, %v5173
    %v5461 = vadd.f32 %v4875, %v5176
    %v5462 = vadd.f32 %v4876, %v5179
    %v5463 = vadd.f32 %v4877, %v5182
    %v5464 = vadd.f32 %v4878, %v5185
    %v5465 = vadd.f32 %v4879, %v5188
    %v5466 = vadd.f32 %v4880, %v5191
    %v5467 = vadd.f32 %v4881, %v5194
    %v5468 = vadd.f32 %v4882, %v5197
    %v5469 = vadd.f32 %v4883, %v5200
    %v5470 = vadd.f32 %v4884, %v5203
    %v5471 = vadd.f32 %v4885, %v5206
    %v5472 = vadd.f32 %v4886, %v5209
    %v5473 = vadd.f32 %v4887, %v5212
    %v5474 = vadd.f32 %v4888, %v5215
    %v5475 = vadd.f32 %v4889, %v5218
    %v5476 = vadd.f32 %v4890, %v5221
    %v5477 = vadd.f32 %v4891, %v5224
    %v5478 = vadd.f32 %v4892, %v5227
    %v5479 = vadd.f32 %v4893, %v5230
    %v5480 = vadd.f32 %v4894, %v5233
    %v5481 = vadd.f32 %v4895, %v5236
    %v5482 = vadd.f32 %v4896, %v5239
    %v5483 = vadd.f32 %v4897, %v5242
    %v5484 = vadd.f32 %v4898, %v5245
    %v5485 = vadd.f32 %v4899, %v5248
    %v5486 = vadd.f32 %v4900, %v5251
    %v5487 = vadd.f32 %v4901, %v5254
    %v5488 = vadd.f32 %v4902, %v5257
    %v5489 = vadd.f32 %v4903, %v5260
    %v5490 = vadd.f32 %v4904, %v5263
    %v5491 = vadd.f32 %v4905, %v5266
    %v5492 = vadd.f32 %v4906, %v5269
    %v5493 = vadd.f32 %v4907, %v5272
    %v5494 = vadd.f32 %v4908, %v5275
    %v5495 = vadd.f32 %v4909, %v5278
    %v5496 = vadd.f32 %v4910, %v5281
    %v5497 = vadd.f32 %v4911, %v5284
    %v5498 = vadd.f32 %v4912, %v5287
    %v5499 = vadd.f32 %v4913, %v5290
    %v5500 = vadd.f32 %v4914, %v5293
    %v5501 = vadd.f32 %v4915, %v5296
    %v5502 = vadd.f32 %v4916, %v5299
    %v5503 = vadd.f32 %v4917, %v5302
    %v5504 = vadd.f32 %v4918, %v5305
    %v5505 = vadd.f32 %v4919, %v5308
    %v5506 = vadd.f32 %v4920, %v5311
    %v5507 = vadd.f32 %v4921, %v5314
    %v5508 = vadd.f32 %v4922, %v5317
    %v5509 = vadd.f32 %v4923, %v5320
    %v5510 = vadd.f32 %v4924, %v5323
    %v5511 = vadd.f32 %v4925, %v5326
    %v5512 = vadd.f32 %v4926, %v5329
    %v5513 = vadd.f32 %v4927, %v5332
    %v5514 = vadd.f32 %v4928, %v5335
    %v5515 = vadd.f32 %v4929, %v5338
    %v5516 = vadd.f32 %v4930, %v5341
    %v5517 = vadd.f32 %v4931, %v5344
    %v5518 = vadd.f32 %v4932, %v5347
    %v5519 = vadd.f32 %v4933, %v5350
    %v5520 = vadd.f32 %v4934, %v5353
    %v5521 = vadd.f32 %v4935, %v5356
    %v5522 = vadd.f32 %v4936, %v5359
    %v5523 = vadd.f32 %v4937, %v5362
    %v5524 = vadd.f32 %v4938, %v5365
    %v5525 = vadd.f32 %v4939, %v5368
    %v5526 = vadd.f32 %v4940, %v5371
    %v5527 = vadd.f32 %v4941, %v5374
    %v5528 = vadd.f32 %v4942, %v5377
    %v5529 = vadd.f32 %v4943, %v5380
    %v5530 = vadd.f32 %v4944, %v5383
    %v5531 = vadd.f32 %v4945, %v5386
    %v5532 = vadd.f32 %v4946, %v5389
    %v5533 = vadd.f32 %v4947, %v5392
    %v5534 = vadd.f32 %v4948, %v5395
    %v5535 = vadd.f32 %v4949, %v5398
    %v5536 = vadd.f32 %v4950, %v5401
    %v5537 = vadd.f32 %v4951, %v5404
    %v5538 = vadd.f32 %v4952, %v5407
    %v5539 = vadd.f32 %v4953, %v5410
    %v5540 = vrot.slane %v66, 2
    %v5541 = vrot.slane %v67, 2
    %v5542 = vsel %vm1707, %v5540, %v5541
    %v5543 = vrot.slane %v68, 2
    %v5544 = vsel %vm1707, %v5541, %v5543
    %v5545 = vrot.slane %v120, 2
    %v5546 = vrot.slane %v121, 2
    %v5547 = vsel %vm1707, %v5545, %v5546
    %v5548 = vrot.slane %v122, 2
    %v5549 = vsel %vm1707, %v5546, %v5548
    %v5550 = vrot.slane %v174, 2
    %v5551 = vrot.slane %v175, 2
    %v5552 = vsel %vm1707, %v5550, %v5551
    %v5553 = vrot.slane %v176, 2
    %v5554 = vsel %vm1707, %v5551, %v5553
    %v5555 = vrot.slane %v228, 2
    %v5556 = vrot.slane %v229, 2
    %v5557 = vsel %vm1707, %v5555, %v5556
    %v5558 = vrot.slane %v230, 2
    %v5559 = vsel %vm1707, %v5556, %v5558
    %s5568 = scalar_lea.vmem %s1, 1024
    %v5569 = vld [vmem:[%s5568] sm:$0xff]
    %v5570 = vld [vmem:[%s5568 + $0x8] sm:$0xff]
    %v5571 = vld [vmem:[%s5568 + $0x10] sm:$0xff]
    %v5572 = vld [vmem:[%s5568 + $0x18] sm:$0xff]
    %v5573 = vld [vmem:[%s5568 + $0x20] sm:$0xff]
    %v5574 = vld [vmem:[%s5568 + $0x28] sm:$0xff]
    %v5575 = vld [vmem:[%s5568 + $0x30] sm:$0xff]
    %v5576 = vld [vmem:[%s5568 + $0x38] sm:$0xff]
    %v5577 = vld [vmem:[%s5568 + $0x40] sm:$0xff]
    %v5578 = vld [vmem:[%s5568 + $0x48] sm:$0xff]
    %v5579 = vld [vmem:[%s5568 + $0x50] sm:$0xff]
    %v5580 = vld [vmem:[%s5568 + $0x58] sm:$0xff]
    %v5581 = vld [vmem:[%s5568 + $0x60] sm:$0xff]
    %v5582 = vld [vmem:[%s5568 + $0x68] sm:$0xff]
    %v5583 = vld [vmem:[%s5568 + $0x70] sm:$0xff]
    %v5584 = vld [vmem:[%s5568 + $0x78] sm:$0xff]
    %5585 = vmatpush.msra.mxu0 %v5584
    %5586 = vmatpush.msra.mxu0 %v5583
    %5587 = vmatpush.msra.mxu0 %v5582
    %5588 = vmatpush.msra.mxu0 %v5581
    %5589 = vmatpush.msra.mxu0 %v5580
    %5590 = vmatpush.msra.mxu0 %v5579
    %5591 = vmatpush.msra.mxu0 %v5578
    %5592 = vmatpush.msra.mxu0 %v5577
    %5593 = vmatpush.msra.mxu0 %v5576
    %5594 = vmatpush.msra.mxu0 %v5575
    %5595 = vmatpush.msra.mxu0 %v5574
    %5596 = vmatpush.msra.mxu0 %v5573
    %5597 = vmatpush.msra.mxu0 %v5572
    %5598 = vmatpush.msra.mxu0 %v5571
    %5599 = vmatpush.msra.mxu0 %v5570
    %5600 = vmatpush.msra.mxu0 %v5569
    %5601 = vmatmul.f32.gmra.mxu0 %v1720
    %v5602 = vpop.f32.mrf.mxu0
    %v5603 = vadd.f32 0.0, %v5602
    %5604 = vmatmul.f32.gmra.mxu0 %v1722
    %v5605 = vpop.f32.mrf.mxu0
    %v5606 = vadd.f32 0.0, %v5605
    %5607 = vmatmul.f32.gmra.mxu0 %v1725
    %v5608 = vpop.f32.mrf.mxu0
    %v5609 = vadd.f32 0.0, %v5608
    %5610 = vmatmul.f32.gmra.mxu0 %v1727
    %v5611 = vpop.f32.mrf.mxu0
    %v5612 = vadd.f32 0.0, %v5611
    %5613 = vmatmul.f32.gmra.mxu0 %v1730
    %v5614 = vpop.f32.mrf.mxu0
    %v5615 = vadd.f32 0.0, %v5614
    %5616 = vmatmul.f32.gmra.mxu0 %v1732
    %v5617 = vpop.f32.mrf.mxu0
    %v5618 = vadd.f32 0.0, %v5617
    %5619 = vmatmul.f32.gmra.mxu0 %v1735
    %v5620 = vpop.f32.mrf.mxu0
    %v5621 = vadd.f32 0.0, %v5620
    %5622 = vmatmul.f32.gmra.mxu0 %v1737
    %v5623 = vpop.f32.mrf.mxu0
    %v5624 = vadd.f32 0.0, %v5623
    %5625 = vmatmul.f32.gmra.mxu0 %v1740
    %v5626 = vpop.f32.mrf.mxu0
    %v5627 = vadd.f32 0.0, %v5626
    %5628 = vmatmul.f32.gmra.mxu0 %v1742
    %v5629 = vpop.f32.mrf.mxu0
    %v5630 = vadd.f32 0.0, %v5629
    %5631 = vmatmul.f32.gmra.mxu0 %v1745
    %v5632 = vpop.f32.mrf.mxu0
    %v5633 = vadd.f32 0.0, %v5632
    %5634 = vmatmul.f32.gmra.mxu0 %v1747
    %v5635 = vpop.f32.mrf.mxu0
    %v5636 = vadd.f32 0.0, %v5635
    %5637 = vmatmul.f32.gmra.mxu0 %v1750
    %v5638 = vpop.f32.mrf.mxu0
    %v5639 = vadd.f32 0.0, %v5638
    %5640 = vmatmul.f32.gmra.mxu0 %v1752
    %v5641 = vpop.f32.mrf.mxu0
    %v5642 = vadd.f32 0.0, %v5641
    %5643 = vmatmul.f32.gmra.mxu0 %v1755
    %v5644 = vpop.f32.mrf.mxu0
    %v5645 = vadd.f32 0.0, %v5644
    %5646 = vmatmul.f32.gmra.mxu0 %v1757
    %v5647 = vpop.f32.mrf.mxu0
    %v5648 = vadd.f32 0.0, %v5647
    %5649 = vmatmul.f32.gmra.mxu0 %v1760
    %v5650 = vpop.f32.mrf.mxu0
    %v5651 = vadd.f32 0.0, %v5650
    %5652 = vmatmul.f32.gmra.mxu0 %v1762
    %v5653 = vpop.f32.mrf.mxu0
    %v5654 = vadd.f32 0.0, %v5653
    %5655 = vmatmul.f32.gmra.mxu0 %v1765
    %v5656 = vpop.f32.mrf.mxu0
    %v5657 = vadd.f32 0.0, %v5656
    %5658 = vmatmul.f32.gmra.mxu0 %v1767
    %v5659 = vpop.f32.mrf.mxu0
    %v5660 = vadd.f32 0.0, %v5659
    %5661 = vmatmul.f32.gmra.mxu0 %v1770
    %v5662 = vpop.f32.mrf.mxu0
    %v5663 = vadd.f32 0.0, %v5662
    %5664 = vmatmul.f32.gmra.mxu0 %v1772
    %v5665 = vpop.f32.mrf.mxu0
    %v5666 = vadd.f32 0.0, %v5665
    %5667 = vmatmul.f32.gmra.mxu0 %v1775
    %v5668 = vpop.f32.mrf.mxu0
    %v5669 = vadd.f32 0.0, %v5668
    %5670 = vmatmul.f32.gmra.mxu0 %v1777
    %v5671 = vpop.f32.mrf.mxu0
    %v5672 = vadd.f32 0.0, %v5671
    %5673 = vmatmul.f32.gmra.mxu0 %v1780
    %v5674 = vpop.f32.mrf.mxu0
    %v5675 = vadd.f32 0.0, %v5674
    %5676 = vmatmul.f32.gmra.mxu0 %v1782
    %v5677 = vpop.f32.mrf.mxu0
    %v5678 = vadd.f32 0.0, %v5677
    %5679 = vmatmul.f32.gmra.mxu0 %v1785
    %v5680 = vpop.f32.mrf.mxu0
    %v5681 = vadd.f32 0.0, %v5680
    %5682 = vmatmul.f32.gmra.mxu0 %v1787
    %v5683 = vpop.f32.mrf.mxu0
    %v5684 = vadd.f32 0.0, %v5683
    %5685 = vmatmul.f32.gmra.mxu0 %v3836
    %v5686 = vpop.f32.mrf.mxu0
    %v5687 = vadd.f32 0.0, %v5686
    %5688 = vmatmul.f32.gmra.mxu0 %v3838
    %v5689 = vpop.f32.mrf.mxu0
    %v5690 = vadd.f32 0.0, %v5689
    %5691 = vmatmul.f32.gmra.mxu0 %v5542
    %v5692 = vpop.f32.mrf.mxu0
    %v5693 = vadd.f32 0.0, %v5692
    %5694 = vmatmul.f32.gmra.mxu0 %v5544
    %v5695 = vpop.f32.mrf.mxu0
    %v5696 = vadd.f32 0.0, %v5695
    %5697 = vmatmul.f32.gmra.mxu0 %v1800
    %v5698 = vpop.f32.mrf.mxu0
    %v5699 = vadd.f32 0.0, %v5698
    %5700 = vmatmul.f32.gmra.mxu0 %v1802
    %v5701 = vpop.f32.mrf.mxu0
    %v5702 = vadd.f32 0.0, %v5701
    %5703 = vmatmul.f32.gmra.mxu0 %v1805
    %v5704 = vpop.f32.mrf.mxu0
    %v5705 = vadd.f32 0.0, %v5704
    %5706 = vmatmul.f32.gmra.mxu0 %v1807
    %v5707 = vpop.f32.mrf.mxu0
    %v5708 = vadd.f32 0.0, %v5707
    %5709 = vmatmul.f32.gmra.mxu0 %v1810
    %v5710 = vpop.f32.mrf.mxu0
    %v5711 = vadd.f32 0.0, %v5710
    %5712 = vmatmul.f32.gmra.mxu0 %v1812
    %v5713 = vpop.f32.mrf.mxu0
    %v5714 = vadd.f32 0.0, %v5713
    %5715 = vmatmul.f32.gmra.mxu0 %v1815
    %v5716 = vpop.f32.mrf.mxu0
    %v5717 = vadd.f32 0.0, %v5716
    %5718 = vmatmul.f32.gmra.mxu0 %v1817
    %v5719 = vpop.f32.mrf.mxu0
    %v5720 = vadd.f32 0.0, %v5719
    %5721 = vmatmul.f32.gmra.mxu0 %v1820
    %v5722 = vpop.f32.mrf.mxu0
    %v5723 = vadd.f32 0.0, %v5722
    %5724 = vmatmul.f32.gmra.mxu0 %v1822
    %v5725 = vpop.f32.mrf.mxu0
    %v5726 = vadd.f32 0.0, %v5725
    %5727 = vmatmul.f32.gmra.mxu0 %v1825
    %v5728 = vpop.f32.mrf.mxu0
    %v5729 = vadd.f32 0.0, %v5728
    %5730 = vmatmul.f32.gmra.mxu0 %v1827
    %v5731 = vpop.f32.mrf.mxu0
    %v5732 = vadd.f32 0.0, %v5731
    %5733 = vmatmul.f32.gmra.mxu0 %v1830
    %v5734 = vpop.f32.mrf.mxu0
    %v5735 = vadd.f32 0.0, %v5734
    %5736 = vmatmul.f32.gmra.mxu0 %v1832
    %v5737 = vpop.f32.mrf.mxu0
    %v5738 = vadd.f32 0.0, %v5737
    %5739 = vmatmul.f32.gmra.mxu0 %v1835
    %v5740 = vpop.f32.mrf.mxu0
    %v5741 = vadd.f32 0.0, %v5740
    %5742 = vmatmul.f32.gmra.mxu0 %v1837
    %v5743 = vpop.f32.mrf.mxu0
    %v5744 = vadd.f32 0.0, %v5743
    %5745 = vmatmul.f32.gmra.mxu0 %v1840
    %v5746 = vpop.f32.mrf.mxu0
    %v5747 = vadd.f32 0.0, %v5746
    %5748 = vmatmul.f32.gmra.mxu0 %v1842
    %v5749 = vpop.f32.mrf.mxu0
    %v5750 = vadd.f32 0.0, %v5749
    %5751 = vmatmul.f32.gmra.mxu0 %v1845
    %v5752 = vpop.f32.mrf.mxu0
    %v5753 = vadd.f32 0.0, %v5752
    %5754 = vmatmul.f32.gmra.mxu0 %v1847
    %v5755 = vpop.f32.mrf.mxu0
    %v5756 = vadd.f32 0.0, %v5755
    %5757 = vmatmul.f32.gmra.mxu0 %v1850
    %v5758 = vpop.f32.mrf.mxu0
    %v5759 = vadd.f32 0.0, %v5758
    %5760 = vmatmul.f32.gmra.mxu0 %v1852
    %v5761 = vpop.f32.mrf.mxu0
    %v5762 = vadd.f32 0.0, %v5761
    %5763 = vmatmul.f32.gmra.mxu0 %v1855
    %v5764 = vpop.f32.mrf.mxu0
    %v5765 = vadd.f32 0.0, %v5764
    %5766 = vmatmul.f32.gmra.mxu0 %v1857
    %v5767 = vpop.f32.mrf.mxu0
    %v5768 = vadd.f32 0.0, %v5767
    %5769 = vmatmul.f32.gmra.mxu0 %v1860
    %v5770 = vpop.f32.mrf.mxu0
    %v5771 = vadd.f32 0.0, %v5770
    %5772 = vmatmul.f32.gmra.mxu0 %v1862
    %v5773 = vpop.f32.mrf.mxu0
    %v5774 = vadd.f32 0.0, %v5773
    %5775 = vmatmul.f32.gmra.mxu0 %v1865
    %v5776 = vpop.f32.mrf.mxu0
    %v5777 = vadd.f32 0.0, %v5776
    %5778 = vmatmul.f32.gmra.mxu0 %v1867
    %v5779 = vpop.f32.mrf.mxu0
    %v5780 = vadd.f32 0.0, %v5779
    %5781 = vmatmul.f32.gmra.mxu0 %v3841
    %v5782 = vpop.f32.mrf.mxu0
    %v5783 = vadd.f32 0.0, %v5782
    %5784 = vmatmul.f32.gmra.mxu0 %v3843
    %v5785 = vpop.f32.mrf.mxu0
    %v5786 = vadd.f32 0.0, %v5785
    %5787 = vmatmul.f32.gmra.mxu0 %v5547
    %v5788 = vpop.f32.mrf.mxu0
    %v5789 = vadd.f32 0.0, %v5788
    %5790 = vmatmul.f32.gmra.mxu0 %v5549
    %v5791 = vpop.f32.mrf.mxu0
    %v5792 = vadd.f32 0.0, %v5791
    %5793 = vmatmul.f32.gmra.mxu0 %v1880
    %v5794 = vpop.f32.mrf.mxu0
    %v5795 = vadd.f32 0.0, %v5794
    %5796 = vmatmul.f32.gmra.mxu0 %v1882
    %v5797 = vpop.f32.mrf.mxu0
    %v5798 = vadd.f32 0.0, %v5797
    %5799 = vmatmul.f32.gmra.mxu0 %v1885
    %v5800 = vpop.f32.mrf.mxu0
    %v5801 = vadd.f32 0.0, %v5800
    %5802 = vmatmul.f32.gmra.mxu0 %v1887
    %v5803 = vpop.f32.mrf.mxu0
    %v5804 = vadd.f32 0.0, %v5803
    %5805 = vmatmul.f32.gmra.mxu0 %v1890
    %v5806 = vpop.f32.mrf.mxu0
    %v5807 = vadd.f32 0.0, %v5806
    %5808 = vmatmul.f32.gmra.mxu0 %v1892
    %v5809 = vpop.f32.mrf.mxu0
    %v5810 = vadd.f32 0.0, %v5809
    %5811 = vmatmul.f32.gmra.mxu0 %v1895
    %v5812 = vpop.f32.mrf.mxu0
    %v5813 = vadd.f32 0.0, %v5812
    %5814 = vmatmul.f32.gmra.mxu0 %v1897
    %v5815 = vpop.f32.mrf.mxu0
    %v5816 = vadd.f32 0.0, %v5815
    %5817 = vmatmul.f32.gmra.mxu0 %v1900
    %v5818 = vpop.f32.mrf.mxu0
    %v5819 = vadd.f32 0.0, %v5818
    %5820 = vmatmul.f32.gmra.mxu0 %v1902
    %v5821 = vpop.f32.mrf.mxu0
    %v5822 = vadd.f32 0.0, %v5821
    %5823 = vmatmul.f32.gmra.mxu0 %v1905
    %v5824 = vpop.f32.mrf.mxu0
    %v5825 = vadd.f32 0.0, %v5824
    %5826 = vmatmul.f32.gmra.mxu0 %v1907
    %v5827 = vpop.f32.mrf.mxu0
    %v5828 = vadd.f32 0.0, %v5827
    %5829 = vmatmul.f32.gmra.mxu0 %v1910
    %v5830 = vpop.f32.mrf.mxu0
    %v5831 = vadd.f32 0.0, %v5830
    %5832 = vmatmul.f32.gmra.mxu0 %v1912
    %v5833 = vpop.f32.mrf.mxu0
    %v5834 = vadd.f32 0.0, %v5833
    %5835 = vmatmul.f32.gmra.mxu0 %v1915
    %v5836 = vpop.f32.mrf.mxu0
    %v5837 = vadd.f32 0.0, %v5836
    %5838 = vmatmul.f32.gmra.mxu0 %v1917
    %v5839 = vpop.f32.mrf.mxu0
    %v5840 = vadd.f32 0.0, %v5839
    %5841 = vmatmul.f32.gmra.mxu0 %v1920
    %v5842 = vpop.f32.mrf.mxu0
    %v5843 = vadd.f32 0.0, %v5842
    %5844 = vmatmul.f32.gmra.mxu0 %v1922
    %v5845 = vpop.f32.mrf.mxu0
    %v5846 = vadd.f32 0.0, %v5845
    %5847 = vmatmul.f32.gmra.mxu0 %v1925
    %v5848 = vpop.f32.mrf.mxu0
    %v5849 = vadd.f32 0.0, %v5848
    %5850 = vmatmul.f32.gmra.mxu0 %v1927
    %v5851 = vpop.f32.mrf.mxu0
    %v5852 = vadd.f32 0.0, %v5851
    %5853 = vmatmul.f32.gmra.mxu0 %v1930
    %v5854 = vpop.f32.mrf.mxu0
    %v5855 = vadd.f32 0.0, %v5854
    %5856 = vmatmul.f32.gmra.mxu0 %v1932
    %v5857 = vpop.f32.mrf.mxu0
    %v5858 = vadd.f32 0.0, %v5857
    %5859 = vmatmul.f32.gmra.mxu0 %v1935
    %v5860 = vpop.f32.mrf.mxu0
    %v5861 = vadd.f32 0.0, %v5860
    %5862 = vmatmul.f32.gmra.mxu0 %v1937
    %v5863 = vpop.f32.mrf.mxu0
    %v5864 = vadd.f32 0.0, %v5863
    %5865 = vmatmul.f32.gmra.mxu0 %v1940
    %v5866 = vpop.f32.mrf.mxu0
    %v5867 = vadd.f32 0.0, %v5866
    %5868 = vmatmul.f32.gmra.mxu0 %v1942
    %v5869 = vpop.f32.mrf.mxu0
    %v5870 = vadd.f32 0.0, %v5869
    %5871 = vmatmul.f32.gmra.mxu0 %v1945
    %v5872 = vpop.f32.mrf.mxu0
    %v5873 = vadd.f32 0.0, %v5872
    %5874 = vmatmul.f32.gmra.mxu0 %v1947
    %v5875 = vpop.f32.mrf.mxu0
    %v5876 = vadd.f32 0.0, %v5875
    %5877 = vmatmul.f32.gmra.mxu0 %v3846
    %v5878 = vpop.f32.mrf.mxu0
    %v5879 = vadd.f32 0.0, %v5878
    %5880 = vmatmul.f32.gmra.mxu0 %v3848
    %v5881 = vpop.f32.mrf.mxu0
    %v5882 = vadd.f32 0.0, %v5881
    %5883 = vmatmul.f32.gmra.mxu0 %v5552
    %v5884 = vpop.f32.mrf.mxu0
    %v5885 = vadd.f32 0.0, %v5884
    %5886 = vmatmul.f32.gmra.mxu0 %v5554
    %v5887 = vpop.f32.mrf.mxu0
    %v5888 = vadd.f32 0.0, %v5887
    %5889 = vmatmul.f32.gmra.mxu0 %v1960
    %v5890 = vpop.f32.mrf.mxu0
    %v5891 = vadd.f32 0.0, %v5890
    %5892 = vmatmul.f32.gmra.mxu0 %v1962
    %v5893 = vpop.f32.mrf.mxu0
    %v5894 = vadd.f32 0.0, %v5893
    %5895 = vmatmul.f32.gmra.mxu0 %v1965
    %v5896 = vpop.f32.mrf.mxu0
    %v5897 = vadd.f32 0.0, %v5896
    %5898 = vmatmul.f32.gmra.mxu0 %v1967
    %v5899 = vpop.f32.mrf.mxu0
    %v5900 = vadd.f32 0.0, %v5899
    %5901 = vmatmul.f32.gmra.mxu0 %v1970
    %v5902 = vpop.f32.mrf.mxu0
    %v5903 = vadd.f32 0.0, %v5902
    %5904 = vmatmul.f32.gmra.mxu0 %v1972
    %v5905 = vpop.f32.mrf.mxu0
    %v5906 = vadd.f32 0.0, %v5905
    %5907 = vmatmul.f32.gmra.mxu0 %v1975
    %v5908 = vpop.f32.mrf.mxu0
    %v5909 = vadd.f32 0.0, %v5908
    %5910 = vmatmul.f32.gmra.mxu0 %v1977
    %v5911 = vpop.f32.mrf.mxu0
    %v5912 = vadd.f32 0.0, %v5911
    %5913 = vmatmul.f32.gmra.mxu0 %v1980
    %v5914 = vpop.f32.mrf.mxu0
    %v5915 = vadd.f32 0.0, %v5914
    %5916 = vmatmul.f32.gmra.mxu0 %v1982
    %v5917 = vpop.f32.mrf.mxu0
    %v5918 = vadd.f32 0.0, %v5917
    %5919 = vmatmul.f32.gmra.mxu0 %v1985
    %v5920 = vpop.f32.mrf.mxu0
    %v5921 = vadd.f32 0.0, %v5920
    %5922 = vmatmul.f32.gmra.mxu0 %v1987
    %v5923 = vpop.f32.mrf.mxu0
    %v5924 = vadd.f32 0.0, %v5923
    %5925 = vmatmul.f32.gmra.mxu0 %v1990
    %v5926 = vpop.f32.mrf.mxu0
    %v5927 = vadd.f32 0.0, %v5926
    %5928 = vmatmul.f32.gmra.mxu0 %v1992
    %v5929 = vpop.f32.mrf.mxu0
    %v5930 = vadd.f32 0.0, %v5929
    %5931 = vmatmul.f32.gmra.mxu0 %v1995
    %v5932 = vpop.f32.mrf.mxu0
    %v5933 = vadd.f32 0.0, %v5932
    %5934 = vmatmul.f32.gmra.mxu0 %v1997
    %v5935 = vpop.f32.mrf.mxu0
    %v5936 = vadd.f32 0.0, %v5935
    %5937 = vmatmul.f32.gmra.mxu0 %v2000
    %v5938 = vpop.f32.mrf.mxu0
    %v5939 = vadd.f32 0.0, %v5938
    %5940 = vmatmul.f32.gmra.mxu0 %v2002
    %v5941 = vpop.f32.mrf.mxu0
    %v5942 = vadd.f32 0.0, %v5941
    %5943 = vmatmul.f32.gmra.mxu0 %v2005
    %v5944 = vpop.f32.mrf.mxu0
    %v5945 = vadd.f32 0.0, %v5944
    %5946 = vmatmul.f32.gmra.mxu0 %v2007
    %v5947 = vpop.f32.mrf.mxu0
    %v5948 = vadd.f32 0.0, %v5947
    %5949 = vmatmul.f32.gmra.mxu0 %v2010
    %v5950 = vpop.f32.mrf.mxu0
    %v5951 = vadd.f32 0.0, %v5950
    %5952 = vmatmul.f32.gmra.mxu0 %v2012
    %v5953 = vpop.f32.mrf.mxu0
    %v5954 = vadd.f32 0.0, %v5953
    %5955 = vmatmul.f32.gmra.mxu0 %v2015
    %v5956 = vpop.f32.mrf.mxu0
    %v5957 = vadd.f32 0.0, %v5956
    %5958 = vmatmul.f32.gmra.mxu0 %v2017
    %v5959 = vpop.f32.mrf.mxu0
    %v5960 = vadd.f32 0.0, %v5959
    %5961 = vmatmul.f32.gmra.mxu0 %v2020
    %v5962 = vpop.f32.mrf.mxu0
    %v5963 = vadd.f32 0.0, %v5962
    %5964 = vmatmul.f32.gmra.mxu0 %v2022
    %v5965 = vpop.f32.mrf.mxu0
    %v5966 = vadd.f32 0.0, %v5965
    %5967 = vmatmul.f32.gmra.mxu0 %v2025
    %v5968 = vpop.f32.mrf.mxu0
    %v5969 = vadd.f32 0.0, %v5968
    %5970 = vmatmul.f32.gmra.mxu0 %v2027
    %v5971 = vpop.f32.mrf.mxu0
    %v5972 = vadd.f32 0.0, %v5971
    %5973 = vmatmul.f32.gmra.mxu0 %v3851
    %v5974 = vpop.f32.mrf.mxu0
    %v5975 = vadd.f32 0.0, %v5974
    %5976 = vmatmul.f32.gmra.mxu0 %v3853
    %v5977 = vpop.f32.mrf.mxu0
    %v5978 = vadd.f32 0.0, %v5977
    %5979 = vmatmul.f32.gmra.mxu0 %v5557
    %v5980 = vpop.f32.mrf.mxu0
    %v5981 = vadd.f32 0.0, %v5980
    %5982 = vmatmul.f32.gmra.mxu0 %v5559
    %v5983 = vpop.f32.mrf.mxu0
    %v5984 = vadd.f32 0.0, %v5983
    %5985 = vdwg.mxu0
    %v5986 = vadd.f32 %v5412, %v5603
    %v5987 = vadd.f32 %v5413, %v5606
    %v5988 = vadd.f32 %v5414, %v5609
    %v5989 = vadd.f32 %v5415, %v5612
    %v5990 = vadd.f32 %v5416, %v5615
    %v5991 = vadd.f32 %v5417, %v5618
    %v5992 = vadd.f32 %v5418, %v5621
    %v5993 = vadd.f32 %v5419, %v5624
    %v5994 = vadd.f32 %v5420, %v5627
    %v5995 = vadd.f32 %v5421, %v5630
    %v5996 = vadd.f32 %v5422, %v5633
    %v5997 = vadd.f32 %v5423, %v5636
    %v5998 = vadd.f32 %v5424, %v5639
    %v5999 = vadd.f32 %v5425, %v5642
    %v6000 = vadd.f32 %v5426, %v5645
    %v6001 = vadd.f32 %v5427, %v5648
    %v6002 = vadd.f32 %v5428, %v5651
    %v6003 = vadd.f32 %v5429, %v5654
    %v6004 = vadd.f32 %v5430, %v5657
    %v6005 = vadd.f32 %v5431, %v5660
    %v6006 = vadd.f32 %v5432, %v5663
    %v6007 = vadd.f32 %v5433, %v5666
    %v6008 = vadd.f32 %v5434, %v5669
    %v6009 = vadd.f32 %v5435, %v5672
    %v6010 = vadd.f32 %v5436, %v5675
    %v6011 = vadd.f32 %v5437, %v5678
    %v6012 = vadd.f32 %v5438, %v5681
    %v6013 = vadd.f32 %v5439, %v5684
    %v6014 = vadd.f32 %v5440, %v5687
    %v6015 = vadd.f32 %v5441, %v5690
    %v6016 = vadd.f32 %v5442, %v5693
    %v6017 = vadd.f32 %v5443, %v5696
    %v6018 = vadd.f32 %v5444, %v5699
    %v6019 = vadd.f32 %v5445, %v5702
    %v6020 = vadd.f32 %v5446, %v5705
    %v6021 = vadd.f32 %v5447, %v5708
    %v6022 = vadd.f32 %v5448, %v5711
    %v6023 = vadd.f32 %v5449, %v5714
    %v6024 = vadd.f32 %v5450, %v5717
    %v6025 = vadd.f32 %v5451, %v5720
    %v6026 = vadd.f32 %v5452, %v5723
    %v6027 = vadd.f32 %v5453, %v5726
    %v6028 = vadd.f32 %v5454, %v5729
    %v6029 = vadd.f32 %v5455, %v5732
    %v6030 = vadd.f32 %v5456, %v5735
    %v6031 = vadd.f32 %v5457, %v5738
    %v6032 = vadd.f32 %v5458, %v5741
    %v6033 = vadd.f32 %v5459, %v5744
    %v6034 = vadd.f32 %v5460, %v5747
    %v6035 = vadd.f32 %v5461, %v5750
    %v6036 = vadd.f32 %v5462, %v5753
    %v6037 = vadd.f32 %v5463, %v5756
    %v6038 = vadd.f32 %v5464, %v5759
    %v6039 = vadd.f32 %v5465, %v5762
    %v6040 = vadd.f32 %v5466, %v5765
    %v6041 = vadd.f32 %v5467, %v5768
    %v6042 = vadd.f32 %v5468, %v5771
    %v6043 = vadd.f32 %v5469, %v5774
    %v6044 = vadd.f32 %v5470, %v5777
    %v6045 = vadd.f32 %v5471, %v5780
    %v6046 = vadd.f32 %v5472, %v5783
    %v6047 = vadd.f32 %v5473, %v5786
    %v6048 = vadd.f32 %v5474, %v5789
    %v6049 = vadd.f32 %v5475, %v5792
    %v6050 = vadd.f32 %v5476, %v5795
    %v6051 = vadd.f32 %v5477, %v5798
    %v6052 = vadd.f32 %v5478, %v5801
    %v6053 = vadd.f32 %v5479, %v5804
    %v6054 = vadd.f32 %v5480, %v5807
    %v6055 = vadd.f32 %v5481, %v5810
    %v6056 = vadd.f32 %v5482, %v5813
    %v6057 = vadd.f32 %v5483, %v5816
    %v6058 = vadd.f32 %v5484, %v5819
    %v6059 = vadd.f32 %v5485, %v5822
    %v6060 = vadd.f32 %v5486, %v5825
    %v6061 = vadd.f32 %v5487, %v5828
    %v6062 = vadd.f32 %v5488, %v5831
    %v6063 = vadd.f32 %v5489, %v5834
    %v6064 = vadd.f32 %v5490, %v5837
    %v6065 = vadd.f32 %v5491, %v5840
    %v6066 = vadd.f32 %v5492, %v5843
    %v6067 = vadd.f32 %v5493, %v5846
    %v6068 = vadd.f32 %v5494, %v5849
    %v6069 = vadd.f32 %v5495, %v5852
    %v6070 = vadd.f32 %v5496, %v5855
    %v6071 = vadd.f32 %v5497, %v5858
    %v6072 = vadd.f32 %v5498, %v5861
    %v6073 = vadd.f32 %v5499, %v5864
    %v6074 = vadd.f32 %v5500, %v5867
    %v6075 = vadd.f32 %v5501, %v5870
    %v6076 = vadd.f32 %v5502, %v5873
    %v6077 = vadd.f32 %v5503, %v5876
    %v6078 = vadd.f32 %v5504, %v5879
    %v6079 = vadd.f32 %v5505, %v5882
    %v6080 = vadd.f32 %v5506, %v5885
    %v6081 = vadd.f32 %v5507, %v5888
    %v6082 = vadd.f32 %v5508, %v5891
    %v6083 = vadd.f32 %v5509, %v5894
    %v6084 = vadd.f32 %v5510, %v5897
    %v6085 = vadd.f32 %v5511, %v5900
    %v6086 = vadd.f32 %v5512, %v5903
    %v6087 = vadd.f32 %v5513, %v5906
    %v6088 = vadd.f32 %v5514, %v5909
    %v6089 = vadd.f32 %v5515, %v5912
    %v6090 = vadd.f32 %v5516, %v5915
    %v6091 = vadd.f32 %v5517, %v5918
    %v6092 = vadd.f32 %v5518, %v5921
    %v6093 = vadd.f32 %v5519, %v5924
    %v6094 = vadd.f32 %v5520, %v5927
    %v6095 = vadd.f32 %v5521, %v5930
    %v6096 = vadd.f32 %v5522, %v5933
    %v6097 = vadd.f32 %v5523, %v5936
    %v6098 = vadd.f32 %v5524, %v5939
    %v6099 = vadd.f32 %v5525, %v5942
    %v6100 = vadd.f32 %v5526, %v5945
    %v6101 = vadd.f32 %v5527, %v5948
    %v6102 = vadd.f32 %v5528, %v5951
    %v6103 = vadd.f32 %v5529, %v5954
    %v6104 = vadd.f32 %v5530, %v5957
    %v6105 = vadd.f32 %v5531, %v5960
    %v6106 = vadd.f32 %v5532, %v5963
    %v6107 = vadd.f32 %v5533, %v5966
    %v6108 = vadd.f32 %v5534, %v5969
    %v6109 = vadd.f32 %v5535, %v5972
    %v6110 = vadd.f32 %v5536, %v5975
    %v6111 = vadd.f32 %v5537, %v5978
    %v6112 = vadd.f32 %v5538, %v5981
    %v6113 = vadd.f32 %v5539, %v5984
    %v6114 = vld [vmem:[%s2] sm:$0x1]
    %v6116 = vperm.slane %v6114, 0
    %v6118 = vadd.f32 %v5986, %v6116
    %v6119 = vadd.f32 %v5987, %v6116
    %v6120 = vadd.f32 %v5988, %v6116
    %v6121 = vadd.f32 %v5989, %v6116
    %v6122 = vadd.f32 %v5990, %v6116
    %v6123 = vadd.f32 %v5991, %v6116
    %v6124 = vadd.f32 %v5992, %v6116
    %v6125 = vadd.f32 %v5993, %v6116
    %v6126 = vadd.f32 %v5994, %v6116
    %v6127 = vadd.f32 %v5995, %v6116
    %v6128 = vadd.f32 %v5996, %v6116
    %v6129 = vadd.f32 %v5997, %v6116
    %v6130 = vadd.f32 %v5998, %v6116
    %v6131 = vadd.f32 %v5999, %v6116
    %v6132 = vadd.f32 %v6000, %v6116
    %v6133 = vadd.f32 %v6001, %v6116
    %v6134 = vadd.f32 %v6002, %v6116
    %v6135 = vadd.f32 %v6003, %v6116
    %v6136 = vadd.f32 %v6004, %v6116
    %v6137 = vadd.f32 %v6005, %v6116
    %v6138 = vadd.f32 %v6006, %v6116
    %v6139 = vadd.f32 %v6007, %v6116
    %v6140 = vadd.f32 %v6008, %v6116
    %v6141 = vadd.f32 %v6009, %v6116
    %v6142 = vadd.f32 %v6010, %v6116
    %v6143 = vadd.f32 %v6011, %v6116
    %v6144 = vadd.f32 %v6012, %v6116
    %v6145 = vadd.f32 %v6013, %v6116
    %v6146 = vadd.f32 %v6014, %v6116
    %v6147 = vadd.f32 %v6015, %v6116
    %v6148 = vadd.f32 %v6016, %v6116
    %v6149 = vadd.f32 %v6017, %v6116
    %v6150 = vadd.f32 %v6018, %v6116
    %v6151 = vadd.f32 %v6019, %v6116
    %v6152 = vadd.f32 %v6020, %v6116
    %v6153 = vadd.f32 %v6021, %v6116
    %v6154 = vadd.f32 %v6022, %v6116
    %v6155 = vadd.f32 %v6023, %v6116
    %v6156 = vadd.f32 %v6024, %v6116
    %v6157 = vadd.f32 %v6025, %v6116
    %v6158 = vadd.f32 %v6026, %v6116
    %v6159 = vadd.f32 %v6027, %v6116
    %v6160 = vadd.f32 %v6028, %v6116
    %v6161 = vadd.f32 %v6029, %v6116
    %v6162 = vadd.f32 %v6030, %v6116
    %v6163 = vadd.f32 %v6031, %v6116
    %v6164 = vadd.f32 %v6032, %v6116
    %v6165 = vadd.f32 %v6033, %v6116
    %v6166 = vadd.f32 %v6034, %v6116
    %v6167 = vadd.f32 %v6035, %v6116
    %v6168 = vadd.f32 %v6036, %v6116
    %v6169 = vadd.f32 %v6037, %v6116
    %v6170 = vadd.f32 %v6038, %v6116
    %v6171 = vadd.f32 %v6039, %v6116
    %v6172 = vadd.f32 %v6040, %v6116
    %v6173 = vadd.f32 %v6041, %v6116
    %v6174 = vadd.f32 %v6042, %v6116
    %v6175 = vadd.f32 %v6043, %v6116
    %v6176 = vadd.f32 %v6044, %v6116
    %v6177 = vadd.f32 %v6045, %v6116
    %v6178 = vadd.f32 %v6046, %v6116
    %v6179 = vadd.f32 %v6047, %v6116
    %v6180 = vadd.f32 %v6048, %v6116
    %v6181 = vadd.f32 %v6049, %v6116
    %v6182 = vadd.f32 %v6050, %v6116
    %v6183 = vadd.f32 %v6051, %v6116
    %v6184 = vadd.f32 %v6052, %v6116
    %v6185 = vadd.f32 %v6053, %v6116
    %v6186 = vadd.f32 %v6054, %v6116
    %v6187 = vadd.f32 %v6055, %v6116
    %v6188 = vadd.f32 %v6056, %v6116
    %v6189 = vadd.f32 %v6057, %v6116
    %v6190 = vadd.f32 %v6058, %v6116
    %v6191 = vadd.f32 %v6059, %v6116
    %v6192 = vadd.f32 %v6060, %v6116
    %v6193 = vadd.f32 %v6061, %v6116
    %v6194 = vadd.f32 %v6062, %v6116
    %v6195 = vadd.f32 %v6063, %v6116
    %v6196 = vadd.f32 %v6064, %v6116
    %v6197 = vadd.f32 %v6065, %v6116
    %v6198 = vadd.f32 %v6066, %v6116
    %v6199 = vadd.f32 %v6067, %v6116
    %v6200 = vadd.f32 %v6068, %v6116
    %v6201 = vadd.f32 %v6069, %v6116
    %v6202 = vadd.f32 %v6070, %v6116
    %v6203 = vadd.f32 %v6071, %v6116
    %v6204 = vadd.f32 %v6072, %v6116
    %v6205 = vadd.f32 %v6073, %v6116
    %v6206 = vadd.f32 %v6074, %v6116
    %v6207 = vadd.f32 %v6075, %v6116
    %v6208 = vadd.f32 %v6076, %v6116
    %v6209 = vadd.f32 %v6077, %v6116
    %v6210 = vadd.f32 %v6078, %v6116
    %v6211 = vadd.f32 %v6079, %v6116
    %v6212 = vadd.f32 %v6080, %v6116
    %v6213 = vadd.f32 %v6081, %v6116
    %v6214 = vadd.f32 %v6082, %v6116
    %v6215 = vadd.f32 %v6083, %v6116
    %v6216 = vadd.f32 %v6084, %v6116
    %v6217 = vadd.f32 %v6085, %v6116
    %v6218 = vadd.f32 %v6086, %v6116
    %v6219 = vadd.f32 %v6087, %v6116
    %v6220 = vadd.f32 %v6088, %v6116
    %v6221 = vadd.f32 %v6089, %v6116
    %v6222 = vadd.f32 %v6090, %v6116
    %v6223 = vadd.f32 %v6091, %v6116
    %v6224 = vadd.f32 %v6092, %v6116
    %v6225 = vadd.f32 %v6093, %v6116
    %v6226 = vadd.f32 %v6094, %v6116
    %v6227 = vadd.f32 %v6095, %v6116
    %v6228 = vadd.f32 %v6096, %v6116
    %v6229 = vadd.f32 %v6097, %v6116
    %v6230 = vadd.f32 %v6098, %v6116
    %v6231 = vadd.f32 %v6099, %v6116
    %v6232 = vadd.f32 %v6100, %v6116
    %v6233 = vadd.f32 %v6101, %v6116
    %v6234 = vadd.f32 %v6102, %v6116
    %v6235 = vadd.f32 %v6103, %v6116
    %v6236 = vadd.f32 %v6104, %v6116
    %v6237 = vadd.f32 %v6105, %v6116
    %v6238 = vadd.f32 %v6106, %v6116
    %v6239 = vadd.f32 %v6107, %v6116
    %v6240 = vadd.f32 %v6108, %v6116
    %v6241 = vadd.f32 %v6109, %v6116
    %v6242 = vadd.f32 %v6110, %v6116
    %v6243 = vadd.f32 %v6111, %v6116
    %v6244 = vadd.f32 %v6112, %v6116
    %v6245 = vadd.f32 %v6113, %v6116
    %6246 = vst [vmem:[#allocation2] sm:$0xff] %v6118
    %6247 = vst [vmem:[#allocation2 + $0x8] sm:$0xff] %v6119
    %6248 = vst [vmem:[#allocation2 + $0x10] sm:$0xff] %v6120
    %6249 = vst [vmem:[#allocation2 + $0x18] sm:$0xff] %v6121
    %6250 = vst [vmem:[#allocation2 + $0x20] sm:$0xff] %v6122
    %6251 = vst [vmem:[#allocation2 + $0x28] sm:$0xff] %v6123
    %6252 = vst [vmem:[#allocation2 + $0x30] sm:$0xff] %v6124
    %6253 = vst [vmem:[#allocation2 + $0x38] sm:$0xff] %v6125
    %6254 = vst [vmem:[#allocation2 + $0x40] sm:$0xff] %v6126
    %6255 = vst [vmem:[#allocation2 + $0x48] sm:$0xff] %v6127
    %6256 = vst [vmem:[#allocation2 + $0x50] sm:$0xff] %v6128
    %6257 = vst [vmem:[#allocation2 + $0x58] sm:$0xff] %v6129
    %6258 = vst [vmem:[#allocation2 + $0x60] sm:$0xff] %v6130
    %6259 = vst [vmem:[#allocation2 + $0x68] sm:$0xff] %v6131
    %6260 = vst [vmem:[#allocation2 + $0x70] sm:$0xff] %v6132
    %6261 = vst [vmem:[#allocation2 + $0x78] sm:$0xff] %v6133
    %6262 = vst [vmem:[#allocation2 + $0x80] sm:$0xff] %v6134
    %6263 = vst [vmem:[#allocation2 + $0x88] sm:$0xff] %v6135
    %6264 = vst [vmem:[#allocation2 + $0x90] sm:$0xff] %v6136
    %6265 = vst [vmem:[#allocation2 + $0x98] sm:$0xff] %v6137
    %6266 = vst [vmem:[#allocation2 + $0xa0] sm:$0xff] %v6138
    %6267 = vst [vmem:[#allocation2 + $0xa8] sm:$0xff] %v6139
    %6268 = vst [vmem:[#allocation2 + $0xb0] sm:$0xff] %v6140
    %6269 = vst [vmem:[#allocation2 + $0xb8] sm:$0xff] %v6141
    %6270 = vst [vmem:[#allocation2 + $0xc0] sm:$0xff] %v6142
    %6271 = vst [vmem:[#allocation2 + $0xc8] sm:$0xff] %v6143
    %6272 = vst [vmem:[#allocation2 + $0xd0] sm:$0xff] %v6144
    %6273 = vst [vmem:[#allocation2 + $0xd8] sm:$0xff] %v6145
    %6274 = vst [vmem:[#allocation2 + $0xe0] sm:$0xff] %v6146
    %6275 = vst [vmem:[#allocation2 + $0xe8] sm:$0xff] %v6147
    %6276 = vst [vmem:[#allocation2 + $0xf0] sm:$0xff] %v6148
    %6277 = vst [vmem:[#allocation2 + $0xf8] sm:$0xff] %v6149
    %6278 = vst [vmem:[#allocation2 + $0x100] sm:$0xff] %v6150
    %6279 = vst [vmem:[#allocation2 + $0x108] sm:$0xff] %v6151
    %6280 = vst [vmem:[#allocation2 + $0x110] sm:$0xff] %v6152
    %6281 = vst [vmem:[#allocation2 + $0x118] sm:$0xff] %v6153
    %6282 = vst [vmem:[#allocation2 + $0x120] sm:$0xff] %v6154
    %6283 = vst [vmem:[#allocation2 + $0x128] sm:$0xff] %v6155
    %6284 = vst [vmem:[#allocation2 + $0x130] sm:$0xff] %v6156
    %6285 = vst [vmem:[#allocation2 + $0x138] sm:$0xff] %v6157
    %6286 = vst [vmem:[#allocation2 + $0x140] sm:$0xff] %v6158
    %6287 = vst [vmem:[#allocation2 + $0x148] sm:$0xff] %v6159
    %6288 = vst [vmem:[#allocation2 + $0x150] sm:$0xff] %v6160
    %6289 = vst [vmem:[#allocation2 + $0x158] sm:$0xff] %v6161
    %6290 = vst [vmem:[#allocation2 + $0x160] sm:$0xff] %v6162
    %6291 = vst [vmem:[#allocation2 + $0x168] sm:$0xff] %v6163
    %6292 = vst [vmem:[#allocation2 + $0x170] sm:$0xff] %v6164
    %6293 = vst [vmem:[#allocation2 + $0x178] sm:$0xff] %v6165
    %6294 = vst [vmem:[#allocation2 + $0x180] sm:$0xff] %v6166
    %6295 = vst [vmem:[#allocation2 + $0x188] sm:$0xff] %v6167
    %6296 = vst [vmem:[#allocation2 + $0x190] sm:$0xff] %v6168
    %6297 = vst [vmem:[#allocation2 + $0x198] sm:$0xff] %v6169
    %6298 = vst [vmem:[#allocation2 + $0x1a0] sm:$0xff] %v6170
    %6299 = vst [vmem:[#allocation2 + $0x1a8] sm:$0xff] %v6171
    %6300 = vst [vmem:[#allocation2 + $0x1b0] sm:$0xff] %v6172
    %6301 = vst [vmem:[#allocation2 + $0x1b8] sm:$0xff] %v6173
    %6302 = vst [vmem:[#allocation2 + $0x1c0] sm:$0xff] %v6174
    %6303 = vst [vmem:[#allocation2 + $0x1c8] sm:$0xff] %v6175
    %6304 = vst [vmem:[#allocation2 + $0x1d0] sm:$0xff] %v6176
    %6305 = vst [vmem:[#allocation2 + $0x1d8] sm:$0xff] %v6177
    %6306 = vst [vmem:[#allocation2 + $0x1e0] sm:$0xff] %v6178
    %6307 = vst [vmem:[#allocation2 + $0x1e8] sm:$0xff] %v6179
    %6308 = vst [vmem:[#allocation2 + $0x1f0] sm:$0xff] %v6180
    %6309 = vst [vmem:[#allocation2 + $0x1f8] sm:$0xff] %v6181
    %6310 = vst [vmem:[#allocation2 + $0x200] sm:$0xff] %v6182
    %6311 = vst [vmem:[#allocation2 + $0x208] sm:$0xff] %v6183
    %6312 = vst [vmem:[#allocation2 + $0x210] sm:$0xff] %v6184
    %6313 = vst [vmem:[#allocation2 + $0x218] sm:$0xff] %v6185
    %6314 = vst [vmem:[#allocation2 + $0x220] sm:$0xff] %v6186
    %6315 = vst [vmem:[#allocation2 + $0x228] sm:$0xff] %v6187
    %6316 = vst [vmem:[#allocation2 + $0x230] sm:$0xff] %v6188
    %6317 = vst [vmem:[#allocation2 + $0x238] sm:$0xff] %v6189
    %6318 = vst [vmem:[#allocation2 + $0x240] sm:$0xff] %v6190
    %6319 = vst [vmem:[#allocation2 + $0x248] sm:$0xff] %v6191
    %6320 = vst [vmem:[#allocation2 + $0x250] sm:$0xff] %v6192
    %6321 = vst [vmem:[#allocation2 + $0x258] sm:$0xff] %v6193
    %6322 = vst [vmem:[#allocation2 + $0x260] sm:$0xff] %v6194
    %6323 = vst [vmem:[#allocation2 + $0x268] sm:$0xff] %v6195
    %6324 = vst [vmem:[#allocation2 + $0x270] sm:$0xff] %v6196
    %6325 = vst [vmem:[#allocation2 + $0x278] sm:$0xff] %v6197
    %6326 = vst [vmem:[#allocation2 + $0x280] sm:$0xff] %v6198
    %6327 = vst [vmem:[#allocation2 + $0x288] sm:$0xff] %v6199
    %6328 = vst [vmem:[#allocation2 + $0x290] sm:$0xff] %v6200
    %6329 = vst [vmem:[#allocation2 + $0x298] sm:$0xff] %v6201
    %6330 = vst [vmem:[#allocation2 + $0x2a0] sm:$0xff] %v6202
    %6331 = vst [vmem:[#allocation2 + $0x2a8] sm:$0xff] %v6203
    %6332 = vst [vmem:[#allocation2 + $0x2b0] sm:$0xff] %v6204
    %6333 = vst [vmem:[#allocation2 + $0x2b8] sm:$0xff] %v6205
    %6334 = vst [vmem:[#allocation2 + $0x2c0] sm:$0xff] %v6206
    %6335 = vst [vmem:[#allocation2 + $0x2c8] sm:$0xff] %v6207
    %6336 = vst [vmem:[#allocation2 + $0x2d0] sm:$0xff] %v6208
    %6337 = vst [vmem:[#allocation2 + $0x2d8] sm:$0xff] %v6209
    %6338 = vst [vmem:[#allocation2 + $0x2e0] sm:$0xff] %v6210
    %6339 = vst [vmem:[#allocation2 + $0x2e8] sm:$0xff] %v6211
    %6340 = vst [vmem:[#allocation2 + $0x2f0] sm:$0xff] %v6212
    %6341 = vst [vmem:[#allocation2 + $0x2f8] sm:$0xff] %v6213
    %6342 = vst [vmem:[#allocation2 + $0x300] sm:$0xff] %v6214
    %6343 = vst [vmem:[#allocation2 + $0x308] sm:$0xff] %v6215
    %6344 = vst [vmem:[#allocation2 + $0x310] sm:$0xff] %v6216
    %6345 = vst [vmem:[#allocation2 + $0x318] sm:$0xff] %v6217
    %6346 = vst [vmem:[#allocation2 + $0x320] sm:$0xff] %v6218
    %6347 = vst [vmem:[#allocation2 + $0x328] sm:$0xff] %v6219
    %6348 = vst [vmem:[#allocation2 + $0x330] sm:$0xff] %v6220
    %6349 = vst [vmem:[#allocation2 + $0x338] sm:$0xff] %v6221
    %6350 = vst [vmem:[#allocation2 + $0x340] sm:$0xff] %v6222
    %6351 = vst [vmem:[#allocation2 + $0x348] sm:$0xff] %v6223
    %6352 = vst [vmem:[#allocation2 + $0x350] sm:$0xff] %v6224
    %6353 = vst [vmem:[#allocation2 + $0x358] sm:$0xff] %v6225
    %6354 = vst [vmem:[#allocation2 + $0x360] sm:$0xff] %v6226
    %6355 = vst [vmem:[#allocation2 + $0x368] sm:$0xff] %v6227
    %6356 = vst [vmem:[#allocation2 + $0x370] sm:$0xff] %v6228
    %6357 = vst [vmem:[#allocation2 + $0x378] sm:$0xff] %v6229
    %6358 = vst [vmem:[#allocation2 + $0x380] sm:$0xff] %v6230
    %6359 = vst [vmem:[#allocation2 + $0x388] sm:$0xff] %v6231
    %6360 = vst [vmem:[#allocation2 + $0x390] sm:$0xff] %v6232
    %6361 = vst [vmem:[#allocation2 + $0x398] sm:$0xff] %v6233
    %6362 = vst [vmem:[#allocation2 + $0x3a0] sm:$0xff] %v6234
    %6363 = vst [vmem:[#allocation2 + $0x3a8] sm:$0xff] %v6235
    %6364 = vst [vmem:[#allocation2 + $0x3b0] sm:$0xff] %v6236
    %6365 = vst [vmem:[#allocation2 + $0x3b8] sm:$0xff] %v6237
    %6366 = vst [vmem:[#allocation2 + $0x3c0] sm:$0xff] %v6238
    %6367 = vst [vmem:[#allocation2 + $0x3c8] sm:$0xff] %v6239
    %6368 = vst [vmem:[#allocation2 + $0x3d0] sm:$0xff] %v6240
    %6369 = vst [vmem:[#allocation2 + $0x3d8] sm:$0xff] %v6241
    %6370 = vst [vmem:[#allocation2 + $0x3e0] sm:$0xff] %v6242
    %6371 = vst [vmem:[#allocation2 + $0x3e8] sm:$0xff] %v6243
    %6372 = vst [vmem:[#allocation2 + $0x3f0] sm:$0xff] %v6244
    %6373 = vst [vmem:[#allocation2 + $0x3f8] sm:$0xff] %v6245
    // Predicated region
    $region14: #{tpu_custom_call.1} parent=1 // pred_check
      _
    $region15: #{tpu_custom_call.1} parent=1 // pred_check_branch
      %6375 = sbr.rel (0) target = $region17
    $region16: #{tpu_custom_call.1} parent=1 // pred_region
      %6377 = vsyncadd [#allocation3], 0
      %s6378 = sshll.u32 [#allocation2], 4
      %s6379 = int_to_ptr.vmem [resolvable:$true] %s6378
      %s6380 = sshll.u32 %s3, 4
      %s6381 = int_to_ptr.hbm [resolvable:$true] %s6380
      %6386 = dma.vmem_to_hbm [thread:$0]  %s6379, 16384, %s6381, [#allocation3], 128, 128, 8
    $region17: #{tpu_custom_call.1} parent=1 // pred_fallthru
      _
    // Predicated region
    $region18: #{tpu_custom_call.1} parent=1 // pred_check
      _
    $region19: #{tpu_custom_call.1} parent=1 // pred_check_branch
      %6388 = sbr.rel (0) target = $region21
    $region20: #{tpu_custom_call.1} parent=1 // pred_region
      %6390 = dma.done [#allocation3], 16384
    $region21: #{tpu_custom_call.1} parent=1 // pred_fallthru
      _
    %6391 = vsyncpa [#allocation3], 1

</llo_original>
